<compile_context>
chip_gen: v7x
topology: tpu7x:2x2x1
jax: 0.10.0
libtpu: 0.0.40
codegen_flags: <defaults>
</compile_context>

<pallas_src>
import math
from functools import partial

import jax
import jax.numpy as jnp
from jax import lax
from jax.experimental import pallas as pl
from jax.experimental.pallas import tpu as pltpu


# ---------------------------------------------------------------------------
# Per-chip sizing
# ---------------------------------------------------------------------------

def _detect_vmem_limit():
    """~7/8 of physical VMEM (headroom for compiler scratch), capped at 112 MiB."""
    try:
        info = pltpu.get_tpu_info()
        cap = int(getattr(info, "vmem_capacity_bytes", 0)) or 64 * 1024 * 1024
    except Exception:
        cap = 64 * 1024 * 1024          # conservative v7x fallback
    return min(cap * 7 // 8, 112 * 1024 * 1024)


_VMEM_LIMIT = _detect_vmem_limit()
_BIG_VMEM = _VMEM_LIMIT >= 96 * 1024 * 1024      # v5e / v6e (128 MiB physical)
_ROW_TILE = 512 if _BIG_VMEM else 256            # streaming row tile
_Q_TILE = 256 if _BIG_VMEM else 128              # attention query tile


def _tile(dim, pref):
    """Largest tile <= pref that divides dim, preferring multiples of 128, then 8.

    Never silently falls back to the full dimension (the old behaviour blew up
    VMEM for non-divisible shapes)."""
    if dim <= pref:
        return dim
    best_any, best8, best128 = 1, 0, 0
    for c in range(1, pref + 1):
        if dim % c:
            continue
        best_any = c
        if c % 8 == 0:
            best8 = c
        if c % 128 == 0:
            best128 = c
    return best128 or best8 or best_any


def _ln_f32(x, g, b, eps):
    mu = jnp.mean(x, axis=-1, keepdims=True)
    xc = x - mu
    var = jnp.mean(xc * xc, axis=-1, keepdims=True)
    return xc * lax.rsqrt(var + eps) * g + b


def _const_spec(shape, n_grid_args):
    """BlockSpec for a block that never changes index -> single-buffered."""
    zeros = (0,) * len(shape)
    return pl.BlockSpec(shape, lambda *args: zeros, pipeline_mode=pl.Buffered(1))


# ---------------------------------------------------------------------------
# Generic tiled matmul (bf16 MXU, f32 accumulator) -- used once per forward for
# the stacked rel-pos projection of all layers.
# ---------------------------------------------------------------------------

def _matmul_kernel(x_ref, w_ref, o_ref, acc_ref, *, n_k):
    @pl.when(pl.program_id(2) == 0)
    def _():
        acc_ref[...] = jnp.zeros_like(acc_ref)

    acc_ref[...] += jnp.dot(x_ref[...].astype(jnp.bfloat16), w_ref[...],
                            preferred_element_type=jnp.float32)

    @pl.when(pl.program_id(2) == n_k - 1)
    def _():
        o_ref[...] = acc_ref[...].astype(o_ref.dtype)


def linear(x, w_bf16, *, out_dtype=None, tm=256, tn=256, tk=512):
    M, K = x.shape
    N = w_bf16.shape[1]
    tm, tn, tk = _tile(M, tm), _tile(N, tn), _tile(K, tk)
    grid = (M // tm, N // tn, K // tk)
    return pl.pallas_call(
        partial(_matmul_kernel, n_k=grid[2]),
        grid=grid,
        in_specs=[pl.BlockSpec((tm, tk), lambda i, j, k: (i, k)),
                  pl.BlockSpec((tk, tn), lambda i, j, k: (k, j))],
        out_specs=pl.BlockSpec((tm, tn), lambda i, j, k: (i, j)),
        out_shape=jax.ShapeDtypeStruct((M, N), out_dtype or x.dtype),
        scratch_shapes=[pltpu.VMEM((tm, tn), jnp.float32)],
        compiler_params=pltpu.CompilerParams(
            dimension_semantics=("parallel", "parallel", "arbitrary"),
            vmem_limit_bytes=_VMEM_LIMIT),
    )(x, w_bf16)


# ---------------------------------------------------------------------------
# Fused macaron feed-forward block: LN -> W_in+SiLU -> W_out -> *0.5 + residual
# (optionally followed by the per-layer final LayerNorm, fused for ffn2).
# Weights are single-buffered (Buffered(1)); only activations stream.
# ---------------------------------------------------------------------------

def _ffn_kernel(x_ref, g_ref, b_ref, wi_ref, bi_ref, wo_ref, bo_ref, *rest,
                eps, post_eps, has_post_ln):
    if has_post_ln:
        pg_ref, pb_ref, o_ref = rest
    else:
        (o_ref,) = rest
    x = x_ref[...].astype(jnp.float32)
    xn = _ln_f32(x, g_ref[...], b_ref[...], eps)
    h = jnp.dot(xn.astype(jnp.bfloat16), wi_ref[...],
                preferred_element_type=jnp.float32) + bi_ref[...]
    h = h * jax.nn.sigmoid(h)                       # SiLU / swish
    y = jnp.dot(h.astype(jnp.bfloat16), wo_ref[...],
                preferred_element_type=jnp.float32) + bo_ref[...]
    y = y * 0.5 + x                                 # macaron 0.5 scaling + residual
    if has_post_ln:
        y = _ln_f32(y, pg_ref[...], pb_ref[...], post_eps)
    o_ref[...] = y.astype(o_ref.dtype)


def ffn_block(x2d, ln_g, ln_b, ffn_p, post_ln=None, *, eps=1e-5, post_eps=1e-5,
              tm=None):
    M, D = x2d.shape
    I = ffn_p["w_in"].shape[1]
    tm = _tile(M, tm or _ROW_TILE)

    in_specs = [pl.BlockSpec((tm, D), lambda i: (i, 0)),
                _const_spec((1, D), 1), _const_spec((1, D), 1),
                _const_spec((D, I), 1), _const_spec((1, I), 1),
                _const_spec((I, D), 1), _const_spec((1, D), 1)]
    args = [x2d, ln_g, ln_b, ffn_p["w_in"], ffn_p["b_in"],
            ffn_p["w_out"], ffn_p["b_out"]]
    if post_ln is not None:
        in_specs += [_const_spec((1, D), 1), _const_spec((1, D), 1)]
        args += [post_ln[0], post_ln[1]]
    return pl.pallas_call(
        partial(_ffn_kernel, eps=eps, post_eps=post_eps,
                has_post_ln=post_ln is not None),
        grid=(M // tm,),
        in_specs=in_specs,
        out_specs=pl.BlockSpec((tm, D), lambda i: (i, 0)),
        out_shape=jax.ShapeDtypeStruct((M, D), x2d.dtype),
        compiler_params=pltpu.CompilerParams(
            dimension_semantics=("parallel",),
            vmem_limit_bytes=_VMEM_LIMIT),
    )(*args)


# ---------------------------------------------------------------------------
# Fused LN -> packed QKV projection -> + pos_bias_u / pos_bias_v -> head split.
# Emits qu, qv, k, v head-major as (B, H, T, d) bf16 so the attention kernel can
# index heads on a leading axis (no dynamic lane slicing, half the HBM traffic
# of the old f32 (B, T, 3D) qkv tensor).
# ---------------------------------------------------------------------------

def _ln_qkv_heads_kernel(x_ref, g_ref, b_ref, w_ref, bqkv_ref, bu_ref, bv_ref,
                         qu_ref, qv_ref, k_ref, v_ref, *, eps, hidden, num_heads):
    D, H = hidden, num_heads
    d = D // H
    x = x_ref[...].astype(jnp.float32)                  # (tq, D)
    xn = _ln_f32(x, g_ref[...], b_ref[...], eps)
    y = jnp.dot(xn.astype(jnp.bfloat16), w_ref[...],
                preferred_element_type=jnp.float32) + bqkv_ref[...]   # (tq, 3D)
    q = y[:, 0:D]
    qu = (q + bu_ref[...]).astype(jnp.bfloat16)         # + pos_bias_u (head-major flat)
    qv = (q + bv_ref[...]).astype(jnp.bfloat16)         # + pos_bias_v
    kk = y[:, D:2 * D].astype(jnp.bfloat16)
    vv = y[:, 2 * D:3 * D].astype(jnp.bfloat16)
    for h in range(H):                                  # static lane slices, tiny temps
        sl = slice(h * d, (h + 1) * d)
        qu_ref[h] = qu[:, sl]
        qv_ref[h] = qv[:, sl]
        k_ref[h] = kk[:, sl]
        v_ref[h] = vv[:, sl]


def ln_qkv_heads(x3, ln_g, ln_b, attn_p, *, num_heads, eps=1e-5, tq=None):
    B, T, D = x3.shape
    H = num_heads
    d = D // H
    N3 = 3 * D
    tq = _tile(T, tq or _ROW_TILE)

    head_out = pl.BlockSpec((None, H, tq, d), lambda b, i: (b, 0, i, 0))
    out_sds = jax.ShapeDtypeStruct((B, H, T, d), jnp.bfloat16)
    return pl.pallas_call(
        partial(_ln_qkv_heads_kernel, eps=eps, hidden=D, num_heads=H),
        grid=(B, T // tq),
        in_specs=[pl.BlockSpec((None, tq, D), lambda b, i: (b, i, 0)),
                  _const_spec((1, D), 2), _const_spec((1, D), 2),
                  _const_spec((D, N3), 2), _const_spec((1, N3), 2),
                  _const_spec((1, D), 2), _const_spec((1, D), 2)],
        out_specs=(head_out, head_out, head_out, head_out),
        out_shape=(out_sds, out_sds, out_sds, out_sds),
        compiler_params=pltpu.CompilerParams(
            dimension_semantics=("parallel", "parallel"),
            vmem_limit_bytes=_VMEM_LIMIT),
    )(x3, ln_g, ln_b, attn_p["wqkv"], attn_p["bqkv"], attn_p["bu"], attn_p["bv"])


# ---------------------------------------------------------------------------
# Fused relative-position self-attention.
# grid = (B, n_q_tiles, H) with ("parallel", "parallel", "arbitrary"):
# each step handles one head for one query tile (bounded (tq, T)/(tq, L_pad)
# score live ranges), accumulates that head's out-projection contribution into
# a persistent (tq, D) f32 VMEM scratch, and finalizes bias + residual on the
# last head.  The Transformer-XL rel-shift is an in-register XLU strided
# rotate; no (B, H, T, 2T-1) tensor or head concat ever exists.
# ---------------------------------------------------------------------------

def _rel_attn_kernel(qu_ref, qv_ref, k_ref, v_ref, res_ref, pos_ref, wo_ref,
                     bo_ref, o_ref, acc_ref, *, seq_len, q_tile, head_dim,
                     num_heads, n_q):
    T = seq_len
    h = pl.program_id(2)

    @pl.when(h == 0)
    def _():
        acc_ref[...] = jnp.zeros_like(acc_ref)

    qu = qu_ref[h]                                      # (tq, d) bf16
    qv = qv_ref[h]
    k = k_ref[h]                                        # (T, d) bf16
    v = v_ref[h]
    pos = pos_ref[h]                                    # (L_pad, d) bf16, zero rows first

    ac = lax.dot_general(qu, k, (((1,), (1,)), ((), ())),
                         preferred_element_type=jnp.float32)        # (tq, T)
    bd_pad = lax.dot_general(qv, pos, (((1,), (1,)), ((), ())),
                             preferred_element_type=jnp.float32)    # (tq, L_pad)
    # Transformer-XL rel-shift, fused in-register: scores are right-aligned in
    # the lane-padded buffer, so rotating row i by (T + global_row(i)) lanes and
    # keeping the first T lanes reproduces torch's zero-pad/view/slice shift.
    bd_pad = pltpu.roll(bd_pad, shift=T, axis=1, stride=1, stride_axis=0)
    if n_q > 1:   # fold in the query-tile offset (dynamic lane rotate, no stride)
        bd_pad = pltpu.roll(bd_pad, shift=pl.program_id(1) * q_tile, axis=1)
    bd = bd_pad[:, :T]

    s = (ac + bd) * (1.0 / math.sqrt(head_dim))
    m = jnp.max(s, axis=-1, keepdims=True)
    e = jnp.exp(s - m)
    p = e * pl.reciprocal(jnp.sum(e, axis=-1, keepdims=True), approx=True)
    pv = jnp.dot(p.astype(jnp.bfloat16), v,
                 preferred_element_type=jnp.float32)                # (tq, d)
    # per-head out-projection contribution: ctx @ Wo == sum_h pv_h @ Wo[h]
    acc_ref[...] += jnp.dot(pv.astype(jnp.bfloat16), wo_ref[h],
                            preferred_element_type=jnp.float32)     # (tq, D)

    @pl.when(h == num_heads - 1)
    def _():
        o_ref[...] = (acc_ref[...] + bo_ref[...]
                      + res_ref[...].astype(jnp.float32)).astype(o_ref.dtype)


def rel_attention(qu, qv, k, v, res, pos_heads, attn_p, *, num_heads, tq=None):
    B, H, T, d = qu.shape
    D = H * d
    L_pad = pos_heads.shape[1]
    tq = _tile(T, tq or _Q_TILE)
    n_q = T // tq

    q_spec = pl.BlockSpec((None, H, tq, d), lambda b, qi, h: (b, 0, qi, 0))
    kv_spec = pl.BlockSpec((None, H, T, d), lambda b, qi, h: (b, 0, 0, 0))
    return pl.pallas_call(
        partial(_rel_attn_kernel, seq_len=T, q_tile=tq, head_dim=d,
                num_heads=H, n_q=n_q),
        grid=(B, n_q, H),
        in_specs=[q_spec, q_spec, kv_spec, kv_spec,
                  pl.BlockSpec((None, tq, D), lambda b, qi, h: (b, qi, 0)),
                  _const_spec((H, L_pad, d), 3),
                  _const_spec((H, d, D), 3),
                  _const_spec((1, D), 3)],
        out_specs=pl.BlockSpec((None, tq, D), lambda b, qi, h: (b, qi, 0)),
        out_shape=jax.ShapeDtypeStruct((B, T, D), res.dtype),
        scratch_shapes=[pltpu.VMEM((tq, D), jnp.float32)],
        compiler_params=pltpu.CompilerParams(
            dimension_semantics=("parallel", "parallel", "arbitrary"),
            vmem_limit_bytes=_VMEM_LIMIT),
    )(qu, qv, k, v, res, pos_heads, attn_p["wo"], attn_p["bo"])


# ---------------------------------------------------------------------------
# Fused conformer convolution module (+ residual), grid=(B,):
# LN -> packed pw1 (one (D,2D) matmul) + GLU -> depthwise conv (windowed loads
# from a VMEM scratch, 'SAME' pad) -> BN(eval) -> swish -> pw2 -> + residual.
# TODO(synk): tile the time axis with a (K-1)//2 halo (manual halo DMA) so very
#             long sequences fit v7x VMEM and both TensorCores get work at B<=2.
# ---------------------------------------------------------------------------

def _conv_kernel(hs_ref, g_ref, b_ref, pw1_ref, dw_ref, s_ref, t_ref, pw2_ref,
                 o_ref, buf_ref, *, K, eps, hidden):
    D = hidden
    x = hs_ref[...].astype(jnp.float32)                 # (T, D) residual input
    T = x.shape[0]
    xn = _ln_f32(x, g_ref[...], b_ref[...], eps).astype(jnp.bfloat16)
    y12 = jnp.dot(xn, pw1_ref[...], preferred_element_type=jnp.float32)  # (T, 2D)
    y = y12[:, :D] * jax.nn.sigmoid(y12[:, D:])         # pointwise_conv1 + GLU

    pad = (K - 1) // 2
    if pad:                                             # 'SAME' pad in VMEM scratch
        zeros = jnp.zeros((pad, D), jnp.float32)
        buf_ref[pl.ds(0, pad), :] = zeros
        buf_ref[pl.ds(pad + T, pad), :] = zeros
    buf_ref[pl.ds(pad, T), :] = y

    w = dw_ref[...]                                     # (K, D) f32
    acc = jnp.zeros((T, D), jnp.float32)
    for kk in range(K):                                 # windowed loads, no shifted copies
        acc = acc + buf_ref[pl.ds(kk, T), :] * w[kk:kk + 1, :]

    z = acc * s_ref[...] + t_ref[...]                   # BatchNorm (eval) affine
    z = z * jax.nn.sigmoid(z)                           # swish
    out = jnp.dot(z.astype(jnp.bfloat16), pw2_ref[...],
                  preferred_element_type=jnp.float32)   # pointwise_conv2
    o_ref[...] = (x + out).astype(o_ref.dtype)


def conv_block(hs, cp, *, ln_eps=1e-5):
    B, T, D = hs.shape
    K = cp["dw_w"].shape[0]
    return pl.pallas_call(
        partial(_conv_kernel, K=K, eps=ln_eps, hidden=D),
        grid=(B,),
        in_specs=[pl.BlockSpec((None, T, D), lambda b: (b, 0, 0)),
                  _const_spec((1, D), 1), _const_spec((1, D), 1),
                  _const_spec((D, 2 * D), 1),
                  _const_spec((K, D), 1),
                  _const_spec((1, D), 1), _const_spec((1, D), 1),
                  _const_spec((D, D), 1)],
        out_specs=pl.BlockSpec((None, T, D), lambda b: (b, 0, 0)),
        out_shape=jax.ShapeDtypeStruct((B, T, D), hs.dtype),
        scratch_shapes=[pltpu.VMEM((T + K - 1, D), jnp.float32)],
        compiler_params=pltpu.CompilerParams(
            dimension_semantics=("parallel",),
            vmem_limit_bytes=_VMEM_LIMIT),
    )(hs, cp["ln_g"], cp["ln_b"], cp["pw1"], cp["dw_w"],
      cp["bn_scale"], cp["bn_shift"], cp["pw2"])


# ---------------------------------------------------------------------------
# Standalone LayerNorm (encoder-level final LN only).
# ---------------------------------------------------------------------------

def _ln_kernel(x_ref, g_ref, b_ref, o_ref, *, eps):
    x = x_ref[...].astype(jnp.float32)
    o_ref[...] = _ln_f32(x, g_ref[...], b_ref[...], eps).astype(o_ref.dtype)


def layer_norm(x2d, g, b, *, eps=1e-5, tm=None):
    M, D = x2d.shape
    tm = _tile(M, tm or _ROW_TILE)
    return pl.pallas_call(
        partial(_ln_kernel, eps=eps),
        grid=(M // tm,),
        in_specs=[pl.BlockSpec((tm, D), lambda i: (i, 0)),
                  _const_spec((1, D), 1), _const_spec((1, D), 1)],
        out_specs=pl.BlockSpec((tm, D), lambda i: (i, 0)),
        out_shape=jax.ShapeDtypeStruct((M, D), x2d.dtype),
        compiler_params=pltpu.CompilerParams(
            dimension_semantics=("parallel",),
            vmem_limit_bytes=_VMEM_LIMIT),
    )(x2d, g, b)


# ---------------------------------------------------------------------------
# Model glue (plain JAX: reshapes, rel-pos table, layer loop)
# ---------------------------------------------------------------------------

def relative_position_embeddings(T, D):
    """Wav2Vec2ConformerRelPositionalEmbedding (max_len == T) -> (1, 2T-1, D)."""
    position = jnp.arange(T, dtype=jnp.float32)[:, None]
    div_term = jnp.exp(jnp.arange(0, D, 2, dtype=jnp.float32)
                       * -(math.log(10000.0) / D))
    pe_pos = jnp.zeros((T, D), jnp.float32)
    pe_pos = pe_pos.at[:, 0::2].set(jnp.sin(position * div_term))
    pe_pos = pe_pos.at[:, 1::2].set(jnp.cos(position * div_term))
    pe_neg = jnp.zeros((T, D), jnp.float32)
    pe_neg = pe_neg.at[:, 0::2].set(jnp.sin(-position * div_term))
    pe_neg = pe_neg.at[:, 1::2].set(jnp.cos(-position * div_term))
    pe_pos = jnp.flip(pe_pos, axis=0)[None]   # (1, T, D)
    pe_neg = pe_neg[1:][None]                 # (1, T-1, D)
    return jnp.concatenate([pe_pos, pe_neg], axis=1)  # (1, 2T-1, D)


def encoder_layer(hs, lp, pos_heads, *, num_heads):
    B, T, D = hs.shape
    M = B * T

    # Macaron FFN1 (one fused kernel)
    x2 = ffn_block(hs.reshape(M, D), lp["ffn1_ln_g"], lp["ffn1_ln_b"], lp["ffn1"])
    x3 = x2.reshape(B, T, D)

    # Relative-position self-attention (LN+QKV kernel -> attention kernel)
    qu, qv, k, v = ln_qkv_heads(x3, lp["attn_ln_g"], lp["attn_ln_b"], lp["attn"],
                                num_heads=num_heads)
    hs = rel_attention(qu, qv, k, v, x3, pos_heads, lp["attn"],
                       num_heads=num_heads)

    # Conformer convolution module (+ residual), one fused kernel
    hs = conv_block(hs, lp["conv"])

    # Macaron FFN2 with the per-layer final LayerNorm fused in
    x2 = ffn_block(hs.reshape(M, D), lp["ffn2_ln_g"], lp["ffn2_ln_b"], lp["ffn2"],
                   post_ln=(lp["final_ln_g"], lp["final_ln_b"]))
    return x2.reshape(B, T, D)


def encoder_forward(hs, params, *, num_heads, layer_norm_eps=1e-5):
    # TODO(synk): attention_mask=None branch only (no additive mask / zeroing).
    B, T, D = hs.shape
    H = num_heads
    d = D // H
    L = 2 * T - 1
    L_pad = ((L + 127) // 128) * 128
    rel_pos = relative_position_embeddings(T, D)[0]                   # (L, D)
    # zero rows first so the relative scores land right-aligned in the padded
    # lane buffer (required by the in-kernel strided-roll rel-shift).
    rel_pos_pad = jnp.concatenate(
        [jnp.zeros((L_pad - L, D), jnp.float32), rel_pos], axis=0)    # (L_pad, D)

    # All layers' rel-pos projections in ONE MXU pass, emitted directly as bf16,
    # then re-laid out head-major (H, L_pad, d) per layer (cheap, once/forward).
    num_layers = len(params["layers"])
    pos_all = linear(rel_pos_pad, params["wpos_all"], out_dtype=jnp.bfloat16)
    pos_heads = [
        jnp.transpose(pos_all[:, l * D:(l + 1) * D].reshape(L_pad, H, d),
                      (1, 0, 2))
        for l in range(num_layers)
    ]

    for lp, ph in zip(params["layers"], pos_heads):
        hs = encoder_layer(hs, lp, ph, num_heads=num_heads)

    out = layer_norm(hs.reshape(B * T, D), params["ln_g"], params["ln_b"],
                     eps=layer_norm_eps)
    return out.reshape(B, T, D)


# ---------------------------------------------------------------------------
# Deterministic synthetic parameters + kernel-friendly re-layout
# ---------------------------------------------------------------------------

def init_encoder_params(key, D, I, H, K, num_layers):
    d = D // H
    keys = iter(jax.random.split(key, 4096))
    nk = lambda: next(keys)
    nrm = lambda k, shape, s=0.02: jax.random.normal(k, shape, jnp.float32) * s

    def ffn():
        return {"w_in": nrm(nk(), (D, I)), "b_in": nrm(nk(), (I,)),
                "w_out": nrm(nk(), (I, D)), "b_out": nrm(nk(), (D,))}

    layers = []
    for _ in range(num_layers):
        lp = {
            "ffn1_ln_g": 1.0 + nrm(nk(), (D,)), "ffn1_ln_b": nrm(nk(), (D,)),
            "ffn1": ffn(),
            "attn_ln_g": 1.0 + nrm(nk(), (D,)), "attn_ln_b": nrm(nk(), (D,)),
            "attn": {
                "wq": nrm(nk(), (D, D)), "bq": nrm(nk(), (D,)),
                "wk": nrm(nk(), (D, D)), "bk": nrm(nk(), (D,)),
                "wv": nrm(nk(), (D, D)), "bv": nrm(nk(), (D,)),
                "wo": nrm(nk(), (D, D)), "bo": nrm(nk(), (D,)),
                "wpos": nrm(nk(), (D, D)),
                "pos_bias_u": nrm(nk(), (H, d)),
                "pos_bias_v": nrm(nk(), (H, d)),
            },
            "conv": {
                "ln_g": 1.0 + nrm(nk(), (D,)), "ln_b": nrm(nk(), (D,)),
                "pw1_a": nrm(nk(), (D, D)), "pw1_b": nrm(nk(), (D, D)),
                "dw_w": nrm(nk(), (K, D)),
                "bn_g": 1.0 + nrm(nk(), (D,)), "bn_b": nrm(nk(), (D,)),
                "bn_mean": jnp.zeros((D,), jnp.float32),
                "bn_var": jnp.ones((D,), jnp.float32),
                "pw2": nrm(nk(), (D, D)),
            },
            "ffn2_ln_g": 1.0 + nrm(nk(), (D,)), "ffn2_ln_b": nrm(nk(), (D,)),
            "ffn2": ffn(),
            "final_ln_g": 1.0 + nrm(nk(), (D,)), "final_ln_b": nrm(nk(), (D,)),
        }
        layers.append(lp)

    return {"layers": layers,
            "ln_g": 1.0 + nrm(nk(), (D,)), "ln_b": nrm(nk(), (D,))}


def prepare_params(params, bn_eps=1e-5):
    """Re-layout parameters for the kernels: matmul weights -> bf16, vectors ->
    (1, N) f32, QKV packed into one (D, 3D) matrix, pos_bias_u/v flattened
    head-major, out-proj reshaped (H, d, D), GLU weights packed (D, 2D),
    BatchNorm(eval) folded to affine, and all layers' wpos stacked."""
    vec = lambda a: jnp.asarray(a, jnp.float32).reshape(1, -1)
    bf = lambda a: jnp.asarray(a).astype(jnp.bfloat16)

    def prep_ffn(fp):
        return {"w_in": bf(fp["w_in"]), "b_in": vec(fp["b_in"]),
                "w_out": bf(fp["w_out"]), "b_out": vec(fp["b_out"])}

    wpos_list = []
    layers = []
    for lp in params["layers"]:
        a, c = lp["attn"], lp["conv"]
        H, d = a["pos_bias_u"].shape
        D = H * d
        wpos_list.append(a["wpos"])
        bn_scale = c["bn_g"] / jnp.sqrt(c["bn_var"] + bn_eps)
        layers.append({
            "ffn1_ln_g": vec(lp["ffn1_ln_g"]), "ffn1_ln_b": vec(lp["ffn1_ln_b"]),
            "ffn1": prep_ffn(lp["ffn1"]),
            "attn_ln_g": vec(lp["attn_ln_g"]), "attn_ln_b": vec(lp["attn_ln_b"]),
            "attn": {
                "wqkv": bf(jnp.concatenate([a["wq"], a["wk"], a["wv"]], axis=1)),
                "bqkv": vec(jnp.concatenate([a["bq"], a["bk"], a["bv"]])),
                "bu": vec(a["pos_bias_u"]),          # head-major flat (1, D)
                "bv": vec(a["pos_bias_v"]),
                "wo": bf(a["wo"]).reshape(H, d, D),  # per-head out-proj rows
                "bo": vec(a["bo"]),
            },
            "conv": {
                "ln_g": vec(c["ln_g"]), "ln_b": vec(c["ln_b"]),
                "pw1": bf(jnp.concatenate([c["pw1_a"], c["pw1_b"]], axis=1)),
                "dw_w": jnp.asarray(c["dw_w"], jnp.float32),
                "bn_scale": vec(bn_scale),
                "bn_shift": vec(c["bn_b"] - c["bn_mean"] * bn_scale),
                "pw2": bf(c["pw2"]),
            },
            "ffn2_ln_g": vec(lp["ffn2_ln_g"]), "ffn2_ln_b": vec(lp["ffn2_ln_b"]),
            "ffn2": prep_ffn(lp["ffn2"]),
            "final_ln_g": vec(lp["final_ln_g"]), "final_ln_b": vec(lp["final_ln_b"]),
        })

    return {"layers": layers,
            "wpos_all": bf(jnp.concatenate(wpos_list, axis=1)),
            "ln_g": vec(params["ln_g"]), "ln_b": vec(params["ln_b"])}


# ---------------------------------------------------------------------------
# Main
# ---------------------------------------------------------------------------

if __name__ == "__main__":
    # small synthetic config: hidden=64, heads=4, intermediate=128,
    # depthwise kernel=5, 2 layers; batch=2, seq=16
    B, T, D, H, I, K, NUM_LAYERS = 2, 16, 64, 4, 128, 5, 2

    key = jax.random.PRNGKey(0)
    k_x, k_p = jax.random.split(key)
    x = jax.random.normal(k_x, (B, T, D), jnp.float32)
    params = prepare_params(init_encoder_params(k_p, D, I, H, K, NUM_LAYERS))

    fwd = jax.jit(partial(encoder_forward, num_heads=H))
    out = jax.block_until_ready(fwd(x, params))

    assert out.shape == (B, T, D)
    assert bool(jnp.all(jnp.isfinite(out)))
    print("KERNEL_OK")
</pallas_src>

<mosaic_0001>
module attributes {stable_mosaic.version = 11 : i64} {
  func.func @_matmul_kernel(%arg0: i32, %arg1: i32, %arg2: i32, %arg3: memref<128x64xf32, #tpu.memory_space<vmem>>, %arg4: memref<64x128xbf16, #tpu.memory_space<vmem>>, %arg5: memref<128x128xbf16, #tpu.memory_space<vmem>>, %arg6: memref<128x128xf32, #tpu.memory_space<vmem>>) attributes {dimension_semantics = [#tpu.dimension_semantics<parallel>, #tpu.dimension_semantics<parallel>, #tpu.dimension_semantics<arbitrary>], iteration_bounds = array<i64: 1, 1, 1>, scalar_prefetch = 0 : i64, scratch_operands = 1 : i64, tpu.core_type = #tpu.core_type<tc>, window_params = [{transform_indices = @transform_0, window_bounds = array<i64: 128, 64>}, {transform_indices = @transform_1, window_bounds = array<i64: 64, 128>}, {transform_indices = @transform_2, window_bounds = array<i64: 128, 128>}]} {
    %c0_i32 = arith.constant 0 : i32
    %0 = arith.cmpi eq, %arg2, %c0_i32 : i32
    %1 = arith.extui %0 : i1 to i32
    %c0_i32_0 = arith.constant 0 : i32
    %2 = arith.cmpi ne, %1, %c0_i32_0 : i32
    scf.if %2 {
      %cst_10 = arith.constant 0.000000e+00 : f32
      %13 = vector.broadcast %cst_10 : f32 to vector<128x128xf32>
      %c0_11 = arith.constant 0 : index
      %c0_12 = arith.constant 0 : index
      %14 = vector.load %arg6[%c0_11, %c0_12] : memref<128x128xf32, #tpu.memory_space<vmem>>, vector<128x128xf32>
      tpu.vector_store %arg6[%c0_11, %c0_12], %13 {strides = array<i32>} : memref<128x128xf32, #tpu.memory_space<vmem>>, vector<128x128xf32>,
    } else {
    }
    %c0 = arith.constant 0 : index
    %c0_1 = arith.constant 0 : index
    %3 = vector.load %arg6[%c0, %c0_1] : memref<128x128xf32, #tpu.memory_space<vmem>>, vector<128x128xf32>
    %c0_2 = arith.constant 0 : index
    %c0_3 = arith.constant 0 : index
    %4 = vector.load %arg3[%c0_2, %c0_3] : memref<128x64xf32, #tpu.memory_space<vmem>>, vector<128x64xf32>
    %5 = arith.truncf %4 : vector<128x64xf32> to vector<128x64xbf16>
    %c0_4 = arith.constant 0 : index
    %c0_5 = arith.constant 0 : index
    %6 = vector.load %arg4[%c0_4, %c0_5] : memref<64x128xbf16, #tpu.memory_space<vmem>>, vector<64x128xbf16>
    %cst = arith.constant dense<0.000000e+00> : vector<128x128xf32>
    %7 = tpu.matmul %5, %6, %cst {dimension_numbers = #tpu.dot_dimension_numbers<[1], [0], [0], [1], [0, 0, 1, 1], [], []>} : vector<128x64xbf16>, vector<64x128xbf16>, vector<128x128xf32> -> vector<128x128xf32>
    %8 = arith.addf %3, %7 : vector<128x128xf32>
    %c0_6 = arith.constant 0 : index
    %c0_7 = arith.constant 0 : index
    %9 = vector.load %arg6[%c0_6, %c0_7] : memref<128x128xf32, #tpu.memory_space<vmem>>, vector<128x128xf32>
    tpu.vector_store %arg6[%c0_6, %c0_7], %8 {strides = array<i32>} : memref<128x128xf32, #tpu.memory_space<vmem>>, vector<128x128xf32>,
    %c0_i32_8 = arith.constant 0 : i32
    %10 = arith.cmpi eq, %arg2, %c0_i32_8 : i32
    %11 = arith.extui %10 : i1 to i32
    %c0_i32_9 = arith.constant 0 : i32
    %12 = arith.cmpi ne, %11, %c0_i32_9 : i32
    scf.if %12 {
      %c0_10 = arith.constant 0 : index
      %c0_11 = arith.constant 0 : index
      %13 = vector.load %arg6[%c0_10, %c0_11] : memref<128x128xf32, #tpu.memory_space<vmem>>, vector<128x128xf32>
      %14 = arith.truncf %13 : vector<128x128xf32> to vector<128x128xbf16>
      %c0_12 = arith.constant 0 : index
      %c0_13 = arith.constant 0 : index
      %15 = vector.load %arg5[%c0_12, %c0_13] : memref<128x128xbf16, #tpu.memory_space<vmem>>, vector<128x128xbf16>
      tpu.vector_store %arg5[%c0_12, %c0_13], %14 {strides = array<i32>} : memref<128x128xbf16, #tpu.memory_space<vmem>>, vector<128x128xbf16>,
    } else {
    }
    return
  }
  func.func @transform_0(%arg0: i32, %arg1: i32, %arg2: i32) -> (i32, i32) {
    %c0_i32 = arith.constant 0 : i32
    return %arg0, %arg2 : i32, i32
  }
  func.func @transform_1(%arg0: i32, %arg1: i32, %arg2: i32) -> (i32, i32) {
    %c0_i32 = arith.constant 0 : i32
    return %arg2, %arg1 : i32, i32
  }
  func.func @transform_2(%arg0: i32, %arg1: i32, %arg2: i32) -> (i32, i32) {
    %c0_i32 = arith.constant 0 : i32
    return %arg0, %arg1 : i32, i32
  }
}

module attributes {stable_mosaic.version = 11 : i64} {
  func.func @_ffn_kernel(%arg0: i32, %arg1: memref<32x64xf32, #tpu.memory_space<vmem>>, %arg2: memref<1x64xf32, #tpu.memory_space<vmem>>, %arg3: memref<1x64xf32, #tpu.memory_space<vmem>>, %arg4: memref<64x128xbf16, #tpu.memory_space<vmem>>, %arg5: memref<1x128xf32, #tpu.memory_space<vmem>>, %arg6: memref<128x64xbf16, #tpu.memory_space<vmem>>, %arg7: memref<1x64xf32, #tpu.memory_space<vmem>>, %arg8: memref<32x64xf32, #tpu.memory_space<vmem>>) attributes {dimension_semantics = [#tpu.dimension_semantics<parallel>], iteration_bounds = array<i64: 1>, scalar_prefetch = 0 : i64, scratch_operands = 0 : i64, tpu.core_type = #tpu.core_type<tc>, window_params = [{transform_indices = @transform_0, window_bounds = array<i64: 32, 64>}, {pipeline_mode = #tpu.pipeline_mode<synchronous>, transform_indices = @transform_1, window_bounds = array<i64: 1, 64>}, {pipeline_mode = #tpu.pipeline_mode<synchronous>, transform_indices = @transform_2, window_bounds = array<i64: 1, 64>}, {pipeline_mode = #tpu.pipeline_mode<synchronous>, transform_indices = @transform_3, window_bounds = array<i64: 64, 128>}, {pipeline_mode = #tpu.pipeline_mode<synchronous>, transform_indices = @transform_4, window_bounds = array<i64: 1, 128>}, {pipeline_mode = #tpu.pipeline_mode<synchronous>, transform_indices = @transform_5, window_bounds = array<i64: 128, 64>}, {pipeline_mode = #tpu.pipeline_mode<synchronous>, transform_indices = @transform_6, window_bounds = array<i64: 1, 64>}, {transform_indices = @transform_7, window_bounds = array<i64: 32, 64>}]} {
    %c0 = arith.constant 0 : index
    %c0_0 = arith.constant 0 : index
    %0 = vector.load %arg1[%c0, %c0_0] : memref<32x64xf32, #tpu.memory_space<vmem>>, vector<32x64xf32>
    %c0_1 = arith.constant 0 : index
    %c0_2 = arith.constant 0 : index
    %1 = vector.load %arg2[%c0_1, %c0_2] : memref<1x64xf32, #tpu.memory_space<vmem>>, vector<1x64xf32>
    %c0_3 = arith.constant 0 : index
    %c0_4 = arith.constant 0 : index
    %2 = vector.load %arg3[%c0_3, %c0_4] : memref<1x64xf32, #tpu.memory_space<vmem>>, vector<1x64xf32>
    %cst = arith.constant dense<0.000000e+00> : vector<32xf32>
    %3 = vector.multi_reduction <add>, %0, %cst [1] : vector<32x64xf32> to vector<32xf32>
    %4 = vector.shape_cast %3 : vector<32xf32> to vector<32x1xf32>
    %cst_5 = arith.constant 6.400000e+01 : f32
    %5 = vector.broadcast %cst_5 : f32 to vector<32x1xf32>
    %6 = arith.divf %4, %5 : vector<32x1xf32>
    %7 = vector.broadcast %6 : vector<32x1xf32> to vector<32x64xf32>
    %8 = arith.subf %0, %7 : vector<32x64xf32>
    %9 = arith.mulf %8, %8 : vector<32x64xf32>
    %cst_6 = arith.constant dense<0.000000e+00> : vector<32xf32>
    %10 = vector.multi_reduction <add>, %9, %cst_6 [1] : vector<32x64xf32> to vector<32xf32>
    %11 = vector.shape_cast %10 : vector<32xf32> to vector<32x1xf32>
    %cst_7 = arith.constant 6.400000e+01 : f32
    %12 = vector.broadcast %cst_7 : f32 to vector<32x1xf32>
    %13 = arith.divf %11, %12 : vector<32x1xf32>
    %cst_8 = arith.constant 9.99999974E-6 : f32
    %14 = vector.broadcast %cst_8 : f32 to vector<32x1xf32>
    %15 = arith.addf %13, %14 : vector<32x1xf32>
    %16 = math.rsqrt %15 : vector<32x1xf32>
    %17 = vector.broadcast %16 : vector<32x1xf32> to vector<32x64xf32>
    %18 = arith.mulf %8, %17 : vector<32x64xf32>
    %19 = vector.broadcast %1 : vector<1x64xf32> to vector<32x64xf32>
    %20 = arith.mulf %18, %19 : vector<32x64xf32>
    %21 = vector.broadcast %2 : vector<1x64xf32> to vector<32x64xf32>
    %22 = arith.addf %20, %21 : vector<32x64xf32>
    %23 = arith.truncf %22 : vector<32x64xf32> to vector<32x64xbf16>
    %c0_9 = arith.constant 0 : index
    %c0_10 = arith.constant 0 : index
    %24 = vector.load %arg4[%c0_9, %c0_10] : memref<64x128xbf16, #tpu.memory_space<vmem>>, vector<64x128xbf16>
    %cst_11 = arith.constant dense<0.000000e+00> : vector<32x128xf32>
    %25 = tpu.matmul %23, %24, %cst_11 {dimension_numbers = #tpu.dot_dimension_numbers<[1], [0], [0], [1], [0, 0, 1, 1], [], []>} : vector<32x64xbf16>, vector<64x128xbf16>, vector<32x128xf32> -> vector<32x128xf32>
    %c0_12 = arith.constant 0 : index
    %c0_13 = arith.constant 0 : index
    %26 = vector.load %arg5[%c0_12, %c0_13] : memref<1x128xf32, #tpu.memory_space<vmem>>, vector<1x128xf32>
    %27 = vector.broadcast %26 : vector<1x128xf32> to vector<32x128xf32>
    %28 = arith.addf %25, %27 : vector<32x128xf32>
    %29 = arith.negf %28 : vector<32x128xf32>
    %30 = math.exp %29 : vector<32x128xf32>
    %cst_14 = arith.constant 1.000000e+00 : f32
    %31 = vector.broadcast %cst_14 : f32 to vector<32x128xf32>
    %32 = arith.addf %31, %30 : vector<32x128xf32>
    %33 = arith.divf %31, %32 : vector<32x128xf32>
    %34 = arith.mulf %28, %33 : vector<32x128xf32>
    %35 = arith.truncf %34 : vector<32x128xf32> to vector<32x128xbf16>
    %c0_15 = arith.constant 0 : index
    %c0_16 = arith.constant 0 : index
    %36 = vector.load %arg6[%c0_15, %c0_16] : memref<128x64xbf16, #tpu.memory_space<vmem>>, vector<128x64xbf16>
    %cst_17 = arith.constant dense<0.000000e+00> : vector<32x64xf32>
    %37 = tpu.matmul %35, %36, %cst_17 {dimension_numbers = #tpu.dot_dimension_numbers<[1], [0], [0], [1], [0, 0, 1, 1], [], []>} : vector<32x128xbf16>, vector<128x64xbf16>, vector<32x64xf32> -> vector<32x64xf32>
    %c0_18 = arith.constant 0 : index
    %c0_19 = arith.constant 0 : index
    %38 = vector.load %arg7[%c0_18, %c0_19] : memref<1x64xf32, #tpu.memory_space<vmem>>, vector<1x64xf32>
    %39 = vector.broadcast %38 : vector<1x64xf32> to vector<32x64xf32>
    %40 = arith.addf %37, %39 : vector<32x64xf32>
    %cst_20 = arith.constant 5.000000e-01 : f32
    %41 = vector.broadcast %cst_20 : f32 to vector<32x64xf32>
    %42 = arith.mulf %40, %41 : vector<32x64xf32>
    %43 = arith.addf %42, %0 : vector<32x64xf32>
    %c0_21 = arith.constant 0 : index
    %c0_22 = arith.constant 0 : index
    %44 = vector.load %arg8[%c0_21, %c0_22] : memref<32x64xf32, #tpu.memory_space<vmem>>, vector<32x64xf32>
    tpu.vector_store %arg8[%c0_21, %c0_22], %43 {strides = array<i32>} : memref<32x64xf32, #tpu.memory_space<vmem>>, vector<32x64xf32>,
    return
  }
  func.func @transform_0(%arg0: i32) -> (i32, i32) {
    %c0_i32 = arith.constant 0 : i32
    %c0_i32_0 = arith.constant 0 : i32
    return %arg0, %c0_i32 : i32, i32
  }
  func.func @transform_1(%arg0: i32) -> (i32, i32) {
    %c0_i32 = arith.constant 0 : i32
    %c0_i32_0 = arith.constant 0 : i32
    %c0_i32_1 = arith.constant 0 : i32
    return %c0_i32, %c0_i32_0 : i32, i32
  }
  func.func @transform_2(%arg0: i32) -> (i32, i32) {
    %c0_i32 = arith.constant 0 : i32
    %c0_i32_0 = arith.constant 0 : i32
    %c0_i32_1 = arith.constant 0 : i32
    return %c0_i32, %c0_i32_0 : i32, i32
  }
  func.func @transform_3(%arg0: i32) -> (i32, i32) {
    %c0_i32 = arith.constant 0 : i32
    %c0_i32_0 = arith.constant 0 : i32
    %c0_i32_1 = arith.constant 0 : i32
    return %c0_i32, %c0_i32_0 : i32, i32
  }
  func.func @transform_4(%arg0: i32) -> (i32, i32) {
    %c0_i32 = arith.constant 0 : i32
    %c0_i32_0 = arith.constant 0 : i32
    %c0_i32_1 = arith.constant 0 : i32
    return %c0_i32, %c0_i32_0 : i32, i32
  }
  func.func @transform_5(%arg0: i32) -> (i32, i32) {
    %c0_i32 = arith.constant 0 : i32
    %c0_i32_0 = arith.constant 0 : i32
    %c0_i32_1 = arith.constant 0 : i32
    return %c0_i32, %c0_i32_0 : i32, i32
  }
  func.func @transform_6(%arg0: i32) -> (i32, i32) {
    %c0_i32 = arith.constant 0 : i32
    %c0_i32_0 = arith.constant 0 : i32
    %c0_i32_1 = arith.constant 0 : i32
    return %c0_i32, %c0_i32_0 : i32, i32
  }
  func.func @transform_7(%arg0: i32) -> (i32, i32) {
    %c0_i32 = arith.constant 0 : i32
    %c0_i32_0 = arith.constant 0 : i32
    return %arg0, %c0_i32 : i32, i32
  }
}

module attributes {stable_mosaic.version = 11 : i64} {
  func.func @_ln_qkv_heads_kernel(%arg0: i32, %arg1: i32, %arg2: memref<1x16x64xf32, #tpu.memory_space<vmem>>, %arg3: memref<1x64xf32, #tpu.memory_space<vmem>>, %arg4: memref<1x64xf32, #tpu.memory_space<vmem>>, %arg5: memref<64x192xbf16, #tpu.memory_space<vmem>>, %arg6: memref<1x192xf32, #tpu.memory_space<vmem>>, %arg7: memref<1x64xf32, #tpu.memory_space<vmem>>, %arg8: memref<1x64xf32, #tpu.memory_space<vmem>>, %arg9: memref<1x4x16x16xbf16, #tpu.memory_space<vmem>>, %arg10: memref<1x4x16x16xbf16, #tpu.memory_space<vmem>>, %arg11: memref<1x4x16x16xbf16, #tpu.memory_space<vmem>>, %arg12: memref<1x4x16x16xbf16, #tpu.memory_space<vmem>>) attributes {dimension_semantics = [#tpu.dimension_semantics<parallel>, #tpu.dimension_semantics<parallel>], iteration_bounds = array<i64: 2, 1>, scalar_prefetch = 0 : i64, scratch_operands = 0 : i64, tpu.core_type = #tpu.core_type<tc>, window_params = [{transform_indices = @transform_0, window_bounds = array<i64: 1, 16, 64>}, {pipeline_mode = #tpu.pipeline_mode<synchronous>, transform_indices = @transform_1, window_bounds = array<i64: 1, 64>}, {pipeline_mode = #tpu.pipeline_mode<synchronous>, transform_indices = @transform_2, window_bounds = array<i64: 1, 64>}, {pipeline_mode = #tpu.pipeline_mode<synchronous>, transform_indices = @transform_3, window_bounds = array<i64: 64, 192>}, {pipeline_mode = #tpu.pipeline_mode<synchronous>, transform_indices = @transform_4, window_bounds = array<i64: 1, 192>}, {pipeline_mode = #tpu.pipeline_mode<synchronous>, transform_indices = @transform_5, window_bounds = array<i64: 1, 64>}, {pipeline_mode = #tpu.pipeline_mode<synchronous>, transform_indices = @transform_6, window_bounds = array<i64: 1, 64>}, {transform_indices = @transform_7, window_bounds = array<i64: 1, 4, 16, 16>}, {transform_indices = @transform_8, window_bounds = array<i64: 1, 4, 16, 16>}, {transform_indices = @transform_9, window_bounds = array<i64: 1, 4, 16, 16>}, {transform_indices = @transform_10, window_bounds = array<i64: 1, 4, 16, 16>}]} {
    %c0 = arith.constant 0 : index
    %c0_0 = arith.constant 0 : index
    %c0_1 = arith.constant 0 : index
    %0 = vector.load %arg2[%c0, %c0_0, %c0_1] : memref<1x16x64xf32, #tpu.memory_space<vmem>>, vector<1x16x64xf32>
    %1 = vector.shape_cast %0 : vector<1x16x64xf32> to vector<16x64xf32>
    %c0_2 = arith.constant 0 : index
    %c0_3 = arith.constant 0 : index
    %2 = vector.load %arg3[%c0_2, %c0_3] : memref<1x64xf32, #tpu.memory_space<vmem>>, vector<1x64xf32>
    %c0_4 = arith.constant 0 : index
    %c0_5 = arith.constant 0 : index
    %3 = vector.load %arg4[%c0_4, %c0_5] : memref<1x64xf32, #tpu.memory_space<vmem>>, vector<1x64xf32>
    %cst = arith.constant dense<0.000000e+00> : vector<16xf32>
    %4 = vector.multi_reduction <add>, %1, %cst [1] : vector<16x64xf32> to vector<16xf32>
    %5 = vector.shape_cast %4 : vector<16xf32> to vector<16x1xf32>
    %cst_6 = arith.constant 6.400000e+01 : f32
    %6 = vector.broadcast %cst_6 : f32 to vector<16x1xf32>
    %7 = arith.divf %5, %6 : vector<16x1xf32>
    %8 = vector.broadcast %7 : vector<16x1xf32> to vector<16x64xf32>
    %9 = arith.subf %1, %8 : vector<16x64xf32>
    %10 = arith.mulf %9, %9 : vector<16x64xf32>
    %cst_7 = arith.constant dense<0.000000e+00> : vector<16xf32>
    %11 = vector.multi_reduction <add>, %10, %cst_7 [1] : vector<16x64xf32> to vector<16xf32>
    %12 = vector.shape_cast %11 : vector<16xf32> to vector<16x1xf32>
    %cst_8 = arith.constant 6.400000e+01 : f32
    %13 = vector.broadcast %cst_8 : f32 to vector<16x1xf32>
    %14 = arith.divf %12, %13 : vector<16x1xf32>
    %cst_9 = arith.constant 9.99999974E-6 : f32
    %15 = vector.broadcast %cst_9 : f32 to vector<16x1xf32>
    %16 = arith.addf %14, %15 : vector<16x1xf32>
    %17 = math.rsqrt %16 : vector<16x1xf32>
    %18 = vector.broadcast %17 : vector<16x1xf32> to vector<16x64xf32>
    %19 = arith.mulf %9, %18 : vector<16x64xf32>
    %20 = vector.broadcast %2 : vector<1x64xf32> to vector<16x64xf32>
    %21 = arith.mulf %19, %20 : vector<16x64xf32>
    %22 = vector.broadcast %3 : vector<1x64xf32> to vector<16x64xf32>
    %23 = arith.addf %21, %22 : vector<16x64xf32>
    %24 = arith.truncf %23 : vector<16x64xf32> to vector<16x64xbf16>
    %c0_10 = arith.constant 0 : index
    %c0_11 = arith.constant 0 : index
    %25 = vector.load %arg5[%c0_10, %c0_11] : memref<64x192xbf16, #tpu.memory_space<vmem>>, vector<64x192xbf16>
    %cst_12 = arith.constant dense<0.000000e+00> : vector<16x192xf32>
    %26 = tpu.matmul %24, %25, %cst_12 {dimension_numbers = #tpu.dot_dimension_numbers<[1], [0], [0], [1], [0, 0, 1, 1], [], []>} : vector<16x64xbf16>, vector<64x192xbf16>, vector<16x192xf32> -> vector<16x192xf32>
    %c0_13 = arith.constant 0 : index
    %c0_14 = arith.constant 0 : index
    %27 = vector.load %arg6[%c0_13, %c0_14] : memref<1x192xf32, #tpu.memory_space<vmem>>, vector<1x192xf32>
    %28 = vector.broadcast %27 : vector<1x192xf32> to vector<16x192xf32>
    %29 = arith.addf %26, %28 : vector<16x192xf32>
    %30 = vector.extract_strided_slice %29 {offsets = [0, 0], sizes = [16, 64], strides = [1, 1]} : vector<16x192xf32> to vector<16x64xf32>
    %c0_15 = arith.constant 0 : index
    %c0_16 = arith.constant 0 : index
    %31 = vector.load %arg7[%c0_15, %c0_16] : memref<1x64xf32, #tpu.memory_space<vmem>>, vector<1x64xf32>
    %32 = vector.broadcast %31 : vector<1x64xf32> to vector<16x64xf32>
    %33 = arith.addf %30, %32 : vector<16x64xf32>
    %34 = arith.truncf %33 : vector<16x64xf32> to vector<16x64xbf16>
    %c0_17 = arith.constant 0 : index
    %c0_18 = arith.constant 0 : index
    %35 = vector.load %arg8[%c0_17, %c0_18] : memref<1x64xf32, #tpu.memory_space<vmem>>, vector<1x64xf32>
    %36 = vector.broadcast %35 : vector<1x64xf32> to vector<16x64xf32>
    %37 = arith.addf %30, %36 : vector<16x64xf32>
    %38 = arith.truncf %37 : vector<16x64xf32> to vector<16x64xbf16>
    %39 = vector.extract_strided_slice %29 {offsets = [0, 64], sizes = [16, 64], strides = [1, 1]} : vector<16x192xf32> to vector<16x64xf32>
    %40 = arith.truncf %39 : vector<16x64xf32> to vector<16x64xbf16>
    %41 = vector.extract_strided_slice %29 {offsets = [0, 128], sizes = [16, 64], strides = [1, 1]} : vector<16x192xf32> to vector<16x64xf32>
    %42 = arith.truncf %41 : vector<16x64xf32> to vector<16x64xbf16>
    %43 = vector.extract_strided_slice %34 {offsets = [0, 0], sizes = [16, 16], strides = [1, 1]} : vector<16x64xbf16> to vector<16x16xbf16>
    %c0_19 = arith.constant 0 : index
    %c0_20 = arith.constant 0 : index
    %c0_21 = arith.constant 0 : index
    %c0_22 = arith.constant 0 : index
    %44 = vector.load %arg9[%c0_19, %c0_20, %c0_21, %c0_22] : memref<1x4x16x16xbf16, #tpu.memory_space<vmem>>, vector<1x1x16x16xbf16>
    %45 = vector.shape_cast %44 : vector<1x1x16x16xbf16> to vector<16x16xbf16>
    %46 = vector.shape_cast %43 : vector<16x16xbf16> to vector<1x1x16x16xbf16>
    tpu.vector_store %arg9[%c0_19, %c0_20, %c0_21, %c0_22], %46 {strides = array<i32>} : memref<1x4x16x16xbf16, #tpu.memory_space<vmem>>, vector<1x1x16x16xbf16>,
    %47 = vector.extract_strided_slice %38 {offsets = [0, 0], sizes = [16, 16], strides = [1, 1]} : vector<16x64xbf16> to vector<16x16xbf16>
    %c0_23 = arith.constant 0 : index
    %c0_24 = arith.constant 0 : index
    %c0_25 = arith.constant 0 : index
    %c0_26 = arith.constant 0 : index
    %48 = vector.load %arg10[%c0_23, %c0_24, %c0_25, %c0_26] : memref<1x4x16x16xbf16, #tpu.memory_space<vmem>>, vector<1x1x16x16xbf16>
    %49 = vector.shape_cast %48 : vector<1x1x16x16xbf16> to vector<16x16xbf16>
    %50 = vector.shape_cast %47 : vector<16x16xbf16> to vector<1x1x16x16xbf16>
    tpu.vector_store %arg10[%c0_23, %c0_24, %c0_25, %c0_26], %50 {strides = array<i32>} : memref<1x4x16x16xbf16, #tpu.memory_space<vmem>>, vector<1x1x16x16xbf16>,
    %51 = vector.extract_strided_slice %40 {offsets = [0, 0], sizes = [16, 16], strides = [1, 1]} : vector<16x64xbf16> to vector<16x16xbf16>
    %c0_27 = arith.constant 0 : index
    %c0_28 = arith.constant 0 : index
    %c0_29 = arith.constant 0 : index
    %c0_30 = arith.constant 0 : index
    %52 = vector.load %arg11[%c0_27, %c0_28, %c0_29, %c0_30] : memref<1x4x16x16xbf16, #tpu.memory_space<vmem>>, vector<1x1x16x16xbf16>
    %53 = vector.shape_cast %52 : vector<1x1x16x16xbf16> to vector<16x16xbf16>
    %54 = vector.shape_cast %51 : vector<16x16xbf16> to vector<1x1x16x16xbf16>
    tpu.vector_store %arg11[%c0_27, %c0_28, %c0_29, %c0_30], %54 {strides = array<i32>} : memref<1x4x16x16xbf16, #tpu.memory_space<vmem>>, vector<1x1x16x16xbf16>,
    %55 = vector.extract_strided_slice %42 {offsets = [0, 0], sizes = [16, 16], strides = [1, 1]} : vector<16x64xbf16> to vector<16x16xbf16>
    %c0_31 = arith.constant 0 : index
    %c0_32 = arith.constant 0 : index
    %c0_33 = arith.constant 0 : index
    %c0_34 = arith.constant 0 : index
    %56 = vector.load %arg12[%c0_31, %c0_32, %c0_33, %c0_34] : memref<1x4x16x16xbf16, #tpu.memory_space<vmem>>, vector<1x1x16x16xbf16>
    %57 = vector.shape_cast %56 : vector<1x1x16x16xbf16> to vector<16x16xbf16>
    %58 = vector.shape_cast %55 : vector<16x16xbf16> to vector<1x1x16x16xbf16>
    tpu.vector_store %arg12[%c0_31, %c0_32, %c0_33, %c0_34], %58 {strides = array<i32>} : memref<1x4x16x16xbf16, #tpu.memory_space<vmem>>, vector<1x1x16x16xbf16>,
    %59 = vector.extract_strided_slice %34 {offsets = [0, 16], sizes = [16, 16], strides = [1, 1]} : vector<16x64xbf16> to vector<16x16xbf16>
    %c0_35 = arith.constant 0 : index
    %c1 = arith.constant 1 : index
    %c0_36 = arith.constant 0 : index
    %c0_37 = arith.constant 0 : index
    %60 = vector.load %arg9[%c0_35, %c1, %c0_36, %c0_37] : memref<1x4x16x16xbf16, #tpu.memory_space<vmem>>, vector<1x1x16x16xbf16>
    %61 = vector.shape_cast %60 : vector<1x1x16x16xbf16> to vector<16x16xbf16>
    %62 = vector.shape_cast %59 : vector<16x16xbf16> to vector<1x1x16x16xbf16>
    tpu.vector_store %arg9[%c0_35, %c1, %c0_36, %c0_37], %62 {strides = array<i32>} : memref<1x4x16x16xbf16, #tpu.memory_space<vmem>>, vector<1x1x16x16xbf16>,
    %63 = vector.extract_strided_slice %38 {offsets = [0, 16], sizes = [16, 16], strides = [1, 1]} : vector<16x64xbf16> to vector<16x16xbf16>
    %c0_38 = arith.constant 0 : index
    %c1_39 = arith.constant 1 : index
    %c0_40 = arith.constant 0 : index
    %c0_41 = arith.constant 0 : index
    %64 = vector.load %arg10[%c0_38, %c1_39, %c0_40, %c0_41] : memref<1x4x16x16xbf16, #tpu.memory_space<vmem>>, vector<1x1x16x16xbf16>
    %65 = vector.shape_cast %64 : vector<1x1x16x16xbf16> to vector<16x16xbf16>
    %66 = vector.shape_cast %63 : vector<16x16xbf16> to vector<1x1x16x16xbf16>
    tpu.vector_store %arg10[%c0_38, %c1_39, %c0_40, %c0_41], %66 {strides = array<i32>} : memref<1x4x16x16xbf16, #tpu.memory_space<vmem>>, vector<1x1x16x16xbf16>,
    %67 = vector.extract_strided_slice %40 {offsets = [0, 16], sizes = [16, 16], strides = [1, 1]} : vector<16x64xbf16> to vector<16x16xbf16>
    %c0_42 = arith.constant 0 : index
    %c1_43 = arith.constant 1 : index
    %c0_44 = arith.constant 0 : index
    %c0_45 = arith.constant 0 : index
    %68 = vector.load %arg11[%c0_42, %c1_43, %c0_44, %c0_45] : memref<1x4x16x16xbf16, #tpu.memory_space<vmem>>, vector<1x1x16x16xbf16>
    %69 = vector.shape_cast %68 : vector<1x1x16x16xbf16> to vector<16x16xbf16>
    %70 = vector.shape_cast %67 : vector<16x16xbf16> to vector<1x1x16x16xbf16>
    tpu.vector_store %arg11[%c0_42, %c1_43, %c0_44, %c0_45], %70 {strides = array<i32>} : memref<1x4x16x16xbf16, #tpu.memory_space<vmem>>, vector<1x1x16x16xbf16>,
    %71 = vector.extract_strided_slice %42 {offsets = [0, 16], sizes = [16, 16], strides = [1, 1]} : vector<16x64xbf16> to vector<16x16xbf16>
    %c0_46 = arith.constant 0 : index
    %c1_47 = arith.constant 1 : index
    %c0_48 = arith.constant 0 : index
    %c0_49 = arith.constant 0 : index
    %72 = vector.load %arg12[%c0_46, %c1_47, %c0_48, %c0_49] : memref<1x4x16x16xbf16, #tpu.memory_space<vmem>>, vector<1x1x16x16xbf16>
    %73 = vector.shape_cast %72 : vector<1x1x16x16xbf16> to vector<16x16xbf16>
    %74 = vector.shape_cast %71 : vector<16x16xbf16> to vector<1x1x16x16xbf16>
    tpu.vector_store %arg12[%c0_46, %c1_47, %c0_48, %c0_49], %74 {strides = array<i32>} : memref<1x4x16x16xbf16, #tpu.memory_space<vmem>>, vector<1x1x16x16xbf16>,
    %75 = vector.extract_strided_slice %34 {offsets = [0, 32], sizes = [16, 16], strides = [1, 1]} : vector<16x64xbf16> to vector<16x16xbf16>
    %c0_50 = arith.constant 0 : index
    %c2 = arith.constant 2 : index
    %c0_51 = arith.constant 0 : index
    %c0_52 = arith.constant 0 : index
    %76 = vector.load %arg9[%c0_50, %c2, %c0_51, %c0_52] : memref<1x4x16x16xbf16, #tpu.memory_space<vmem>>, vector<1x1x16x16xbf16>
    %77 = vector.shape_cast %76 : vector<1x1x16x16xbf16> to vector<16x16xbf16>
    %78 = vector.shape_cast %75 : vector<16x16xbf16> to vector<1x1x16x16xbf16>
    tpu.vector_store %arg9[%c0_50, %c2, %c0_51, %c0_52], %78 {strides = array<i32>} : memref<1x4x16x16xbf16, #tpu.memory_space<vmem>>, vector<1x1x16x16xbf16>,
    %79 = vector.extract_strided_slice %38 {offsets = [0, 32], sizes = [16, 16], strides = [1, 1]} : vector<16x64xbf16> to vector<16x16xbf16>
    %c0_53 = arith.constant 0 : index
    %c2_54 = arith.constant 2 : index
    %c0_55 = arith.constant 0 : index
    %c0_56 = arith.constant 0 : index
    %80 = vector.load %arg10[%c0_53, %c2_54, %c0_55, %c0_56] : memref<1x4x16x16xbf16, #tpu.memory_space<vmem>>, vector<1x1x16x16xbf16>
    %81 = vector.shape_cast %80 : vector<1x1x16x16xbf16> to vector<16x16xbf16>
    %82 = vector.shape_cast %79 : vector<16x16xbf16> to vector<1x1x16x16xbf16>
    tpu.vector_store %arg10[%c0_53, %c2_54, %c0_55, %c0_56], %82 {strides = array<i32>} : memref<1x4x16x16xbf16, #tpu.memory_space<vmem>>, vector<1x1x16x16xbf16>,
    %83 = vector.extract_strided_slice %40 {offsets = [0, 32], sizes = [16, 16], strides = [1, 1]} : vector<16x64xbf16> to vector<16x16xbf16>
    %c0_57 = arith.constant 0 : index
    %c2_58 = arith.constant 2 : index
    %c0_59 = arith.constant 0 : index
    %c0_60 = arith.constant 0 : index
    %84 = vector.load %arg11[%c0_57, %c2_58, %c0_59, %c0_60] : memref<1x4x16x16xbf16, #tpu.memory_space<vmem>>, vector<1x1x16x16xbf16>
    %85 = vector.shape_cast %84 : vector<1x1x16x16xbf16> to vector<16x16xbf16>
    %86 = vector.shape_cast %83 : vector<16x16xbf16> to vector<1x1x16x16xbf16>
    tpu.vector_store %arg11[%c0_57, %c2_58, %c0_59, %c0_60], %86 {strides = array<i32>} : memref<1x4x16x16xbf16, #tpu.memory_space<vmem>>, vector<1x1x16x16xbf16>,
    %87 = vector.extract_strided_slice %42 {offsets = [0, 32], sizes = [16, 16], strides = [1, 1]} : vector<16x64xbf16> to vector<16x16xbf16>
    %c0_61 = arith.constant 0 : index
    %c2_62 = arith.constant 2 : index
    %c0_63 = arith.constant 0 : index
    %c0_64 = arith.constant 0 : index
    %88 = vector.load %arg12[%c0_61, %c2_62, %c0_63, %c0_64] : memref<1x4x16x16xbf16, #tpu.memory_space<vmem>>, vector<1x1x16x16xbf16>
    %89 = vector.shape_cast %88 : vector<1x1x16x16xbf16> to vector<16x16xbf16>
    %90 = vector.shape_cast %87 : vector<16x16xbf16> to vector<1x1x16x16xbf16>
    tpu.vector_store %arg12[%c0_61, %c2_62, %c0_63, %c0_64], %90 {strides = array<i32>} : memref<1x4x16x16xbf16, #tpu.memory_space<vmem>>, vector<1x1x16x16xbf16>,
    %91 = vector.extract_strided_slice %34 {offsets = [0, 48], sizes = [16, 16], strides = [1, 1]} : vector<16x64xbf16> to vector<16x16xbf16>
    %c0_65 = arith.constant 0 : index
    %c3 = arith.constant 3 : index
    %c0_66 = arith.constant 0 : index
    %c0_67 = arith.constant 0 : index
    %92 = vector.load %arg9[%c0_65, %c3, %c0_66, %c0_67] : memref<1x4x16x16xbf16, #tpu.memory_space<vmem>>, vector<1x1x16x16xbf16>
    %93 = vector.shape_cast %92 : vector<1x1x16x16xbf16> to vector<16x16xbf16>
    %94 = vector.shape_cast %91 : vector<16x16xbf16> to vector<1x1x16x16xbf16>
    tpu.vector_store %arg9[%c0_65, %c3, %c0_66, %c0_67], %94 {strides = array<i32>} : memref<1x4x16x16xbf16, #tpu.memory_space<vmem>>, vector<1x1x16x16xbf16>,
    %95 = vector.extract_strided_slice %38 {offsets = [0, 48], sizes = [16, 16], strides = [1, 1]} : vector<16x64xbf16> to vector<16x16xbf16>
    %c0_68 = arith.constant 0 : index
    %c3_69 = arith.constant 3 : index
    %c0_70 = arith.constant 0 : index
    %c0_71 = arith.constant 0 : index
    %96 = vector.load %arg10[%c0_68, %c3_69, %c0_70, %c0_71] : memref<1x4x16x16xbf16, #tpu.memory_space<vmem>>, vector<1x1x16x16xbf16>
    %97 = vector.shape_cast %96 : vector<1x1x16x16xbf16> to vector<16x16xbf16>
    %98 = vector.shape_cast %95 : vector<16x16xbf16> to vector<1x1x16x16xbf16>
    tpu.vector_store %arg10[%c0_68, %c3_69, %c0_70, %c0_71], %98 {strides = array<i32>} : memref<1x4x16x16xbf16, #tpu.memory_space<vmem>>, vector<1x1x16x16xbf16>,
    %99 = vector.extract_strided_slice %40 {offsets = [0, 48], sizes = [16, 16], strides = [1, 1]} : vector<16x64xbf16> to vector<16x16xbf16>
    %c0_72 = arith.constant 0 : index
    %c3_73 = arith.constant 3 : index
    %c0_74 = arith.constant 0 : index
    %c0_75 = arith.constant 0 : index
    %100 = vector.load %arg11[%c0_72, %c3_73, %c0_74, %c0_75] : memref<1x4x16x16xbf16, #tpu.memory_space<vmem>>, vector<1x1x16x16xbf16>
    %101 = vector.shape_cast %100 : vector<1x1x16x16xbf16> to vector<16x16xbf16>
    %102 = vector.shape_cast %99 : vector<16x16xbf16> to vector<1x1x16x16xbf16>
    tpu.vector_store %arg11[%c0_72, %c3_73, %c0_74, %c0_75], %102 {strides = array<i32>} : memref<1x4x16x16xbf16, #tpu.memory_space<vmem>>, vector<1x1x16x16xbf16>,
    %103 = vector.extract_strided_slice %42 {offsets = [0, 48], sizes = [16, 16], strides = [1, 1]} : vector<16x64xbf16> to vector<16x16xbf16>
    %c0_76 = arith.constant 0 : index
    %c3_77 = arith.constant 3 : index
    %c0_78 = arith.constant 0 : index
    %c0_79 = arith.constant 0 : index
    %104 = vector.load %arg12[%c0_76, %c3_77, %c0_78, %c0_79] : memref<1x4x16x16xbf16, #tpu.memory_space<vmem>>, vector<1x1x16x16xbf16>
    %105 = vector.shape_cast %104 : vector<1x1x16x16xbf16> to vector<16x16xbf16>
    %106 = vector.shape_cast %103 : vector<16x16xbf16> to vector<1x1x16x16xbf16>
    tpu.vector_store %arg12[%c0_76, %c3_77, %c0_78, %c0_79], %106 {strides = array<i32>} : memref<1x4x16x16xbf16, #tpu.memory_space<vmem>>, vector<1x1x16x16xbf16>,
    return
  }
  func.func @transform_0(%arg0: i32, %arg1: i32) -> (i32, i32, i32) {
    %c0_i32 = arith.constant 0 : i32
    %c0_i32_0 = arith.constant 0 : i32
    return %arg0, %arg1, %c0_i32 : i32, i32, i32
  }
  func.func @transform_1(%arg0: i32, %arg1: i32) -> (i32, i32) {
    %c0_i32 = arith.constant 0 : i32
    %c0_i32_0 = arith.constant 0 : i32
    %c0_i32_1 = arith.constant 0 : i32
    return %c0_i32, %c0_i32_0 : i32, i32
  }
  func.func @transform_2(%arg0: i32, %arg1: i32) -> (i32, i32) {
    %c0_i32 = arith.constant 0 : i32
    %c0_i32_0 = arith.constant 0 : i32
    %c0_i32_1 = arith.constant 0 : i32
    return %c0_i32, %c0_i32_0 : i32, i32
  }
  func.func @transform_3(%arg0: i32, %arg1: i32) -> (i32, i32) {
    %c0_i32 = arith.constant 0 : i32
    %c0_i32_0 = arith.constant 0 : i32
    %c0_i32_1 = arith.constant 0 : i32
    return %c0_i32, %c0_i32_0 : i32, i32
  }
  func.func @transform_4(%arg0: i32, %arg1: i32) -> (i32, i32) {
    %c0_i32 = arith.constant 0 : i32
    %c0_i32_0 = arith.constant 0 : i32
    %c0_i32_1 = arith.constant 0 : i32
    return %c0_i32, %c0_i32_0 : i32, i32
  }
  func.func @transform_5(%arg0: i32, %arg1: i32) -> (i32, i32) {
    %c0_i32 = arith.constant 0 : i32
    %c0_i32_0 = arith.constant 0 : i32
    %c0_i32_1 = arith.constant 0 : i32
    return %c0_i32, %c0_i32_0 : i32, i32
  }
  func.func @transform_6(%arg0: i32, %arg1: i32) -> (i32, i32) {
    %c0_i32 = arith.constant 0 : i32
    %c0_i32_0 = arith.constant 0 : i32
    %c0_i32_1 = arith.constant 0 : i32
    return %c0_i32, %c0_i32_0 : i32, i32
  }
  func.func @transform_7(%arg0: i32, %arg1: i32) -> (i32, i32, i32, i32) {
    %c0_i32 = arith.constant 0 : i32
    %c0_i32_0 = arith.constant 0 : i32
    %c0_i32_1 = arith.constant 0 : i32
    return %arg0, %c0_i32, %arg1, %c0_i32_0 : i32, i32, i32, i32
  }
  func.func @transform_8(%arg0: i32, %arg1: i32) -> (i32, i32, i32, i32) {
    %c0_i32 = arith.constant 0 : i32
    %c0_i32_0 = arith.constant 0 : i32
    %c0_i32_1 = arith.constant 0 : i32
    return %arg0, %c0_i32, %arg1, %c0_i32_0 : i32, i32, i32, i32
  }
  func.func @transform_9(%arg0: i32, %arg1: i32) -> (i32, i32, i32, i32) {
    %c0_i32 = arith.constant 0 : i32
    %c0_i32_0 = arith.constant 0 : i32
    %c0_i32_1 = arith.constant 0 : i32
    return %arg0, %c0_i32, %arg1, %c0_i32_0 : i32, i32, i32, i32
  }
  func.func @transform_10(%arg0: i32, %arg1: i32) -> (i32, i32, i32, i32) {
    %c0_i32 = arith.constant 0 : i32
    %c0_i32_0 = arith.constant 0 : i32
    %c0_i32_1 = arith.constant 0 : i32
    return %arg0, %c0_i32, %arg1, %c0_i32_0 : i32, i32, i32, i32
  }
}

module attributes {stable_mosaic.version = 11 : i64} {
  func.func @_rel_attn_kernel(%arg0: i32, %arg1: i32, %arg2: i32, %arg3: memref<1x4x16x16xbf16, #tpu.memory_space<vmem>>, %arg4: memref<1x4x16x16xbf16, #tpu.memory_space<vmem>>, %arg5: memref<1x4x16x16xbf16, #tpu.memory_space<vmem>>, %arg6: memref<1x4x16x16xbf16, #tpu.memory_space<vmem>>, %arg7: memref<1x16x64xf32, #tpu.memory_space<vmem>>, %arg8: memref<4x128x16xbf16, #tpu.memory_space<vmem>>, %arg9: memref<4x16x64xbf16, #tpu.memory_space<vmem>>, %arg10: memref<1x64xf32, #tpu.memory_space<vmem>>, %arg11: memref<1x16x64xf32, #tpu.memory_space<vmem>>, %arg12: memref<16x64xf32, #tpu.memory_space<vmem>>) attributes {dimension_semantics = [#tpu.dimension_semantics<parallel>, #tpu.dimension_semantics<parallel>, #tpu.dimension_semantics<arbitrary>], iteration_bounds = array<i64: 2, 1, 4>, scalar_prefetch = 0 : i64, scratch_operands = 1 : i64, tpu.core_type = #tpu.core_type<tc>, window_params = [{transform_indices = @transform_0, window_bounds = array<i64: 1, 4, 16, 16>}, {transform_indices = @transform_1, window_bounds = array<i64: 1, 4, 16, 16>}, {transform_indices = @transform_2, window_bounds = array<i64: 1, 4, 16, 16>}, {transform_indices = @transform_3, window_bounds = array<i64: 1, 4, 16, 16>}, {transform_indices = @transform_4, window_bounds = array<i64: 1, 16, 64>}, {pipeline_mode = #tpu.pipeline_mode<synchronous>, transform_indices = @transform_5, window_bounds = array<i64: 4, 128, 16>}, {pipeline_mode = #tpu.pipeline_mode<synchronous>, transform_indices = @transform_6, window_bounds = array<i64: 4, 16, 64>}, {pipeline_mode = #tpu.pipeline_mode<synchronous>, transform_indices = @transform_7, window_bounds = array<i64: 1, 64>}, {transform_indices = @transform_8, window_bounds = array<i64: 1, 16, 64>}]} {
    %c0_i32 = arith.constant 0 : i32
    %0 = arith.cmpi eq, %arg2, %c0_i32 : i32
    %1 = arith.extui %0 : i1 to i32
    %c0_i32_0 = arith.constant 0 : i32
    %2 = arith.cmpi ne, %1, %c0_i32_0 : i32
    scf.if %2 {
      %cst_27 = arith.constant 0.000000e+00 : f32
      %48 = vector.broadcast %cst_27 : f32 to vector<16x64xf32>
      %c0_28 = arith.constant 0 : index
      %c0_29 = arith.constant 0 : index
      %49 = vector.load %arg12[%c0_28, %c0_29] : memref<16x64xf32, #tpu.memory_space<vmem>>, vector<16x64xf32>
      tpu.vector_store %arg12[%c0_28, %c0_29], %48 {strides = array<i32>} : memref<16x64xf32, #tpu.memory_space<vmem>>, vector<16x64xf32>,
    } else {
    }
    %c0 = arith.constant 0 : index
    %3 = arith.index_cast %arg2 : i32 to index
    %c0_1 = arith.constant 0 : index
    %c0_2 = arith.constant 0 : index
    %4 = vector.load %arg3[%c0, %3, %c0_1, %c0_2] : memref<1x4x16x16xbf16, #tpu.memory_space<vmem>>, vector<1x1x16x16xbf16>
    %5 = vector.shape_cast %4 : vector<1x1x16x16xbf16> to vector<16x16xbf16>
    %c0_3 = arith.constant 0 : index
    %6 = arith.index_cast %arg2 : i32 to index
    %c0_4 = arith.constant 0 : index
    %c0_5 = arith.constant 0 : index
    %7 = vector.load %arg4[%c0_3, %6, %c0_4, %c0_5] : memref<1x4x16x16xbf16, #tpu.memory_space<vmem>>, vector<1x1x16x16xbf16>
    %8 = vector.shape_cast %7 : vector<1x1x16x16xbf16> to vector<16x16xbf16>
    %c0_6 = arith.constant 0 : index
    %9 = arith.index_cast %arg2 : i32 to index
    %c0_7 = arith.constant 0 : index
    %c0_8 = arith.constant 0 : index
    %10 = vector.load %arg5[%c0_6, %9, %c0_7, %c0_8] : memref<1x4x16x16xbf16, #tpu.memory_space<vmem>>, vector<1x1x16x16xbf16>
    %11 = vector.shape_cast %10 : vector<1x1x16x16xbf16> to vector<16x16xbf16>
    %c0_9 = arith.constant 0 : index
    %12 = arith.index_cast %arg2 : i32 to index
    %c0_10 = arith.constant 0 : index
    %c0_11 = arith.constant 0 : index
    %13 = vector.load %arg6[%c0_9, %12, %c0_10, %c0_11] : memref<1x4x16x16xbf16, #tpu.memory_space<vmem>>, vector<1x1x16x16xbf16>
    %14 = vector.shape_cast %13 : vector<1x1x16x16xbf16> to vector<16x16xbf16>
    %15 = arith.index_cast %arg2 : i32 to index
    %c0_12 = arith.constant 0 : index
    %c0_13 = arith.constant 0 : index
    %16 = vector.load %arg8[%15, %c0_12, %c0_13] : memref<4x128x16xbf16, #tpu.memory_space<vmem>>, vector<1x128x16xbf16>
    %17 = vector.shape_cast %16 : vector<1x128x16xbf16> to vector<128x16xbf16>
    %cst = arith.constant dense<0.000000e+00> : vector<16x16xf32>
    %18 = tpu.matmul %5, %11, %cst {dimension_numbers = #tpu.dot_dimension_numbers<[1], [1], [0], [0], [0, 0, 1, 0], [], []>} : vector<16x16xbf16>, vector<16x16xbf16>, vector<16x16xf32> -> vector<16x16xf32>
    %cst_14 = arith.constant dense<0.000000e+00> : vector<16x128xf32>
    %19 = tpu.matmul %8, %17, %cst_14 {dimension_numbers = #tpu.dot_dimension_numbers<[1], [1], [0], [0], [0, 0, 1, 0], [], []>} : vector<16x16xbf16>, vector<128x16xbf16>, vector<16x128xf32> -> vector<16x128xf32>
    %c16_i32 = arith.constant 16 : i32
    %20 = tpu.dynamic_rotate %19 by %c16_i32 dim 1 {stride = 1 : si32, stride_dimension = 0 : si32} : vector<16x128xf32>, i32 -> vector<16x128xf32>
    %21 = vector.extract_strided_slice %20 {offsets = [0, 0], sizes = [16, 16], strides = [1, 1]} : vector<16x128xf32> to vector<16x16xf32>
    %22 = arith.addf %18, %21 : vector<16x16xf32>
    %cst_15 = arith.constant 2.500000e-01 : f32
    %23 = vector.broadcast %cst_15 : f32 to vector<16x16xf32>
    %24 = arith.mulf %22, %23 : vector<16x16xf32>
    %cst_16 = arith.constant dense<0xFF800000> : vector<16xf32>
    %25 = vector.multi_reduction <maximumf>, %24, %cst_16 [1] : vector<16x16xf32> to vector<16xf32>
    %26 = vector.shape_cast %25 : vector<16xf32> to vector<16x1xf32>
    %27 = vector.broadcast %26 : vector<16x1xf32> to vector<16x16xf32>
    %28 = arith.subf %24, %27 : vector<16x16xf32>
    %29 = math.exp %28 : vector<16x16xf32>
    %cst_17 = arith.constant dense<0.000000e+00> : vector<16xf32>
    %30 = vector.multi_reduction <add>, %29, %cst_17 [1] : vector<16x16xf32> to vector<16xf32>
    %31 = vector.shape_cast %30 : vector<16xf32> to vector<16x1xf32>
    %32 = tpu.reciprocal %31 {approx = true} : vector<16x1xf32> -> vector<16x1xf32>
    %33 = vector.broadcast %32 : vector<16x1xf32> to vector<16x16xf32>
    %34 = arith.mulf %29, %33 : vector<16x16xf32>
    %35 = arith.truncf %34 : vector<16x16xf32> to vector<16x16xbf16>
    %cst_18 = arith.constant dense<0.000000e+00> : vector<16x16xf32>
    %36 = tpu.matmul %35, %14, %cst_18 {dimension_numbers = #tpu.dot_dimension_numbers<[1], [0], [0], [1], [0, 0, 1, 1], [], []>} : vector<16x16xbf16>, vector<16x16xbf16>, vector<16x16xf32> -> vector<16x16xf32>
    %c0_19 = arith.constant 0 : index
    %c0_20 = arith.constant 0 : index
    %37 = vector.load %arg12[%c0_19, %c0_20] : memref<16x64xf32, #tpu.memory_space<vmem>>, vector<16x64xf32>
    %38 = arith.truncf %36 : vector<16x16xf32> to vector<16x16xbf16>
    %39 = arith.index_cast %arg2 : i32 to index
    %c0_21 = arith.constant 0 : index
    %c0_22 = arith.constant 0 : index
    %40 = vector.load %arg9[%39, %c0_21, %c0_22] : memref<4x16x64xbf16, #tpu.memory_space<vmem>>, vector<1x16x64xbf16>
    %41 = vector.shape_cast %40 : vector<1x16x64xbf16> to vector<16x64xbf16>
    %cst_23 = arith.constant dense<0.000000e+00> : vector<16x64xf32>
    %42 = tpu.matmul %38, %41, %cst_23 {dimension_numbers = #tpu.dot_dimension_numbers<[1], [0], [0], [1], [0, 0, 1, 1], [], []>} : vector<16x16xbf16>, vector<16x64xbf16>, vector<16x64xf32> -> vector<16x64xf32>
    %43 = arith.addf %37, %42 : vector<16x64xf32>
    %c0_24 = arith.constant 0 : index
    %c0_25 = arith.constant 0 : index
    %44 = vector.load %arg12[%c0_24, %c0_25] : memref<16x64xf32, #tpu.memory_space<vmem>>, vector<16x64xf32>
    tpu.vector_store %arg12[%c0_24, %c0_25], %43 {strides = array<i32>} : memref<16x64xf32, #tpu.memory_space<vmem>>, vector<16x64xf32>,
    %c3_i32 = arith.constant 3 : i32
    %45 = arith.cmpi eq, %arg2, %c3_i32 : i32
    %46 = arith.extui %45 : i1 to i32
    %c0_i32_26 = arith.constant 0 : i32
    %47 = arith.cmpi ne, %46, %c0_i32_26 : i32
    scf.if %47 {
      %c0_27 = arith.constant 0 : index
      %c0_28 = arith.constant 0 : index
      %48 = vector.load %arg12[%c0_27, %c0_28] : memref<16x64xf32, #tpu.memory_space<vmem>>, vector<16x64xf32>
      %c0_29 = arith.constant 0 : index
      %c0_30 = arith.constant 0 : index
      %49 = vector.load %arg10[%c0_29, %c0_30] : memref<1x64xf32, #tpu.memory_space<vmem>>, vector<1x64xf32>
      %50 = vector.broadcast %49 : vector<1x64xf32> to vector<16x64xf32>
      %51 = arith.addf %48, %50 : vector<16x64xf32>
      %c0_31 = arith.constant 0 : index
      %c0_32 = arith.constant 0 : index
      %c0_33 = arith.constant 0 : index
      %52 = vector.load %arg7[%c0_31, %c0_32, %c0_33] : memref<1x16x64xf32, #tpu.memory_space<vmem>>, vector<1x16x64xf32>
      %53 = vector.shape_cast %52 : vector<1x16x64xf32> to vector<16x64xf32>
      %54 = arith.addf %51, %53 : vector<16x64xf32>
      %c0_34 = arith.constant 0 : index
      %c0_35 = arith.constant 0 : index
      %c0_36 = arith.constant 0 : index
      %55 = vector.load %arg11[%c0_34, %c0_35, %c0_36] : memref<1x16x64xf32, #tpu.memory_space<vmem>>, vector<1x16x64xf32>
      %56 = vector.shape_cast %55 : vector<1x16x64xf32> to vector<16x64xf32>
      %57 = vector.shape_cast %54 : vector<16x64xf32> to vector<1x16x64xf32>
      tpu.vector_store %arg11[%c0_34, %c0_35, %c0_36], %57 {strides = array<i32>} : memref<1x16x64xf32, #tpu.memory_space<vmem>>, vector<1x16x64xf32>,
    } else {
    }
    return
  }
  func.func @transform_0(%arg0: i32, %arg1: i32, %arg2: i32) -> (i32, i32, i32, i32) {
    %c0_i32 = arith.constant 0 : i32
    %c0_i32_0 = arith.constant 0 : i32
    %c0_i32_1 = arith.constant 0 : i32
    return %arg0, %c0_i32, %arg1, %c0_i32_0 : i32, i32, i32, i32
  }
  func.func @transform_1(%arg0: i32, %arg1: i32, %arg2: i32) -> (i32, i32, i32, i32) {
    %c0_i32 = arith.constant 0 : i32
    %c0_i32_0 = arith.constant 0 : i32
    %c0_i32_1 = arith.constant 0 : i32
    return %arg0, %c0_i32, %arg1, %c0_i32_0 : i32, i32, i32, i32
  }
  func.func @transform_2(%arg0: i32, %arg1: i32, %arg2: i32) -> (i32, i32, i32, i32) {
    %c0_i32 = arith.constant 0 : i32
    %c0_i32_0 = arith.constant 0 : i32
    %c0_i32_1 = arith.constant 0 : i32
    %c0_i32_2 = arith.constant 0 : i32
    return %arg0, %c0_i32, %c0_i32_0, %c0_i32_1 : i32, i32, i32, i32
  }
  func.func @transform_3(%arg0: i32, %arg1: i32, %arg2: i32) -> (i32, i32, i32, i32) {
    %c0_i32 = arith.constant 0 : i32
    %c0_i32_0 = arith.constant 0 : i32
    %c0_i32_1 = arith.constant 0 : i32
    %c0_i32_2 = arith.constant 0 : i32
    return %arg0, %c0_i32, %c0_i32_0, %c0_i32_1 : i32, i32, i32, i32
  }
  func.func @transform_4(%arg0: i32, %arg1: i32, %arg2: i32) -> (i32, i32, i32) {
    %c0_i32 = arith.constant 0 : i32
    %c0_i32_0 = arith.constant 0 : i32
    return %arg0, %arg1, %c0_i32 : i32, i32, i32
  }
  func.func @transform_5(%arg0: i32, %arg1: i32, %arg2: i32) -> (i32, i32, i32) {
    %c0_i32 = arith.constant 0 : i32
    %c0_i32_0 = arith.constant 0 : i32
    %c0_i32_1 = arith.constant 0 : i32
    %c0_i32_2 = arith.constant 0 : i32
    return %c0_i32, %c0_i32_0, %c0_i32_1 : i32, i32, i32
  }
  func.func @transform_6(%arg0: i32, %arg1: i32, %arg2: i32) -> (i32, i32, i32) {
    %c0_i32 = arith.constant 0 : i32
    %c0_i32_0 = arith.constant 0 : i32
    %c0_i32_1 = arith.constant 0 : i32
    %c0_i32_2 = arith.constant 0 : i32
    return %c0_i32, %c0_i32_0, %c0_i32_1 : i32, i32, i32
  }
  func.func @transform_7(%arg0: i32, %arg1: i32, %arg2: i32) -> (i32, i32) {
    %c0_i32 = arith.constant 0 : i32
    %c0_i32_0 = arith.constant 0 : i32
    %c0_i32_1 = arith.constant 0 : i32
    return %c0_i32, %c0_i32_0 : i32, i32
  }
  func.func @transform_8(%arg0: i32, %arg1: i32, %arg2: i32) -> (i32, i32, i32) {
    %c0_i32 = arith.constant 0 : i32
    %c0_i32_0 = arith.constant 0 : i32
    return %arg0, %arg1, %c0_i32 : i32, i32, i32
  }
}

module attributes {stable_mosaic.version = 11 : i64} {
  func.func @_conv_kernel(%arg0: i32, %arg1: memref<1x16x64xf32, #tpu.memory_space<vmem>>, %arg2: memref<1x64xf32, #tpu.memory_space<vmem>>, %arg3: memref<1x64xf32, #tpu.memory_space<vmem>>, %arg4: memref<64x128xbf16, #tpu.memory_space<vmem>>, %arg5: memref<5x64xf32, #tpu.memory_space<vmem>>, %arg6: memref<1x64xf32, #tpu.memory_space<vmem>>, %arg7: memref<1x64xf32, #tpu.memory_space<vmem>>, %arg8: memref<64x64xbf16, #tpu.memory_space<vmem>>, %arg9: memref<1x16x64xf32, #tpu.memory_space<vmem>>, %arg10: memref<20x64xf32, #tpu.memory_space<vmem>>) attributes {dimension_semantics = [#tpu.dimension_semantics<parallel>], iteration_bounds = array<i64: 2>, scalar_prefetch = 0 : i64, scratch_operands = 1 : i64, tpu.core_type = #tpu.core_type<tc>, window_params = [{transform_indices = @transform_0, window_bounds = array<i64: 1, 16, 64>}, {pipeline_mode = #tpu.pipeline_mode<synchronous>, transform_indices = @transform_1, window_bounds = array<i64: 1, 64>}, {pipeline_mode = #tpu.pipeline_mode<synchronous>, transform_indices = @transform_2, window_bounds = array<i64: 1, 64>}, {pipeline_mode = #tpu.pipeline_mode<synchronous>, transform_indices = @transform_3, window_bounds = array<i64: 64, 128>}, {pipeline_mode = #tpu.pipeline_mode<synchronous>, transform_indices = @transform_4, window_bounds = array<i64: 5, 64>}, {pipeline_mode = #tpu.pipeline_mode<synchronous>, transform_indices = @transform_5, window_bounds = array<i64: 1, 64>}, {pipeline_mode = #tpu.pipeline_mode<synchronous>, transform_indices = @transform_6, window_bounds = array<i64: 1, 64>}, {pipeline_mode = #tpu.pipeline_mode<synchronous>, transform_indices = @transform_7, window_bounds = array<i64: 64, 64>}, {transform_indices = @transform_8, window_bounds = array<i64: 1, 16, 64>}]} {
    %c0 = arith.constant 0 : index
    %c0_0 = arith.constant 0 : index
    %c0_1 = arith.constant 0 : index
    %0 = vector.load %arg1[%c0, %c0_0, %c0_1] : memref<1x16x64xf32, #tpu.memory_space<vmem>>, vector<1x16x64xf32>
    %1 = vector.shape_cast %0 : vector<1x16x64xf32> to vector<16x64xf32>
    %c0_2 = arith.constant 0 : index
    %c0_3 = arith.constant 0 : index
    %2 = vector.load %arg2[%c0_2, %c0_3] : memref<1x64xf32, #tpu.memory_space<vmem>>, vector<1x64xf32>
    %c0_4 = arith.constant 0 : index
    %c0_5 = arith.constant 0 : index
    %3 = vector.load %arg3[%c0_4, %c0_5] : memref<1x64xf32, #tpu.memory_space<vmem>>, vector<1x64xf32>
    %cst = arith.constant dense<0.000000e+00> : vector<16xf32>
    %4 = vector.multi_reduction <add>, %1, %cst [1] : vector<16x64xf32> to vector<16xf32>
    %5 = vector.shape_cast %4 : vector<16xf32> to vector<16x1xf32>
    %cst_6 = arith.constant 6.400000e+01 : f32
    %6 = vector.broadcast %cst_6 : f32 to vector<16x1xf32>
    %7 = arith.divf %5, %6 : vector<16x1xf32>
    %8 = vector.broadcast %7 : vector<16x1xf32> to vector<16x64xf32>
    %9 = arith.subf %1, %8 : vector<16x64xf32>
    %10 = arith.mulf %9, %9 : vector<16x64xf32>
    %cst_7 = arith.constant dense<0.000000e+00> : vector<16xf32>
    %11 = vector.multi_reduction <add>, %10, %cst_7 [1] : vector<16x64xf32> to vector<16xf32>
    %12 = vector.shape_cast %11 : vector<16xf32> to vector<16x1xf32>
    %cst_8 = arith.constant 6.400000e+01 : f32
    %13 = vector.broadcast %cst_8 : f32 to vector<16x1xf32>
    %14 = arith.divf %12, %13 : vector<16x1xf32>
    %cst_9 = arith.constant 9.99999974E-6 : f32
    %15 = vector.broadcast %cst_9 : f32 to vector<16x1xf32>
    %16 = arith.addf %14, %15 : vector<16x1xf32>
    %17 = math.rsqrt %16 : vector<16x1xf32>
    %18 = vector.broadcast %17 : vector<16x1xf32> to vector<16x64xf32>
    %19 = arith.mulf %9, %18 : vector<16x64xf32>
    %20 = vector.broadcast %2 : vector<1x64xf32> to vector<16x64xf32>
    %21 = arith.mulf %19, %20 : vector<16x64xf32>
    %22 = vector.broadcast %3 : vector<1x64xf32> to vector<16x64xf32>
    %23 = arith.addf %21, %22 : vector<16x64xf32>
    %24 = arith.truncf %23 : vector<16x64xf32> to vector<16x64xbf16>
    %c0_10 = arith.constant 0 : index
    %c0_11 = arith.constant 0 : index
    %25 = vector.load %arg4[%c0_10, %c0_11] : memref<64x128xbf16, #tpu.memory_space<vmem>>, vector<64x128xbf16>
    %cst_12 = arith.constant dense<0.000000e+00> : vector<16x128xf32>
    %26 = tpu.matmul %24, %25, %cst_12 {dimension_numbers = #tpu.dot_dimension_numbers<[1], [0], [0], [1], [0, 0, 1, 1], [], []>} : vector<16x64xbf16>, vector<64x128xbf16>, vector<16x128xf32> -> vector<16x128xf32>
    %27 = vector.extract_strided_slice %26 {offsets = [0, 0], sizes = [16, 64], strides = [1, 1]} : vector<16x128xf32> to vector<16x64xf32>
    %28 = vector.extract_strided_slice %26 {offsets = [0, 64], sizes = [16, 64], strides = [1, 1]} : vector<16x128xf32> to vector<16x64xf32>
    %29 = arith.negf %28 : vector<16x64xf32>
    %30 = math.exp %29 : vector<16x64xf32>
    %cst_13 = arith.constant 1.000000e+00 : f32
    %31 = vector.broadcast %cst_13 : f32 to vector<16x64xf32>
    %32 = arith.addf %31, %30 : vector<16x64xf32>
    %33 = arith.divf %31, %32 : vector<16x64xf32>
    %34 = arith.mulf %27, %33 : vector<16x64xf32>
    %cst_14 = arith.constant 0.000000e+00 : f32
    %35 = vector.broadcast %cst_14 : f32 to vector<2x64xf32>
    %c0_15 = arith.constant 0 : index
    %c0_16 = arith.constant 0 : index
    %36 = vector.load %arg10[%c0_15, %c0_16] : memref<20x64xf32, #tpu.memory_space<vmem>>, vector<2x64xf32>
    tpu.vector_store %arg10[%c0_15, %c0_16], %35 {strides = array<i32>} : memref<20x64xf32, #tpu.memory_space<vmem>>, vector<2x64xf32>,
    %c18 = arith.constant 18 : index
    %c0_17 = arith.constant 0 : index
    %37 = vector.load %arg10[%c18, %c0_17] : memref<20x64xf32, #tpu.memory_space<vmem>>, vector<2x64xf32>
    tpu.vector_store %arg10[%c18, %c0_17], %35 {strides = array<i32>} : memref<20x64xf32, #tpu.memory_space<vmem>>, vector<2x64xf32>,
    %c2 = arith.constant 2 : index
    %c0_18 = arith.constant 0 : index
    %38 = vector.load %arg10[%c2, %c0_18] : memref<20x64xf32, #tpu.memory_space<vmem>>, vector<16x64xf32>
    tpu.vector_store %arg10[%c2, %c0_18], %34 {strides = array<i32>} : memref<20x64xf32, #tpu.memory_space<vmem>>, vector<16x64xf32>,
    %c0_19 = arith.constant 0 : index
    %c0_20 = arith.constant 0 : index
    %39 = vector.load %arg5[%c0_19, %c0_20] : memref<5x64xf32, #tpu.memory_space<vmem>>, vector<5x64xf32>
    %cst_21 = arith.constant 0.000000e+00 : f32
    %40 = vector.broadcast %cst_21 : f32 to vector<16x64xf32>
    %c0_22 = arith.constant 0 : index
    %c0_23 = arith.constant 0 : index
    %41 = vector.load %arg10[%c0_22, %c0_23] : memref<20x64xf32, #tpu.memory_space<vmem>>, vector<16x64xf32>
    %42 = vector.extract_strided_slice %39 {offsets = [0, 0], sizes = [1, 64], strides = [1, 1]} : vector<5x64xf32> to vector<1x64xf32>
    %43 = vector.broadcast %42 : vector<1x64xf32> to vector<16x64xf32>
    %44 = arith.mulf %41, %43 : vector<16x64xf32>
    %45 = arith.addf %40, %44 : vector<16x64xf32>
    %c1 = arith.constant 1 : index
    %c0_24 = arith.constant 0 : index
    %46 = vector.load %arg10[%c1, %c0_24] : memref<20x64xf32, #tpu.memory_space<vmem>>, vector<16x64xf32>
    %47 = vector.extract_strided_slice %39 {offsets = [1, 0], sizes = [1, 64], strides = [1, 1]} : vector<5x64xf32> to vector<1x64xf32>
    %48 = vector.broadcast %47 : vector<1x64xf32> to vector<16x64xf32>
    %49 = arith.mulf %46, %48 : vector<16x64xf32>
    %50 = arith.addf %45, %49 : vector<16x64xf32>
    %c2_25 = arith.constant 2 : index
    %c0_26 = arith.constant 0 : index
    %51 = vector.load %arg10[%c2_25, %c0_26] : memref<20x64xf32, #tpu.memory_space<vmem>>, vector<16x64xf32>
    %52 = vector.extract_strided_slice %39 {offsets = [2, 0], sizes = [1, 64], strides = [1, 1]} : vector<5x64xf32> to vector<1x64xf32>
    %53 = vector.broadcast %52 : vector<1x64xf32> to vector<16x64xf32>
    %54 = arith.mulf %51, %53 : vector<16x64xf32>
    %55 = arith.addf %50, %54 : vector<16x64xf32>
    %c3 = arith.constant 3 : index
    %c0_27 = arith.constant 0 : index
    %56 = vector.load %arg10[%c3, %c0_27] : memref<20x64xf32, #tpu.memory_space<vmem>>, vector<16x64xf32>
    %57 = vector.extract_strided_slice %39 {offsets = [3, 0], sizes = [1, 64], strides = [1, 1]} : vector<5x64xf32> to vector<1x64xf32>
    %58 = vector.broadcast %57 : vector<1x64xf32> to vector<16x64xf32>
    %59 = arith.mulf %56, %58 : vector<16x64xf32>
    %60 = arith.addf %55, %59 : vector<16x64xf32>
    %c4 = arith.constant 4 : index
    %c0_28 = arith.constant 0 : index
    %61 = vector.load %arg10[%c4, %c0_28] : memref<20x64xf32, #tpu.memory_space<vmem>>, vector<16x64xf32>
    %62 = vector.extract_strided_slice %39 {offsets = [4, 0], sizes = [1, 64], strides = [1, 1]} : vector<5x64xf32> to vector<1x64xf32>
    %63 = vector.broadcast %62 : vector<1x64xf32> to vector<16x64xf32>
    %64 = arith.mulf %61, %63 : vector<16x64xf32>
    %65 = arith.addf %60, %64 : vector<16x64xf32>
    %c0_29 = arith.constant 0 : index
    %c0_30 = arith.constant 0 : index
    %66 = vector.load %arg6[%c0_29, %c0_30] : memref<1x64xf32, #tpu.memory_space<vmem>>, vector<1x64xf32>
    %67 = vector.broadcast %66 : vector<1x64xf32> to vector<16x64xf32>
    %68 = arith.mulf %65, %67 : vector<16x64xf32>
    %c0_31 = arith.constant 0 : index
    %c0_32 = arith.constant 0 : index
    %69 = vector.load %arg7[%c0_31, %c0_32] : memref<1x64xf32, #tpu.memory_space<vmem>>, vector<1x64xf32>
    %70 = vector.broadcast %69 : vector<1x64xf32> to vector<16x64xf32>
    %71 = arith.addf %68, %70 : vector<16x64xf32>
    %72 = arith.negf %71 : vector<16x64xf32>
    %73 = math.exp %72 : vector<16x64xf32>
    %cst_33 = arith.constant 1.000000e+00 : f32
    %74 = vector.broadcast %cst_33 : f32 to vector<16x64xf32>
    %75 = arith.addf %74, %73 : vector<16x64xf32>
    %76 = arith.divf %74, %75 : vector<16x64xf32>
    %77 = arith.mulf %71, %76 : vector<16x64xf32>
    %78 = arith.truncf %77 : vector<16x64xf32> to vector<16x64xbf16>
    %c0_34 = arith.constant 0 : index
    %c0_35 = arith.constant 0 : index
    %79 = vector.load %arg8[%c0_34, %c0_35] : memref<64x64xbf16, #tpu.memory_space<vmem>>, vector<64x64xbf16>
    %cst_36 = arith.constant dense<0.000000e+00> : vector<16x64xf32>
    %80 = tpu.matmul %78, %79, %cst_36 {dimension_numbers = #tpu.dot_dimension_numbers<[1], [0], [0], [1], [0, 0, 1, 1], [], []>} : vector<16x64xbf16>, vector<64x64xbf16>, vector<16x64xf32> -> vector<16x64xf32>
    %81 = arith.addf %1, %80 : vector<16x64xf32>
    %c0_37 = arith.constant 0 : index
    %c0_38 = arith.constant 0 : index
    %c0_39 = arith.constant 0 : index
    %82 = vector.load %arg9[%c0_37, %c0_38, %c0_39] : memref<1x16x64xf32, #tpu.memory_space<vmem>>, vector<1x16x64xf32>
    %83 = vector.shape_cast %82 : vector<1x16x64xf32> to vector<16x64xf32>
    %84 = vector.shape_cast %81 : vector<16x64xf32> to vector<1x16x64xf32>
    tpu.vector_store %arg9[%c0_37, %c0_38, %c0_39], %84 {strides = array<i32>} : memref<1x16x64xf32, #tpu.memory_space<vmem>>, vector<1x16x64xf32>,
    return
  }
  func.func @transform_0(%arg0: i32) -> (i32, i32, i32) {
    %c0_i32 = arith.constant 0 : i32
    %c0_i32_0 = arith.constant 0 : i32
    %c0_i32_1 = arith.constant 0 : i32
    return %arg0, %c0_i32, %c0_i32_0 : i32, i32, i32
  }
  func.func @transform_1(%arg0: i32) -> (i32, i32) {
    %c0_i32 = arith.constant 0 : i32
    %c0_i32_0 = arith.constant 0 : i32
    %c0_i32_1 = arith.constant 0 : i32
    return %c0_i32, %c0_i32_0 : i32, i32
  }
  func.func @transform_2(%arg0: i32) -> (i32, i32) {
    %c0_i32 = arith.constant 0 : i32
    %c0_i32_0 = arith.constant 0 : i32
    %c0_i32_1 = arith.constant 0 : i32
    return %c0_i32, %c0_i32_0 : i32, i32
  }
  func.func @transform_3(%arg0: i32) -> (i32, i32) {
    %c0_i32 = arith.constant 0 : i32
    %c0_i32_0 = arith.constant 0 : i32
    %c0_i32_1 = arith.constant 0 : i32
    return %c0_i32, %c0_i32_0 : i32, i32
  }
  func.func @transform_4(%arg0: i32) -> (i32, i32) {
    %c0_i32 = arith.constant 0 : i32
    %c0_i32_0 = arith.constant 0 : i32
    %c0_i32_1 = arith.constant 0 : i32
    return %c0_i32, %c0_i32_0 : i32, i32
  }
  func.func @transform_5(%arg0: i32) -> (i32, i32) {
    %c0_i32 = arith.constant 0 : i32
    %c0_i32_0 = arith.constant 0 : i32
    %c0_i32_1 = arith.constant 0 : i32
    return %c0_i32, %c0_i32_0 : i32, i32
  }
  func.func @transform_6(%arg0: i32) -> (i32, i32) {
    %c0_i32 = arith.constant 0 : i32
    %c0_i32_0 = arith.constant 0 : i32
    %c0_i32_1 = arith.constant 0 : i32
    return %c0_i32, %c0_i32_0 : i32, i32
  }
  func.func @transform_7(%arg0: i32) -> (i32, i32) {
    %c0_i32 = arith.constant 0 : i32
    %c0_i32_0 = arith.constant 0 : i32
    %c0_i32_1 = arith.constant 0 : i32
    return %c0_i32, %c0_i32_0 : i32, i32
  }
  func.func @transform_8(%arg0: i32) -> (i32, i32, i32) {
    %c0_i32 = arith.constant 0 : i32
    %c0_i32_0 = arith.constant 0 : i32
    %c0_i32_1 = arith.constant 0 : i32
    return %arg0, %c0_i32, %c0_i32_0 : i32, i32, i32
  }
}

module attributes {stable_mosaic.version = 11 : i64} {
  func.func @_ffn_kernel(%arg0: i32, %arg1: memref<32x64xf32, #tpu.memory_space<vmem>>, %arg2: memref<1x64xf32, #tpu.memory_space<vmem>>, %arg3: memref<1x64xf32, #tpu.memory_space<vmem>>, %arg4: memref<64x128xbf16, #tpu.memory_space<vmem>>, %arg5: memref<1x128xf32, #tpu.memory_space<vmem>>, %arg6: memref<128x64xbf16, #tpu.memory_space<vmem>>, %arg7: memref<1x64xf32, #tpu.memory_space<vmem>>, %arg8: memref<1x64xf32, #tpu.memory_space<vmem>>, %arg9: memref<1x64xf32, #tpu.memory_space<vmem>>, %arg10: memref<32x64xf32, #tpu.memory_space<vmem>>) attributes {dimension_semantics = [#tpu.dimension_semantics<parallel>], iteration_bounds = array<i64: 1>, scalar_prefetch = 0 : i64, scratch_operands = 0 : i64, tpu.core_type = #tpu.core_type<tc>, window_params = [{transform_indices = @transform_0, window_bounds = array<i64: 32, 64>}, {pipeline_mode = #tpu.pipeline_mode<synchronous>, transform_indices = @transform_1, window_bounds = array<i64: 1, 64>}, {pipeline_mode = #tpu.pipeline_mode<synchronous>, transform_indices = @transform_2, window_bounds = array<i64: 1, 64>}, {pipeline_mode = #tpu.pipeline_mode<synchronous>, transform_indices = @transform_3, window_bounds = array<i64: 64, 128>}, {pipeline_mode = #tpu.pipeline_mode<synchronous>, transform_indices = @transform_4, window_bounds = array<i64: 1, 128>}, {pipeline_mode = #tpu.pipeline_mode<synchronous>, transform_indices = @transform_5, window_bounds = array<i64: 128, 64>}, {pipeline_mode = #tpu.pipeline_mode<synchronous>, transform_indices = @transform_6, window_bounds = array<i64: 1, 64>}, {pipeline_mode = #tpu.pipeline_mode<synchronous>, transform_indices = @transform_7, window_bounds = array<i64: 1, 64>}, {pipeline_mode = #tpu.pipeline_mode<synchronous>, transform_indices = @transform_8, window_bounds = array<i64: 1, 64>}, {transform_indices = @transform_9, window_bounds = array<i64: 32, 64>}]} {
    %c0 = arith.constant 0 : index
    %c0_0 = arith.constant 0 : index
    %0 = vector.load %arg1[%c0, %c0_0] : memref<32x64xf32, #tpu.memory_space<vmem>>, vector<32x64xf32>
    %c0_1 = arith.constant 0 : index
    %c0_2 = arith.constant 0 : index
    %1 = vector.load %arg2[%c0_1, %c0_2] : memref<1x64xf32, #tpu.memory_space<vmem>>, vector<1x64xf32>
    %c0_3 = arith.constant 0 : index
    %c0_4 = arith.constant 0 : index
    %2 = vector.load %arg3[%c0_3, %c0_4] : memref<1x64xf32, #tpu.memory_space<vmem>>, vector<1x64xf32>
    %cst = arith.constant dense<0.000000e+00> : vector<32xf32>
    %3 = vector.multi_reduction <add>, %0, %cst [1] : vector<32x64xf32> to vector<32xf32>
    %4 = vector.shape_cast %3 : vector<32xf32> to vector<32x1xf32>
    %cst_5 = arith.constant 6.400000e+01 : f32
    %5 = vector.broadcast %cst_5 : f32 to vector<32x1xf32>
    %6 = arith.divf %4, %5 : vector<32x1xf32>
    %7 = vector.broadcast %6 : vector<32x1xf32> to vector<32x64xf32>
    %8 = arith.subf %0, %7 : vector<32x64xf32>
    %9 = arith.mulf %8, %8 : vector<32x64xf32>
    %cst_6 = arith.constant dense<0.000000e+00> : vector<32xf32>
    %10 = vector.multi_reduction <add>, %9, %cst_6 [1] : vector<32x64xf32> to vector<32xf32>
    %11 = vector.shape_cast %10 : vector<32xf32> to vector<32x1xf32>
    %cst_7 = arith.constant 6.400000e+01 : f32
    %12 = vector.broadcast %cst_7 : f32 to vector<32x1xf32>
    %13 = arith.divf %11, %12 : vector<32x1xf32>
    %cst_8 = arith.constant 9.99999974E-6 : f32
    %14 = vector.broadcast %cst_8 : f32 to vector<32x1xf32>
    %15 = arith.addf %13, %14 : vector<32x1xf32>
    %16 = math.rsqrt %15 : vector<32x1xf32>
    %17 = vector.broadcast %16 : vector<32x1xf32> to vector<32x64xf32>
    %18 = arith.mulf %8, %17 : vector<32x64xf32>
    %19 = vector.broadcast %1 : vector<1x64xf32> to vector<32x64xf32>
    %20 = arith.mulf %18, %19 : vector<32x64xf32>
    %21 = vector.broadcast %2 : vector<1x64xf32> to vector<32x64xf32>
    %22 = arith.addf %20, %21 : vector<32x64xf32>
    %23 = arith.truncf %22 : vector<32x64xf32> to vector<32x64xbf16>
    %c0_9 = arith.constant 0 : index
    %c0_10 = arith.constant 0 : index
    %24 = vector.load %arg4[%c0_9, %c0_10] : memref<64x128xbf16, #tpu.memory_space<vmem>>, vector<64x128xbf16>
    %cst_11 = arith.constant dense<0.000000e+00> : vector<32x128xf32>
    %25 = tpu.matmul %23, %24, %cst_11 {dimension_numbers = #tpu.dot_dimension_numbers<[1], [0], [0], [1], [0, 0, 1, 1], [], []>} : vector<32x64xbf16>, vector<64x128xbf16>, vector<32x128xf32> -> vector<32x128xf32>
    %c0_12 = arith.constant 0 : index
    %c0_13 = arith.constant 0 : index
    %26 = vector.load %arg5[%c0_12, %c0_13] : memref<1x128xf32, #tpu.memory_space<vmem>>, vector<1x128xf32>
    %27 = vector.broadcast %26 : vector<1x128xf32> to vector<32x128xf32>
    %28 = arith.addf %25, %27 : vector<32x128xf32>
    %29 = arith.negf %28 : vector<32x128xf32>
    %30 = math.exp %29 : vector<32x128xf32>
    %cst_14 = arith.constant 1.000000e+00 : f32
    %31 = vector.broadcast %cst_14 : f32 to vector<32x128xf32>
    %32 = arith.addf %31, %30 : vector<32x128xf32>
    %33 = arith.divf %31, %32 : vector<32x128xf32>
    %34 = arith.mulf %28, %33 : vector<32x128xf32>
    %35 = arith.truncf %34 : vector<32x128xf32> to vector<32x128xbf16>
    %c0_15 = arith.constant 0 : index
    %c0_16 = arith.constant 0 : index
    %36 = vector.load %arg6[%c0_15, %c0_16] : memref<128x64xbf16, #tpu.memory_space<vmem>>, vector<128x64xbf16>
    %cst_17 = arith.constant dense<0.000000e+00> : vector<32x64xf32>
    %37 = tpu.matmul %35, %36, %cst_17 {dimension_numbers = #tpu.dot_dimension_numbers<[1], [0], [0], [1], [0, 0, 1, 1], [], []>} : vector<32x128xbf16>, vector<128x64xbf16>, vector<32x64xf32> -> vector<32x64xf32>
    %c0_18 = arith.constant 0 : index
    %c0_19 = arith.constant 0 : index
    %38 = vector.load %arg7[%c0_18, %c0_19] : memref<1x64xf32, #tpu.memory_space<vmem>>, vector<1x64xf32>
    %39 = vector.broadcast %38 : vector<1x64xf32> to vector<32x64xf32>
    %40 = arith.addf %37, %39 : vector<32x64xf32>
    %cst_20 = arith.constant 5.000000e-01 : f32
    %41 = vector.broadcast %cst_20 : f32 to vector<32x64xf32>
    %42 = arith.mulf %40, %41 : vector<32x64xf32>
    %43 = arith.addf %42, %0 : vector<32x64xf32>
    %c0_21 = arith.constant 0 : index
    %c0_22 = arith.constant 0 : index
    %44 = vector.load %arg8[%c0_21, %c0_22] : memref<1x64xf32, #tpu.memory_space<vmem>>, vector<1x64xf32>
    %c0_23 = arith.constant 0 : index
    %c0_24 = arith.constant 0 : index
    %45 = vector.load %arg9[%c0_23, %c0_24] : memref<1x64xf32, #tpu.memory_space<vmem>>, vector<1x64xf32>
    %cst_25 = arith.constant dense<0.000000e+00> : vector<32xf32>
    %46 = vector.multi_reduction <add>, %43, %cst_25 [1] : vector<32x64xf32> to vector<32xf32>
    %47 = vector.shape_cast %46 : vector<32xf32> to vector<32x1xf32>
    %cst_26 = arith.constant 6.400000e+01 : f32
    %48 = vector.broadcast %cst_26 : f32 to vector<32x1xf32>
    %49 = arith.divf %47, %48 : vector<32x1xf32>
    %50 = vector.broadcast %49 : vector<32x1xf32> to vector<32x64xf32>
    %51 = arith.subf %43, %50 : vector<32x64xf32>
    %52 = arith.mulf %51, %51 : vector<32x64xf32>
    %cst_27 = arith.constant dense<0.000000e+00> : vector<32xf32>
    %53 = vector.multi_reduction <add>, %52, %cst_27 [1] : vector<32x64xf32> to vector<32xf32>
    %54 = vector.shape_cast %53 : vector<32xf32> to vector<32x1xf32>
    %cst_28 = arith.constant 6.400000e+01 : f32
    %55 = vector.broadcast %cst_28 : f32 to vector<32x1xf32>
    %56 = arith.divf %54, %55 : vector<32x1xf32>
    %cst_29 = arith.constant 9.99999974E-6 : f32
    %57 = vector.broadcast %cst_29 : f32 to vector<32x1xf32>
    %58 = arith.addf %56, %57 : vector<32x1xf32>
    %59 = math.rsqrt %58 : vector<32x1xf32>
    %60 = vector.broadcast %59 : vector<32x1xf32> to vector<32x64xf32>
    %61 = arith.mulf %51, %60 : vector<32x64xf32>
    %62 = vector.broadcast %44 : vector<1x64xf32> to vector<32x64xf32>
    %63 = arith.mulf %61, %62 : vector<32x64xf32>
    %64 = vector.broadcast %45 : vector<1x64xf32> to vector<32x64xf32>
    %65 = arith.addf %63, %64 : vector<32x64xf32>
    %c0_30 = arith.constant 0 : index
    %c0_31 = arith.constant 0 : index
    %66 = vector.load %arg10[%c0_30, %c0_31] : memref<32x64xf32, #tpu.memory_space<vmem>>, vector<32x64xf32>
    tpu.vector_store %arg10[%c0_30, %c0_31], %65 {strides = array<i32>} : memref<32x64xf32, #tpu.memory_space<vmem>>, vector<32x64xf32>,
    return
  }
  func.func @transform_0(%arg0: i32) -> (i32, i32) {
    %c0_i32 = arith.constant 0 : i32
    %c0_i32_0 = arith.constant 0 : i32
    return %arg0, %c0_i32 : i32, i32
  }
  func.func @transform_1(%arg0: i32) -> (i32, i32) {
    %c0_i32 = arith.constant 0 : i32
    %c0_i32_0 = arith.constant 0 : i32
    %c0_i32_1 = arith.constant 0 : i32
    return %c0_i32, %c0_i32_0 : i32, i32
  }
  func.func @transform_2(%arg0: i32) -> (i32, i32) {
    %c0_i32 = arith.constant 0 : i32
    %c0_i32_0 = arith.constant 0 : i32
    %c0_i32_1 = arith.constant 0 : i32
    return %c0_i32, %c0_i32_0 : i32, i32
  }
  func.func @transform_3(%arg0: i32) -> (i32, i32) {
    %c0_i32 = arith.constant 0 : i32
    %c0_i32_0 = arith.constant 0 : i32
    %c0_i32_1 = arith.constant 0 : i32
    return %c0_i32, %c0_i32_0 : i32, i32
  }
  func.func @transform_4(%arg0: i32) -> (i32, i32) {
    %c0_i32 = arith.constant 0 : i32
    %c0_i32_0 = arith.constant 0 : i32
    %c0_i32_1 = arith.constant 0 : i32
    return %c0_i32, %c0_i32_0 : i32, i32
  }
  func.func @transform_5(%arg0: i32) -> (i32, i32) {
    %c0_i32 = arith.constant 0 : i32
    %c0_i32_0 = arith.constant 0 : i32
    %c0_i32_1 = arith.constant 0 : i32
    return %c0_i32, %c0_i32_0 : i32, i32
  }
  func.func @transform_6(%arg0: i32) -> (i32, i32) {
    %c0_i32 = arith.constant 0 : i32
    %c0_i32_0 = arith.constant 0 : i32
    %c0_i32_1 = arith.constant 0 : i32
    return %c0_i32, %c0_i32_0 : i32, i32
  }
  func.func @transform_7(%arg0: i32) -> (i32, i32) {
    %c0_i32 = arith.constant 0 : i32
    %c0_i32_0 = arith.constant 0 : i32
    %c0_i32_1 = arith.constant 0 : i32
    return %c0_i32, %c0_i32_0 : i32, i32
  }
  func.func @transform_8(%arg0: i32) -> (i32, i32) {
    %c0_i32 = arith.constant 0 : i32
    %c0_i32_0 = arith.constant 0 : i32
    %c0_i32_1 = arith.constant 0 : i32
    return %c0_i32, %c0_i32_0 : i32, i32
  }
  func.func @transform_9(%arg0: i32) -> (i32, i32) {
    %c0_i32 = arith.constant 0 : i32
    %c0_i32_0 = arith.constant 0 : i32
    return %arg0, %c0_i32 : i32, i32
  }
}

module attributes {stable_mosaic.version = 11 : i64} {
  func.func @_ln_kernel(%arg0: i32, %arg1: memref<32x64xf32, #tpu.memory_space<vmem>>, %arg2: memref<1x64xf32, #tpu.memory_space<vmem>>, %arg3: memref<1x64xf32, #tpu.memory_space<vmem>>, %arg4: memref<32x64xf32, #tpu.memory_space<vmem>>) attributes {dimension_semantics = [#tpu.dimension_semantics<parallel>], iteration_bounds = array<i64: 1>, scalar_prefetch = 0 : i64, scratch_operands = 0 : i64, tpu.core_type = #tpu.core_type<tc>, window_params = [{transform_indices = @transform_0, window_bounds = array<i64: 32, 64>}, {pipeline_mode = #tpu.pipeline_mode<synchronous>, transform_indices = @transform_1, window_bounds = array<i64: 1, 64>}, {pipeline_mode = #tpu.pipeline_mode<synchronous>, transform_indices = @transform_2, window_bounds = array<i64: 1, 64>}, {transform_indices = @transform_3, window_bounds = array<i64: 32, 64>}]} {
    %c0 = arith.constant 0 : index
    %c0_0 = arith.constant 0 : index
    %0 = vector.load %arg1[%c0, %c0_0] : memref<32x64xf32, #tpu.memory_space<vmem>>, vector<32x64xf32>
    %c0_1 = arith.constant 0 : index
    %c0_2 = arith.constant 0 : index
    %1 = vector.load %arg2[%c0_1, %c0_2] : memref<1x64xf32, #tpu.memory_space<vmem>>, vector<1x64xf32>
    %c0_3 = arith.constant 0 : index
    %c0_4 = arith.constant 0 : index
    %2 = vector.load %arg3[%c0_3, %c0_4] : memref<1x64xf32, #tpu.memory_space<vmem>>, vector<1x64xf32>
    %cst = arith.constant dense<0.000000e+00> : vector<32xf32>
    %3 = vector.multi_reduction <add>, %0, %cst [1] : vector<32x64xf32> to vector<32xf32>
    %4 = vector.shape_cast %3 : vector<32xf32> to vector<32x1xf32>
    %cst_5 = arith.constant 6.400000e+01 : f32
    %5 = vector.broadcast %cst_5 : f32 to vector<32x1xf32>
    %6 = arith.divf %4, %5 : vector<32x1xf32>
    %7 = vector.broadcast %6 : vector<32x1xf32> to vector<32x64xf32>
    %8 = arith.subf %0, %7 : vector<32x64xf32>
    %9 = arith.mulf %8, %8 : vector<32x64xf32>
    %cst_6 = arith.constant dense<0.000000e+00> : vector<32xf32>
    %10 = vector.multi_reduction <add>, %9, %cst_6 [1] : vector<32x64xf32> to vector<32xf32>
    %11 = vector.shape_cast %10 : vector<32xf32> to vector<32x1xf32>
    %cst_7 = arith.constant 6.400000e+01 : f32
    %12 = vector.broadcast %cst_7 : f32 to vector<32x1xf32>
    %13 = arith.divf %11, %12 : vector<32x1xf32>
    %cst_8 = arith.constant 9.99999974E-6 : f32
    %14 = vector.broadcast %cst_8 : f32 to vector<32x1xf32>
    %15 = arith.addf %13, %14 : vector<32x1xf32>
    %16 = math.rsqrt %15 : vector<32x1xf32>
    %17 = vector.broadcast %16 : vector<32x1xf32> to vector<32x64xf32>
    %18 = arith.mulf %8, %17 : vector<32x64xf32>
    %19 = vector.broadcast %1 : vector<1x64xf32> to vector<32x64xf32>
    %20 = arith.mulf %18, %19 : vector<32x64xf32>
    %21 = vector.broadcast %2 : vector<1x64xf32> to vector<32x64xf32>
    %22 = arith.addf %20, %21 : vector<32x64xf32>
    %c0_9 = arith.constant 0 : index
    %c0_10 = arith.constant 0 : index
    %23 = vector.load %arg4[%c0_9, %c0_10] : memref<32x64xf32, #tpu.memory_space<vmem>>, vector<32x64xf32>
    tpu.vector_store %arg4[%c0_9, %c0_10], %22 {strides = array<i32>} : memref<32x64xf32, #tpu.memory_space<vmem>>, vector<32x64xf32>,
    return
  }
  func.func @transform_0(%arg0: i32) -> (i32, i32) {
    %c0_i32 = arith.constant 0 : i32
    %c0_i32_0 = arith.constant 0 : i32
    return %arg0, %c0_i32 : i32, i32
  }
  func.func @transform_1(%arg0: i32) -> (i32, i32) {
    %c0_i32 = arith.constant 0 : i32
    %c0_i32_0 = arith.constant 0 : i32
    %c0_i32_1 = arith.constant 0 : i32
    return %c0_i32, %c0_i32_0 : i32, i32
  }
  func.func @transform_2(%arg0: i32) -> (i32, i32) {
    %c0_i32 = arith.constant 0 : i32
    %c0_i32_0 = arith.constant 0 : i32
    %c0_i32_1 = arith.constant 0 : i32
    return %c0_i32, %c0_i32_0 : i32, i32
  }
  func.func @transform_3(%arg0: i32) -> (i32, i32) {
    %c0_i32 = arith.constant 0 : i32
    %c0_i32_0 = arith.constant 0 : i32
    return %arg0, %c0_i32 : i32, i32
  }
}

</mosaic_0001>

<llo_original>
// kernel: encoder_forward.12
$region0: #{encoder_forward.12}
  #allocation0 [shape = 'u32[]', space=smem, size = 0x4, offset = 0x4, fixed_abs, tag = 'smem constant byte address 0x4 - core index']
  #allocation1 [shape = 'u32[144,128]{1,0:T(1,128)}', space=vmem, size = 0x12000, scoped, tag = 'internal scratch']
  #allocation2 [shape = 'f32[128,128]{1,0:T(8,128)}', space=vmem, size = 0x10000, scoped, tag = 'scratch operand']
  %s0 = inlined_call_operand.vmem [shape: f32[128,64], index: 0, kind: input, shape index: {}]
  %s1 = inlined_call_operand.vmem [shape: bf16[64,128], index: 1, kind: input, shape index: {}]
  %s2 = inlined_call_operand.vmem [shape: bf16[128,128], index: 2, kind: output, shape index: {}]
  %s3 = sld [smem:[#allocation0]]
  $region26: #{encoder_forward.12} parent=0
    _
  %s5 = ssub.s32 1, %s3
  %s6 = scalar_select 0, %s5, %s3
  // Predicated region
  $region2: #{encoder_forward.12} parent=0 // pred_check
    _
  $region3: #{encoder_forward.12} parent=0 // pred_check_branch
    %8 = sbr.rel (0) target = $region5
  $region4: #{encoder_forward.12} parent=0 // pred_region
    _
  $region5: #{encoder_forward.12} parent=0 // pred_fallthru
    _
  // Predicated region
  $region6: #{encoder_forward.12} parent=0 // pred_check
    _
  $region7: #{encoder_forward.12} parent=0 // pred_check_branch
    %10 = sbr.rel (0) target = $region9
  $region8: #{encoder_forward.12} parent=0 // pred_region
    _
  $region9: #{encoder_forward.12} parent=0 // pred_fallthru
    _
  %p12 = scmp.eq.s32.totalorder 0, 0
  // Predicated region
  $region10: #{encoder_forward.12} parent=0 // pred_check
    %p13 = pneg %p12
  $region11: #{encoder_forward.12} parent=0 // pred_check_branch
    %15 = sbr.rel (%p13) target = $region13
  $region12: #{encoder_forward.12} parent=0 // pred_region
    %16 = vst [vmem:[#allocation2] sm:$0xff] 0.0
    %17 = vst [vmem:[#allocation2 + $0x8] sm:$0xff] 0.0
    %18 = vst [vmem:[#allocation2 + $0x10] sm:$0xff] 0.0
    %19 = vst [vmem:[#allocation2 + $0x18] sm:$0xff] 0.0
    %20 = vst [vmem:[#allocation2 + $0x20] sm:$0xff] 0.0
    %21 = vst [vmem:[#allocation2 + $0x28] sm:$0xff] 0.0
    %22 = vst [vmem:[#allocation2 + $0x30] sm:$0xff] 0.0
    %23 = vst [vmem:[#allocation2 + $0x38] sm:$0xff] 0.0
    %24 = vst [vmem:[#allocation2 + $0x40] sm:$0xff] 0.0
    %25 = vst [vmem:[#allocation2 + $0x48] sm:$0xff] 0.0
    %26 = vst [vmem:[#allocation2 + $0x50] sm:$0xff] 0.0
    %27 = vst [vmem:[#allocation2 + $0x58] sm:$0xff] 0.0
    %28 = vst [vmem:[#allocation2 + $0x60] sm:$0xff] 0.0
    %29 = vst [vmem:[#allocation2 + $0x68] sm:$0xff] 0.0
    %30 = vst [vmem:[#allocation2 + $0x70] sm:$0xff] 0.0
    %31 = vst [vmem:[#allocation2 + $0x78] sm:$0xff] 0.0
  $region13: #{encoder_forward.12} parent=0 // pred_fallthru
    _
  %v32 = vld [vmem:[#allocation2] sm:$0xff]
  %v33 = vld [vmem:[#allocation2 + $0x8] sm:$0xff]
  %v34 = vld [vmem:[#allocation2 + $0x10] sm:$0xff]
  %v35 = vld [vmem:[#allocation2 + $0x18] sm:$0xff]
  %v36 = vld [vmem:[#allocation2 + $0x20] sm:$0xff]
  %v37 = vld [vmem:[#allocation2 + $0x28] sm:$0xff]
  %v38 = vld [vmem:[#allocation2 + $0x30] sm:$0xff]
  %v39 = vld [vmem:[#allocation2 + $0x38] sm:$0xff]
  %v40 = vld [vmem:[#allocation2 + $0x40] sm:$0xff]
  %v41 = vld [vmem:[#allocation2 + $0x48] sm:$0xff]
  %v42 = vld [vmem:[#allocation2 + $0x50] sm:$0xff]
  %v43 = vld [vmem:[#allocation2 + $0x58] sm:$0xff]
  %v44 = vld [vmem:[#allocation2 + $0x60] sm:$0xff]
  %v45 = vld [vmem:[#allocation2 + $0x68] sm:$0xff]
  %v46 = vld [vmem:[#allocation2 + $0x70] sm:$0xff]
  %v47 = vld [vmem:[#allocation2 + $0x78] sm:$0xff]
  %v48 = vld [vmem:[%s0] sm:$0xff]
  %v49 = vld [vmem:[%s0 + $0x8] sm:$0xff]
  %v50 = vld [vmem:[%s0 + $0x10] sm:$0xff]
  %v51 = vld [vmem:[%s0 + $0x18] sm:$0xff]
  %v52 = vld [vmem:[%s0 + $0x20] sm:$0xff]
  %v53 = vld [vmem:[%s0 + $0x28] sm:$0xff]
  %v54 = vld [vmem:[%s0 + $0x30] sm:$0xff]
  %v55 = vld [vmem:[%s0 + $0x38] sm:$0xff]
  %v56 = vld [vmem:[%s0 + $0x40] sm:$0xff]
  %v57 = vld [vmem:[%s0 + $0x48] sm:$0xff]
  %v58 = vld [vmem:[%s0 + $0x50] sm:$0xff]
  %v59 = vld [vmem:[%s0 + $0x58] sm:$0xff]
  %v60 = vld [vmem:[%s0 + $0x60] sm:$0xff]
  %v61 = vld [vmem:[%s0 + $0x68] sm:$0xff]
  %v62 = vld [vmem:[%s0 + $0x70] sm:$0xff]
  %v63 = vld [vmem:[%s0 + $0x78] sm:$0xff]
  %v64 = vpack.c.bf16 %v49, %v48
  %v65 = vpack.c.bf16 %v51, %v50
  %v66 = vpack.c.bf16 %v53, %v52
  %v67 = vpack.c.bf16 %v55, %v54
  %v68 = vpack.c.bf16 %v57, %v56
  %v69 = vpack.c.bf16 %v59, %v58
  %v70 = vpack.c.bf16 %v61, %v60
  %v71 = vpack.c.bf16 %v63, %v62
  %v72 = vld [vmem:[%s1] sm:$0xf]
  %v73 = vld [vmem:[%s1 + $0x4] sm:$0xf]
  %v74 = vld [vmem:[%s1 + $0x8] sm:$0xf]
  %v75 = vld [vmem:[%s1 + $0xc] sm:$0xf]
  %v76 = vld [vmem:[%s1 + $0x10] sm:$0xf]
  %v77 = vld [vmem:[%s1 + $0x14] sm:$0xf]
  %v78 = vld [vmem:[%s1 + $0x18] sm:$0xf]
  %v79 = vld [vmem:[%s1 + $0x1c] sm:$0xf]
  %v88 = vunpack.c.l.b16 %v72
  %v89 = vunpack.c.l.b16 %v73
  %v90 = vunpack.c.l.b16 %v74
  %v91 = vunpack.c.l.b16 %v75
  %v92 = vunpack.c.l.b16 %v76
  %v93 = vunpack.c.l.b16 %v77
  %v94 = vunpack.c.l.b16 %v78
  %v95 = vunpack.c.l.b16 %v79
  %v96 = vpack.c.b16 %v89, %v88
  %v97 = vpack.c.b16 %v91, %v90
  %v98 = vpack.c.b16 %v93, %v92
  %v99 = vpack.c.b16 %v95, %v94
  %vm104 = vcmask 523264
  %v106 = vsel %vm104, %v64, 0
  %v109 = vsel %vm104, %v65, 0
  %v112 = vsel %vm104, %v66, 0
  %v115 = vsel %vm104, %v67, 0
  %v118 = vsel %vm104, %v68, 0
  %v121 = vsel %vm104, %v69, 0
  %v124 = vsel %vm104, %v70, 0
  %v127 = vsel %vm104, %v71, 0
  %129 = vmatprep.subr.bf16.mxu0 0
  %130 = vmatpush1.bf16.msra.mxu0 %v96
  %131 = vmatprep.subr.bf16.mxu0 0
  %132 = vmatpush1.bf16.msra.mxu0 %v97
  %133 = vmatprep.subr.bf16.mxu0 0
  %134 = vmatpush1.bf16.msra.mxu0 %v98
  %135 = vmatprep.subr.bf16.mxu0 0
  %136 = vmatpush1.bf16.msra.mxu0 %v99
  %137 = vmatprep.subr.bf16.mxu0 0
  %138 = vmatpush1.bf16.msra.mxu0 0
  %139 = vmatprep.subr.bf16.mxu0 0
  %140 = vmatpush1.bf16.msra.mxu0 0
  %141 = vmatprep.subr.bf16.mxu0 0
  %142 = vmatpush1.bf16.msra.mxu0 0
  %143 = vmatprep.subr.bf16.mxu0 0
  %144 = vmatpush1.bf16.msra.mxu0 0
  %145 = vmatprep.subr.bf16.mxu0 0
  %146 = vmatpush1.bf16.msra.mxu0 0
  %147 = vmatprep.subr.bf16.mxu0 0
  %148 = vmatpush1.bf16.msra.mxu0 0
  %149 = vmatprep.subr.bf16.mxu0 0
  %150 = vmatpush1.bf16.msra.mxu0 0
  %151 = vmatprep.subr.bf16.mxu0 0
  %152 = vmatpush1.bf16.msra.mxu0 0
  %153 = vmatprep.subr.bf16.mxu0 0
  %154 = vmatpush1.bf16.msra.mxu0 0
  %155 = vmatprep.subr.bf16.mxu0 0
  %156 = vmatpush1.bf16.msra.mxu0 0
  %157 = vmatprep.subr.bf16.mxu0 0
  %158 = vmatpush1.bf16.msra.mxu0 0
  %159 = vmatprep.subr.bf16.mxu0 0
  %160 = vmatpush1.bf16.msra.mxu0 0
  %161 = vmatprep.mubr.bf16.mxu0 0
  %162 = vmatmul.mubr.bf16.gmra.mrb[0].mxu0 %v106
  %v163 = vpop.f32.mrb[0].mxu0
  %v164 = vadd.f32 0.0, %v163
  %v165 = vpop.f32.mrb[0].mxu0
  %v166 = vpop.f32.mrb[0].mxu0
  %v167 = vadd.f32 0.0, %v166
  %v168 = vpop.f32.mrb[0].mxu0
  %169 = vmatprep.mubr.bf16.mxu0 0
  %170 = vmatmul.mubr.bf16.gmra.mrb[0].mxu0 %v109
  %v171 = vpop.f32.mrb[0].mxu0
  %v172 = vadd.f32 0.0, %v171
  %v173 = vpop.f32.mrb[0].mxu0
  %v174 = vpop.f32.mrb[0].mxu0
  %v175 = vadd.f32 0.0, %v174
  %v176 = vpop.f32.mrb[0].mxu0
  %177 = vmatprep.mubr.bf16.mxu0 0
  %178 = vmatmul.mubr.bf16.gmra.mrb[0].mxu0 %v112
  %v179 = vpop.f32.mrb[0].mxu0
  %v180 = vadd.f32 0.0, %v179
  %v181 = vpop.f32.mrb[0].mxu0
  %v182 = vpop.f32.mrb[0].mxu0
  %v183 = vadd.f32 0.0, %v182
  %v184 = vpop.f32.mrb[0].mxu0
  %185 = vmatprep.mubr.bf16.mxu0 0
  %186 = vmatmul.mubr.bf16.gmra.mrb[0].mxu0 %v115
  %v187 = vpop.f32.mrb[0].mxu0
  %v188 = vadd.f32 0.0, %v187
  %v189 = vpop.f32.mrb[0].mxu0
  %v190 = vpop.f32.mrb[0].mxu0
  %v191 = vadd.f32 0.0, %v190
  %v192 = vpop.f32.mrb[0].mxu0
  %193 = vmatprep.mubr.bf16.mxu0 0
  %194 = vmatmul.mubr.bf16.gmra.mrb[0].mxu0 %v118
  %v195 = vpop.f32.mrb[0].mxu0
  %v196 = vadd.f32 0.0, %v195
  %v197 = vpop.f32.mrb[0].mxu0
  %v198 = vpop.f32.mrb[0].mxu0
  %v199 = vadd.f32 0.0, %v198
  %v200 = vpop.f32.mrb[0].mxu0
  %201 = vmatprep.mubr.bf16.mxu0 0
  %202 = vmatmul.mubr.bf16.gmra.mrb[0].mxu0 %v121
  %v203 = vpop.f32.mrb[0].mxu0
  %v204 = vadd.f32 0.0, %v203
  %v205 = vpop.f32.mrb[0].mxu0
  %v206 = vpop.f32.mrb[0].mxu0
  %v207 = vadd.f32 0.0, %v206
  %v208 = vpop.f32.mrb[0].mxu0
  %209 = vmatprep.mubr.bf16.mxu0 0
  %210 = vmatmul.mubr.bf16.gmra.mrb[0].mxu0 %v124
  %v211 = vpop.f32.mrb[0].mxu0
  %v212 = vadd.f32 0.0, %v211
  %v213 = vpop.f32.mrb[0].mxu0
  %v214 = vpop.f32.mrb[0].mxu0
  %v215 = vadd.f32 0.0, %v214
  %v216 = vpop.f32.mrb[0].mxu0
  %217 = vmatprep.mubr.bf16.mxu0 0
  %218 = vmatmul.mubr.bf16.gmra.mrb[0].mxu0 %v127
  %v219 = vpop.f32.mrb[0].mxu0
  %v220 = vadd.f32 0.0, %v219
  %v221 = vpop.f32.mrb[0].mxu0
  %v222 = vpop.f32.mrb[0].mxu0
  %v223 = vadd.f32 0.0, %v222
  %v224 = vpop.f32.mrb[0].mxu0
  %225 = vdwg.mxu0
  %v226 = vadd.f32 %v32, %v164
  %v227 = vadd.f32 %v33, %v167
  %v228 = vadd.f32 %v34, %v172
  %v229 = vadd.f32 %v35, %v175
  %v230 = vadd.f32 %v36, %v180
  %v231 = vadd.f32 %v37, %v183
  %v232 = vadd.f32 %v38, %v188
  %v233 = vadd.f32 %v39, %v191
  %v234 = vadd.f32 %v40, %v196
  %v235 = vadd.f32 %v41, %v199
  %v236 = vadd.f32 %v42, %v204
  %v237 = vadd.f32 %v43, %v207
  %v238 = vadd.f32 %v44, %v212
  %v239 = vadd.f32 %v45, %v215
  %v240 = vadd.f32 %v46, %v220
  %v241 = vadd.f32 %v47, %v223
  %242 = vst [vmem:[#allocation2] sm:$0xff] %v226
  %243 = vst [vmem:[#allocation2 + $0x8] sm:$0xff] %v227
  %244 = vst [vmem:[#allocation2 + $0x10] sm:$0xff] %v228
  %245 = vst [vmem:[#allocation2 + $0x18] sm:$0xff] %v229
  %246 = vst [vmem:[#allocation2 + $0x20] sm:$0xff] %v230
  %247 = vst [vmem:[#allocation2 + $0x28] sm:$0xff] %v231
  %248 = vst [vmem:[#allocation2 + $0x30] sm:$0xff] %v232
  %249 = vst [vmem:[#allocation2 + $0x38] sm:$0xff] %v233
  %250 = vst [vmem:[#allocation2 + $0x40] sm:$0xff] %v234
  %251 = vst [vmem:[#allocation2 + $0x48] sm:$0xff] %v235
  %252 = vst [vmem:[#allocation2 + $0x50] sm:$0xff] %v236
  %253 = vst [vmem:[#allocation2 + $0x58] sm:$0xff] %v237
  %254 = vst [vmem:[#allocation2 + $0x60] sm:$0xff] %v238
  %255 = vst [vmem:[#allocation2 + $0x68] sm:$0xff] %v239
  %256 = vst [vmem:[#allocation2 + $0x70] sm:$0xff] %v240
  %257 = vst [vmem:[#allocation2 + $0x78] sm:$0xff] %v241
  // Predicated region
  $region14: #{encoder_forward.12} parent=0 // pred_check
    %p258 = pneg %p12
  $region15: #{encoder_forward.12} parent=0 // pred_check_branch
    %260 = sbr.rel (%p258) target = $region17
  $region16: #{encoder_forward.12} parent=0 // pred_region
    %v261 = vld [vmem:[#allocation2] sm:$0xff]
    %v262 = vld [vmem:[#allocation2 + $0x8] sm:$0xff]
    %v263 = vld [vmem:[#allocation2 + $0x10] sm:$0xff]
    %v264 = vld [vmem:[#allocation2 + $0x18] sm:$0xff]
    %v265 = vld [vmem:[#allocation2 + $0x20] sm:$0xff]
    %v266 = vld [vmem:[#allocation2 + $0x28] sm:$0xff]
    %v267 = vld [vmem:[#allocation2 + $0x30] sm:$0xff]
    %v268 = vld [vmem:[#allocation2 + $0x38] sm:$0xff]
    %v269 = vld [vmem:[#allocation2 + $0x40] sm:$0xff]
    %v270 = vld [vmem:[#allocation2 + $0x48] sm:$0xff]
    %v271 = vld [vmem:[#allocation2 + $0x50] sm:$0xff]
    %v272 = vld [vmem:[#allocation2 + $0x58] sm:$0xff]
    %v273 = vld [vmem:[#allocation2 + $0x60] sm:$0xff]
    %v274 = vld [vmem:[#allocation2 + $0x68] sm:$0xff]
    %v275 = vld [vmem:[#allocation2 + $0x70] sm:$0xff]
    %v276 = vld [vmem:[#allocation2 + $0x78] sm:$0xff]
    %v277 = vpack.c.bf16 %v262, %v261
    %v278 = vpack.c.bf16 %v264, %v263
    %v279 = vpack.c.bf16 %v266, %v265
    %v280 = vpack.c.bf16 %v268, %v267
    %v281 = vpack.c.bf16 %v270, %v269
    %v282 = vpack.c.bf16 %v272, %v271
    %v283 = vpack.c.bf16 %v274, %v273
    %v284 = vpack.c.bf16 %v276, %v275
    %v293 = vunpack.c.l.b16 %v277
    %v294 = vunpack.c.h.b16 %v277
    %v295 = vunpack.c.l.b16 %v278
    %v296 = vunpack.c.h.b16 %v278
    %v297 = vunpack.c.l.b16 %v279
    %v298 = vunpack.c.h.b16 %v279
    %v299 = vunpack.c.l.b16 %v280
    %v300 = vunpack.c.h.b16 %v280
    %v301 = vunpack.c.l.b16 %v281
    %v302 = vunpack.c.h.b16 %v281
    %v303 = vunpack.c.l.b16 %v282
    %v304 = vunpack.c.h.b16 %v282
    %v305 = vunpack.c.l.b16 %v283
    %v306 = vunpack.c.h.b16 %v283
    %v307 = vunpack.c.l.b16 %v284
    %v308 = vunpack.c.h.b16 %v284
    %v309 = vpack.c.b16 %v293, %v293
    %v310 = vpack.c.b16 %v294, %v294
    %v311 = vpack.c.b16 %v295, %v295
    %v312 = vpack.c.b16 %v296, %v296
    %v313 = vpack.c.b16 %v297, %v297
    %v314 = vpack.c.b16 %v298, %v298
    %v315 = vpack.c.b16 %v299, %v299
    %v316 = vpack.c.b16 %v300, %v300
    %v317 = vpack.c.b16 %v301, %v301
    %v318 = vpack.c.b16 %v302, %v302
    %v319 = vpack.c.b16 %v303, %v303
    %v320 = vpack.c.b16 %v304, %v304
    %v321 = vpack.c.b16 %v305, %v305
    %v322 = vpack.c.b16 %v306, %v306
    %v323 = vpack.c.b16 %v307, %v307
    %v324 = vpack.c.b16 %v308, %v308
    %341 = vst [vmem:[%s2] sm:$0xf] %v309
    %342 = vst [vmem:[%s2 + $0x4] sm:$0xf] %v310
    %343 = vst [vmem:[%s2 + $0x8] sm:$0xf] %v311
    %344 = vst [vmem:[%s2 + $0xc] sm:$0xf] %v312
    %345 = vst [vmem:[%s2 + $0x10] sm:$0xf] %v313
    %346 = vst [vmem:[%s2 + $0x14] sm:$0xf] %v314
    %347 = vst [vmem:[%s2 + $0x18] sm:$0xf] %v315
    %348 = vst [vmem:[%s2 + $0x1c] sm:$0xf] %v316
    %349 = vst [vmem:[%s2 + $0x20] sm:$0xf] %v317
    %350 = vst [vmem:[%s2 + $0x24] sm:$0xf] %v318
    %351 = vst [vmem:[%s2 + $0x28] sm:$0xf] %v319
    %352 = vst [vmem:[%s2 + $0x2c] sm:$0xf] %v320
    %353 = vst [vmem:[%s2 + $0x30] sm:$0xf] %v321
    %354 = vst [vmem:[%s2 + $0x34] sm:$0xf] %v322
    %355 = vst [vmem:[%s2 + $0x38] sm:$0xf] %v323
    %356 = vst [vmem:[%s2 + $0x3c] sm:$0xf] %v324
  $region17: #{encoder_forward.12} parent=0 // pred_fallthru
    _
  // Predicated region
  $region18: #{encoder_forward.12} parent=0 // pred_check
    _
  $region19: #{encoder_forward.12} parent=0 // pred_check_branch
    %358 = sbr.rel (0) target = $region21
  $region20: #{encoder_forward.12} parent=0 // pred_region
    _
  $region21: #{encoder_forward.12} parent=0 // pred_fallthru
    _
  // Predicated region
  $region22: #{encoder_forward.12} parent=0 // pred_check
    _
  $region23: #{encoder_forward.12} parent=0 // pred_check_branch
    %360 = sbr.rel (0) target = $region25
  $region24: #{encoder_forward.12} parent=0 // pred_region
    _
  $region25: #{encoder_forward.12} parent=0 // pred_fallthru
    _

// kernel: encoder_forward.13
$region0: #{encoder_forward.13}
  #allocation0 [shape = 'u32[]', space=smem, size = 0x4, offset = 0x4, fixed_abs, tag = 'smem constant byte address 0x4 - core index']
  #allocation1 [shape = 'u32[144,128]{1,0:T(1,128)}', space=vmem, size = 0x12000, scoped, tag = 'internal scratch']
  %s0 = inlined_call_operand.vmem [shape: f32[32,64], index: 0, kind: input, shape index: {}]
  %s1 = inlined_call_operand.vmem [shape: f32[1,64], index: 1, kind: input, shape index: {}]
  %s2 = inlined_call_operand.vmem [shape: f32[1,64], index: 2, kind: input, shape index: {}]
  %s3 = inlined_call_operand.vmem [shape: bf16[64,128], index: 3, kind: input, shape index: {}]
  %s4 = inlined_call_operand.vmem [shape: f32[1,128], index: 4, kind: input, shape index: {}]
  %s5 = inlined_call_operand.vmem [shape: bf16[128,64], index: 5, kind: input, shape index: {}]
  %s6 = inlined_call_operand.vmem [shape: f32[1,64], index: 6, kind: input, shape index: {}]
  %s7 = inlined_call_operand.vmem [shape: f32[32,64], index: 7, kind: output, shape index: {}]
  %s8 = sld [smem:[#allocation0]]
  $region38: #{encoder_forward.13} parent=0
    _
  %s10 = ssub.s32 1, %s8
  %s11 = scalar_select 0, %s10, %s8
  // Predicated region
  $region2: #{encoder_forward.13} parent=0 // pred_check
    _
  $region3: #{encoder_forward.13} parent=0 // pred_check_branch
    %13 = sbr.rel (0) target = $region5
  $region4: #{encoder_forward.13} parent=0 // pred_region
    _
  $region5: #{encoder_forward.13} parent=0 // pred_fallthru
    _
  // Predicated region
  $region6: #{encoder_forward.13} parent=0 // pred_check
    _
  $region7: #{encoder_forward.13} parent=0 // pred_check_branch
    %15 = sbr.rel (0) target = $region9
  $region8: #{encoder_forward.13} parent=0 // pred_region
    _
  $region9: #{encoder_forward.13} parent=0 // pred_fallthru
    _
  // Predicated region
  $region10: #{encoder_forward.13} parent=0 // pred_check
    _
  $region11: #{encoder_forward.13} parent=0 // pred_check_branch
    %17 = sbr.rel (0) target = $region13
  $region12: #{encoder_forward.13} parent=0 // pred_region
    _
  $region13: #{encoder_forward.13} parent=0 // pred_fallthru
    _
  // Predicated region
  $region14: #{encoder_forward.13} parent=0 // pred_check
    _
  $region15: #{encoder_forward.13} parent=0 // pred_check_branch
    %19 = sbr.rel (0) target = $region17
  $region16: #{encoder_forward.13} parent=0 // pred_region
    _
  $region17: #{encoder_forward.13} parent=0 // pred_fallthru
    _
  // Predicated region
  $region18: #{encoder_forward.13} parent=0 // pred_check
    _
  $region19: #{encoder_forward.13} parent=0 // pred_check_branch
    %21 = sbr.rel (0) target = $region21
  $region20: #{encoder_forward.13} parent=0 // pred_region
    _
  $region21: #{encoder_forward.13} parent=0 // pred_fallthru
    _
  // Predicated region
  $region22: #{encoder_forward.13} parent=0 // pred_check
    _
  $region23: #{encoder_forward.13} parent=0 // pred_check_branch
    %23 = sbr.rel (0) target = $region25
  $region24: #{encoder_forward.13} parent=0 // pred_region
    _
  $region25: #{encoder_forward.13} parent=0 // pred_fallthru
    _
  // Predicated region
  $region26: #{encoder_forward.13} parent=0 // pred_check
    _
  $region27: #{encoder_forward.13} parent=0 // pred_check_branch
    %25 = sbr.rel (0) target = $region29
  $region28: #{encoder_forward.13} parent=0 // pred_region
    _
  $region29: #{encoder_forward.13} parent=0 // pred_fallthru
    _
  %v27 = vld [vmem:[%s0] sm:$0xff]
  %v28 = vld [vmem:[%s0 + $0x8] sm:$0xff]
  %v29 = vld [vmem:[%s0 + $0x10] sm:$0xff]
  %v30 = vld [vmem:[%s0 + $0x18] sm:$0xff]
  %v31 = vld [vmem:[%s1] sm:$0x1]
  %v32 = vld [vmem:[%s2] sm:$0x1]
  %vm33 = vcmask 523264
  %v34 = vsel %vm33, %v27, 0.0
  %35 = vadd.xlane.f32.xlu0 %v34
  %v36 = vpop.xlane.xlu0 %35
  %v37 = vsel %vm33, %v28, 0.0
  %38 = vadd.xlane.f32.xlu0 %v37
  %v39 = vpop.xlane.xlu0 %38
  %v40 = vsel %vm33, %v29, 0.0
  %41 = vadd.xlane.f32.xlu0 %v40
  %v42 = vpop.xlane.xlu0 %41
  %v43 = vsel %vm33, %v30, 0.0
  %44 = vadd.xlane.f32.xlu0 %v43
  %v45 = vpop.xlane.xlu0 %44
  %v46 = vrcp.pop 64.0
  %v47 = vmul.f32 %v36, %v46
  %v48 = vmul.f32 %v39, %v46
  %v49 = vmul.f32 %v42, %v46
  %v50 = vmul.f32 %v45, %v46
  %v51 = vsub.f32 %v27, %v47
  %v52 = vsub.f32 %v28, %v48
  %v53 = vsub.f32 %v29, %v49
  %v54 = vsub.f32 %v30, %v50
  %v55 = vmul.f32 %v51, %v51
  %v56 = vmul.f32 %v52, %v52
  %v57 = vmul.f32 %v53, %v53
  %v58 = vmul.f32 %v54, %v54
  %v59 = vsel %vm33, %v55, 0.0
  %60 = vadd.xlane.f32.xlu0 %v59
  %v61 = vpop.xlane.xlu0 %60
  %v62 = vsel %vm33, %v56, 0.0
  %63 = vadd.xlane.f32.xlu0 %v62
  %v64 = vpop.xlane.xlu0 %63
  %v65 = vsel %vm33, %v57, 0.0
  %66 = vadd.xlane.f32.xlu0 %v65
  %v67 = vpop.xlane.xlu0 %66
  %v68 = vsel %vm33, %v58, 0.0
  %69 = vadd.xlane.f32.xlu0 %v68
  %v70 = vpop.xlane.xlu0 %69
  %v71 = vmul.f32 %v61, %v46
  %v72 = vmul.f32 %v64, %v46
  %v73 = vmul.f32 %v67, %v46
  %v74 = vmul.f32 %v70, %v46
  %v75 = vadd.f32 %v71, 1e-05
  %v76 = vadd.f32 %v72, 1e-05
  %v77 = vadd.f32 %v73, 1e-05
  %v78 = vadd.f32 %v74, 1e-05
  %v79 = vrsqrt.pop %v75
  %v80 = vrsqrt.pop %v76
  %v81 = vrsqrt.pop %v77
  %v82 = vrsqrt.pop %v78
  %v83 = vmul.f32 %v51, %v79
  %v84 = vmul.f32 %v52, %v80
  %v85 = vmul.f32 %v53, %v81
  %v86 = vmul.f32 %v54, %v82
  %v88 = vlaneseq
  %v89 = vshrl.u32 %v88, 7
  %v90 = vsub.s32 0, %v89
  %v91 = vrot.slane %v31, %v90
  %v93 = vmul.f32 %v83, %v91
  %v94 = vmul.f32 %v84, %v91
  %v95 = vmul.f32 %v85, %v91
  %v96 = vmul.f32 %v86, %v91
  %v98 = vlaneseq
  %v99 = vshrl.u32 %v98, 7
  %v100 = vsub.s32 0, %v99
  %v101 = vrot.slane %v32, %v100
  %v103 = vadd.f32 %v93, %v101
  %v104 = vadd.f32 %v94, %v101
  %v105 = vadd.f32 %v95, %v101
  %v106 = vadd.f32 %v96, %v101
  %v107 = vpack.c.bf16 %v104, %v103
  %v108 = vpack.c.bf16 %v106, %v105
  %v109 = vld [vmem:[%s3] sm:$0xf]
  %v110 = vld [vmem:[%s3 + $0x4] sm:$0xf]
  %v111 = vld [vmem:[%s3 + $0x8] sm:$0xf]
  %v112 = vld [vmem:[%s3 + $0xc] sm:$0xf]
  %v113 = vld [vmem:[%s3 + $0x10] sm:$0xf]
  %v114 = vld [vmem:[%s3 + $0x14] sm:$0xf]
  %v115 = vld [vmem:[%s3 + $0x18] sm:$0xf]
  %v116 = vld [vmem:[%s3 + $0x1c] sm:$0xf]
  %v117 = vld [vmem:[%s4] sm:$0x1]
  %v119 = vlaneseq
  %v120 = vshrl.u32 %v119, 7
  %v121 = vsub.s32 0, %v120
  %v122 = vrot.slane %v117, %v121
  %v132 = vunpack.c.l.b16 %v109
  %v133 = vunpack.c.l.b16 %v110
  %v134 = vunpack.c.l.b16 %v111
  %v135 = vunpack.c.l.b16 %v112
  %v136 = vunpack.c.l.b16 %v113
  %v137 = vunpack.c.l.b16 %v114
  %v138 = vunpack.c.l.b16 %v115
  %v139 = vunpack.c.l.b16 %v116
  %v140 = vpack.c.b16 %v133, %v132
  %v141 = vpack.c.b16 %v135, %v134
  %v142 = vpack.c.b16 %v137, %v136
  %v143 = vpack.c.b16 %v139, %v138
  %v149 = vsel %vm33, %v107, 0
  %v152 = vsel %vm33, %v108, 0
  %154 = vmatprep.subr.bf16.mxu0 0
  %155 = vmatpush1.bf16.msra.mxu0 %v140
  %156 = vmatprep.subr.bf16.mxu0 0
  %157 = vmatpush1.bf16.msra.mxu0 %v141
  %158 = vmatprep.subr.bf16.mxu0 0
  %159 = vmatpush1.bf16.msra.mxu0 %v142
  %160 = vmatprep.subr.bf16.mxu0 0
  %161 = vmatpush1.bf16.msra.mxu0 %v143
  %162 = vmatprep.subr.bf16.mxu0 0
  %163 = vmatpush1.bf16.msra.mxu0 0
  %164 = vmatprep.subr.bf16.mxu0 0
  %165 = vmatpush1.bf16.msra.mxu0 0
  %166 = vmatprep.subr.bf16.mxu0 0
  %167 = vmatpush1.bf16.msra.mxu0 0
  %168 = vmatprep.subr.bf16.mxu0 0
  %169 = vmatpush1.bf16.msra.mxu0 0
  %170 = vmatprep.subr.bf16.mxu0 0
  %171 = vmatpush1.bf16.msra.mxu0 0
  %172 = vmatprep.subr.bf16.mxu0 0
  %173 = vmatpush1.bf16.msra.mxu0 0
  %174 = vmatprep.subr.bf16.mxu0 0
  %175 = vmatpush1.bf16.msra.mxu0 0
  %176 = vmatprep.subr.bf16.mxu0 0
  %177 = vmatpush1.bf16.msra.mxu0 0
  %178 = vmatprep.subr.bf16.mxu0 0
  %179 = vmatpush1.bf16.msra.mxu0 0
  %180 = vmatprep.subr.bf16.mxu0 0
  %181 = vmatpush1.bf16.msra.mxu0 0
  %182 = vmatprep.subr.bf16.mxu0 0
  %183 = vmatpush1.bf16.msra.mxu0 0
  %184 = vmatprep.subr.bf16.mxu0 0
  %185 = vmatpush1.bf16.msra.mxu0 0
  %186 = vmatprep.mubr.bf16.mxu0 0
  %187 = vmatmul.mubr.bf16.gmra.mrb[0].mxu0 %v149
  %v188 = vpop.f32.mrb[0].mxu0
  %v189 = vadd.f32 %v122, %v188
  %v190 = vpop.f32.mrb[0].mxu0
  %v191 = vpop.f32.mrb[0].mxu0
  %v192 = vadd.f32 %v122, %v191
  %v193 = vpop.f32.mrb[0].mxu0
  %194 = vmatprep.mubr.bf16.mxu0 0
  %195 = vmatmul.mubr.bf16.gmra.mrb[0].mxu0 %v152
  %v196 = vpop.f32.mrb[0].mxu0
  %v197 = vadd.f32 %v122, %v196
  %v198 = vpop.f32.mrb[0].mxu0
  %v199 = vpop.f32.mrb[0].mxu0
  %v200 = vadd.f32 %v122, %v199
  %v201 = vpop.f32.mrb[0].mxu0
  %202 = vdwg.mxu0
  %v203 = vxor.u32 %v189, 2147483648
  %v204 = vxor.u32 %v192, 2147483648
  %v205 = vxor.u32 %v197, 2147483648
  %v206 = vxor.u32 %v200, 2147483648
  %v207 = vmul.f32 %v203, 1.442695
  %v208 = vpow.pop %v207
  %v209 = vmul.f32 %v204, 1.442695
  %v210 = vpow.pop %v209
  %v211 = vmul.f32 %v205, 1.442695
  %v212 = vpow.pop %v211
  %v213 = vmul.f32 %v206, 1.442695
  %v214 = vpow.pop %v213
  %v215 = vadd.f32 %v208, 1.0
  %v216 = vadd.f32 %v210, 1.0
  %v217 = vadd.f32 %v212, 1.0
  %v218 = vadd.f32 %v214, 1.0
  %v219 = vrcp.pop %v215
  %v220 = vmul.f32 1.0, %v219
  %v221 = vrcp.pop %v216
  %v222 = vmul.f32 1.0, %v221
  %v223 = vrcp.pop %v217
  %v224 = vmul.f32 1.0, %v223
  %v225 = vrcp.pop %v218
  %v226 = vmul.f32 1.0, %v225
  %v227 = vmul.f32 %v189, %v220
  %v228 = vmul.f32 %v192, %v222
  %v229 = vmul.f32 %v197, %v224
  %v230 = vmul.f32 %v200, %v226
  %v231 = vpack.c.bf16 %v228, %v227
  %v232 = vpack.c.bf16 %v230, %v229
  %v233 = vld [vmem:[%s5] sm:$0xf]
  %v234 = vld [vmem:[%s5 + $0x4] sm:$0xf]
  %v235 = vld [vmem:[%s5 + $0x8] sm:$0xf]
  %v236 = vld [vmem:[%s5 + $0xc] sm:$0xf]
  %v237 = vld [vmem:[%s5 + $0x10] sm:$0xf]
  %v238 = vld [vmem:[%s5 + $0x14] sm:$0xf]
  %v239 = vld [vmem:[%s5 + $0x18] sm:$0xf]
  %v240 = vld [vmem:[%s5 + $0x1c] sm:$0xf]
  %v241 = vld [vmem:[%s5 + $0x20] sm:$0xf]
  %v242 = vld [vmem:[%s5 + $0x24] sm:$0xf]
  %v243 = vld [vmem:[%s5 + $0x28] sm:$0xf]
  %v244 = vld [vmem:[%s5 + $0x2c] sm:$0xf]
  %v245 = vld [vmem:[%s5 + $0x30] sm:$0xf]
  %v246 = vld [vmem:[%s5 + $0x34] sm:$0xf]
  %v247 = vld [vmem:[%s5 + $0x38] sm:$0xf]
  %v248 = vld [vmem:[%s5 + $0x3c] sm:$0xf]
  %v249 = vld [vmem:[%s6] sm:$0x1]
  %v251 = vlaneseq
  %v252 = vshrl.u32 %v251, 7
  %v253 = vsub.s32 0, %v252
  %v254 = vrot.slane %v249, %v253
  %v272 = vunpack.c.l.b16 %v233
  %v273 = vunpack.c.l.b16 %v234
  %v274 = vunpack.c.l.b16 %v235
  %v275 = vunpack.c.l.b16 %v236
  %v276 = vunpack.c.l.b16 %v237
  %v277 = vunpack.c.l.b16 %v238
  %v278 = vunpack.c.l.b16 %v239
  %v279 = vunpack.c.l.b16 %v240
  %v280 = vunpack.c.l.b16 %v241
  %v281 = vunpack.c.l.b16 %v242
  %v282 = vunpack.c.l.b16 %v243
  %v283 = vunpack.c.l.b16 %v244
  %v284 = vunpack.c.l.b16 %v245
  %v285 = vunpack.c.l.b16 %v246
  %v286 = vunpack.c.l.b16 %v247
  %v287 = vunpack.c.l.b16 %v248
  %v288 = vpack.c.b16 %v273, %v272
  %v289 = vpack.c.b16 %v275, %v274
  %v290 = vpack.c.b16 %v277, %v276
  %v291 = vpack.c.b16 %v279, %v278
  %v292 = vpack.c.b16 %v281, %v280
  %v293 = vpack.c.b16 %v283, %v282
  %v294 = vpack.c.b16 %v285, %v284
  %v295 = vpack.c.b16 %v287, %v286
  %304 = vmatprep.subr.bf16.mxu0 0
  %305 = vmatpush1.bf16.msra.mxu0 %v288
  %306 = vmatprep.subr.bf16.mxu0 0
  %307 = vmatpush1.bf16.msra.mxu0 %v289
  %308 = vmatprep.subr.bf16.mxu0 0
  %309 = vmatpush1.bf16.msra.mxu0 %v290
  %310 = vmatprep.subr.bf16.mxu0 0
  %311 = vmatpush1.bf16.msra.mxu0 %v291
  %312 = vmatprep.subr.bf16.mxu0 0
  %313 = vmatpush1.bf16.msra.mxu0 %v292
  %314 = vmatprep.subr.bf16.mxu0 0
  %315 = vmatpush1.bf16.msra.mxu0 %v293
  %316 = vmatprep.subr.bf16.mxu0 0
  %317 = vmatpush1.bf16.msra.mxu0 %v294
  %318 = vmatprep.subr.bf16.mxu0 0
  %319 = vmatpush1.bf16.msra.mxu0 %v295
  %320 = vmatprep.subr.bf16.mxu0 0
  %321 = vmatpush1.bf16.msra.mxu0 0
  %322 = vmatprep.subr.bf16.mxu0 0
  %323 = vmatpush1.bf16.msra.mxu0 0
  %324 = vmatprep.subr.bf16.mxu0 0
  %325 = vmatpush1.bf16.msra.mxu0 0
  %326 = vmatprep.subr.bf16.mxu0 0
  %327 = vmatpush1.bf16.msra.mxu0 0
  %328 = vmatprep.subr.bf16.mxu0 0
  %329 = vmatpush1.bf16.msra.mxu0 0
  %330 = vmatprep.subr.bf16.mxu0 0
  %331 = vmatpush1.bf16.msra.mxu0 0
  %332 = vmatprep.subr.bf16.mxu0 0
  %333 = vmatpush1.bf16.msra.mxu0 0
  %334 = vmatprep.subr.bf16.mxu0 0
  %335 = vmatpush1.bf16.msra.mxu0 0
  %336 = vmatprep.mubr.bf16.mxu0 0
  %337 = vmatmul.mubr.bf16.gmra.mrb[0].mxu0 %v231
  %v338 = vpop.f32.mrb[0].mxu0
  %v339 = vadd.f32 %v254, %v338
  %v340 = vpop.f32.mrb[0].mxu0
  %v341 = vpop.f32.mrb[0].mxu0
  %v342 = vadd.f32 %v254, %v341
  %v343 = vpop.f32.mrb[0].mxu0
  %344 = vmatprep.mubr.bf16.mxu0 0
  %345 = vmatmul.mubr.bf16.gmra.mrb[0].mxu0 %v232
  %v346 = vpop.f32.mrb[0].mxu0
  %v347 = vadd.f32 %v254, %v346
  %v348 = vpop.f32.mrb[0].mxu0
  %v349 = vpop.f32.mrb[0].mxu0
  %v350 = vadd.f32 %v254, %v349
  %v351 = vpop.f32.mrb[0].mxu0
  %352 = vdwg.mxu0
  %v353 = vmul.f32 %v339, 0.5
  %v354 = vmul.f32 %v342, 0.5
  %v355 = vmul.f32 %v347, 0.5
  %v356 = vmul.f32 %v350, 0.5
  %v357 = vadd.f32 %v353, %v27
  %v358 = vadd.f32 %v354, %v28
  %v359 = vadd.f32 %v355, %v29
  %v360 = vadd.f32 %v356, %v30
  %361 = vst.msk [vmem:[%s7] sm:$0xff] %vm33, %v357
  %362 = vst.msk [vmem:[%s7 + $0x8] sm:$0xff] %vm33, %v358
  %363 = vst.msk [vmem:[%s7 + $0x10] sm:$0xff] %vm33, %v359
  %364 = vst.msk [vmem:[%s7 + $0x18] sm:$0xff] %vm33, %v360
  // Predicated region
  $region30: #{encoder_forward.13} parent=0 // pred_check
    _
  $region31: #{encoder_forward.13} parent=0 // pred_check_branch
    %366 = sbr.rel (0) target = $region33
  $region32: #{encoder_forward.13} parent=0 // pred_region
    _
  $region33: #{encoder_forward.13} parent=0 // pred_fallthru
    _
  // Predicated region
  $region34: #{encoder_forward.13} parent=0 // pred_check
    _
  $region35: #{encoder_forward.13} parent=0 // pred_check_branch
    %368 = sbr.rel (0) target = $region37
  $region36: #{encoder_forward.13} parent=0 // pred_region
    _
  $region37: #{encoder_forward.13} parent=0 // pred_fallthru
    _

// kernel: encoder_forward.15
$region0: #{encoder_forward.15}
  #allocation0 [shape = 'u32[]', space=smem, size = 0x4, offset = 0x4, fixed_abs, tag = 'smem constant byte address 0x4 - core index']
  #allocation1 [shape = 'u32[144,128]{1,0:T(1,128)}', space=vmem, size = 0x12000, scoped, tag = 'internal scratch']
  #allocation2 [shape = 'f32[16,64]{1,0:T(8,128)}', space=vmem, size = 0x2000, scoped, tag = 'scratch operand']
  %s0 = inlined_call_operand.vmem [shape: bf16[2,4,16,16], index: 0, kind: input, shape index: {}]
  %s1 = inlined_call_operand.vmem [shape: bf16[2,4,16,16], index: 1, kind: input, shape index: {}]
  %s2 = inlined_call_operand.vmem [shape: bf16[2,4,16,16], index: 2, kind: input, shape index: {}]
  %s3 = inlined_call_operand.vmem [shape: bf16[2,4,16,16], index: 3, kind: input, shape index: {}]
  %s4 = inlined_call_operand.vmem [shape: f32[2,16,64], index: 4, kind: input, shape index: {}]
  %s5 = inlined_call_operand.vmem [shape: bf16[4,128,16], index: 5, kind: input, shape index: {}]
  %s6 = inlined_call_operand.vmem [shape: bf16[4,16,64], index: 6, kind: input, shape index: {}]
  %s7 = inlined_call_operand.vmem [shape: f32[1,64], index: 7, kind: input, shape index: {}]
  %s8 = inlined_call_operand.vmem [shape: f32[2,16,64], index: 8, kind: output, shape index: {}]
  %s9 = sld [smem:[#allocation0]]
  $region73: #{encoder_forward.15} parent=0
    _
  %s11 = ssub.s32 1, %s9
  %s12 = scalar_select 0, %s11, %s9
  loop: start=0, step=1, limit=10
  $region2: #{encoder_forward.15} parent=0 // loop_pre_header
    _
  $region3: #{encoder_forward.15} parent=0 // loop_header
    %s14 = sphi 0, %s18
    %p15 = scmp.ge.s32.totalorder %s14, 10
    %s21 = sphi 0, %s40
    %s22 = sphi 0, %s36
    %s23 = sphi 0, %s32
    %s24 = sphi 0, %s21
    %s25 = sphi 0, %s22
    %s26 = sphi 0, %s23
    %s27 = sphi 0, %s24
    %s28 = sphi 0, %s25
    %s29 = sphi 0, %s26
    %s45 = sphi 0, %s47
    %s48 = sphi 0, %s45
    %s49 = sphi 0, %s48
    %s65 = sphi 0, %s49
    %s73 = sphi 0, %s75
    %s76 = sphi 0, %s73
    %s77 = sphi 0, %s76
    %s93 = sphi 0, %s77
    %s99 = sphi 0, %s101
    %s102 = sphi 0, %s99
    %s103 = sphi 0, %s102
    %s119 = sphi 0, %s103
    %s125 = sphi 0, %s127
    %s128 = sphi 0, %s125
    %s129 = sphi 0, %s128
    %s145 = sphi 0, %s129
    %s153 = sphi 0, %s155
    %s156 = sphi 0, %s153
    %s157 = sphi 0, %s156
    %s173 = sphi 0, %s157
    %s177 = sphi 0, %s177
    %s179 = sphi 0, %s177
    %s180 = sphi 0, %s179
    %s194 = sphi 0, %s180
    %s198 = sphi 0, %s198
    %s200 = sphi 0, %s198
    %s201 = sphi 0, %s200
    %s215 = sphi 0, %s201
    %s219 = sphi 0, %s219
    %s221 = sphi 0, %s219
    %s222 = sphi 0, %s221
    %s236 = sphi 0, %s222
    %s244 = sphi 0, %s246
    %s247 = sphi 0, %s244
    %s248 = sphi 0, %s247
    %s264 = sphi 0, %s248
  $region4: #{encoder_forward.15} parent=0 // loop_header_branch
    %17 = sbr.rel (%p15) target = $region8
  $region5: #{encoder_forward.15} parent=0 // loop_body
    %s19 = ssub.s32 %s14, 1
    %s20 = ssub.s32 %s14, 2
    %s30 = sadd.s32 1, %s23
    %p31 = scmp.ge.s32.totalorder %s30, 4
    %s32 = scalar_select %p31, 0, %s30
    %s33 = sadd.s32 1, %s22
    %s34 = scalar_select %p31, %s33, %s22
    %p35 = scmp.ge.s32.totalorder %s34, 1
    %s36 = scalar_select %p35, 0, %s34
    %s37 = sadd.s32 1, %s21
    %s38 = scalar_select %p35, %s37, %s21
    %p39 = scmp.ge.s32.totalorder %s38, 2
    %s40 = scalar_select %p39, 0, %s38
    %s41 = ssub.s32 %s21, %s40
    %s42 = ssub.s32 %s22, %s36
    %s43 = sor.u32 %s41, %s42
    %p44 = scmp.eq.s32.totalorder %s43, 0
    %s46 = sadd.s32 %s45, 1
    %s47 = scalar_select %p44, %s45, %s46
    %p50 = pneg %p44
    %p51 = scmp.eq.s32.totalorder %s14, 7
    %p52 = por %p50, %p51
    %p53 = scmp.ne.s32.totalorder %s45, %s48
    %p54 = scmp.eq.s32.totalorder %s14, 0
    %p55 = por %p53, %p54
    %p56 = scmp.ne.s32.totalorder %s45, %s48
    %p57 = scmp.eq.s32.totalorder %s19, 7
    %p58 = por %p56, %p57
    %p59 = scmp.ne.s32.totalorder %s48, %s49
    %p60 = scmp.eq.s32.totalorder %s19, 0
    %p61 = por %p59, %p60
    %p62 = scmp.ne.s32.totalorder %s48, %s49
    %p63 = scmp.eq.s32.totalorder %s20, 7
    %p64 = por %p62, %p63
    %p66 = scmp.ne.s32.totalorder %s49, %s65
    %p67 = scmp.eq.s32.totalorder %s20, 0
    %p68 = por %p66, %p67
    %s69 = ssub.s32 %s21, %s40
    %s70 = ssub.s32 %s22, %s36
    %s71 = sor.u32 %s69, %s70
    %p72 = scmp.eq.s32.totalorder %s71, 0
    %s74 = sadd.s32 %s73, 1
    %s75 = scalar_select %p72, %s73, %s74
    %p78 = pneg %p72
    %p79 = scmp.eq.s32.totalorder %s14, 7
    %p80 = por %p78, %p79
    %p81 = scmp.ne.s32.totalorder %s73, %s76
    %p82 = scmp.eq.s32.totalorder %s14, 0
    %p83 = por %p81, %p82
    %p84 = scmp.ne.s32.totalorder %s73, %s76
    %p85 = scmp.eq.s32.totalorder %s19, 7
    %p86 = por %p84, %p85
    %p87 = scmp.ne.s32.totalorder %s76, %s77
    %p88 = scmp.eq.s32.totalorder %s19, 0
    %p89 = por %p87, %p88
    %p90 = scmp.ne.s32.totalorder %s76, %s77
    %p91 = scmp.eq.s32.totalorder %s20, 7
    %p92 = por %p90, %p91
    %p94 = scmp.ne.s32.totalorder %s77, %s93
    %p95 = scmp.eq.s32.totalorder %s20, 0
    %p96 = por %p94, %p95
    %s97 = ssub.s32 %s21, %s40
    %p98 = scmp.eq.s32.totalorder %s97, 0
    %s100 = sadd.s32 %s99, 1
    %s101 = scalar_select %p98, %s99, %s100
    %p104 = pneg %p98
    %p105 = scmp.eq.s32.totalorder %s14, 7
    %p106 = por %p104, %p105
    %p107 = scmp.ne.s32.totalorder %s99, %s102
    %p108 = scmp.eq.s32.totalorder %s14, 0
    %p109 = por %p107, %p108
    %p110 = scmp.ne.s32.totalorder %s99, %s102
    %p111 = scmp.eq.s32.totalorder %s19, 7
    %p112 = por %p110, %p111
    %p113 = scmp.ne.s32.totalorder %s102, %s103
    %p114 = scmp.eq.s32.totalorder %s19, 0
    %p115 = por %p113, %p114
    %p116 = scmp.ne.s32.totalorder %s102, %s103
    %p117 = scmp.eq.s32.totalorder %s20, 7
    %p118 = por %p116, %p117
    %p120 = scmp.ne.s32.totalorder %s103, %s119
    %p121 = scmp.eq.s32.totalorder %s20, 0
    %p122 = por %p120, %p121
    %s123 = ssub.s32 %s21, %s40
    %p124 = scmp.eq.s32.totalorder %s123, 0
    %s126 = sadd.s32 %s125, 1
    %s127 = scalar_select %p124, %s125, %s126
    %p130 = pneg %p124
    %p131 = scmp.eq.s32.totalorder %s14, 7
    %p132 = por %p130, %p131
    %p133 = scmp.ne.s32.totalorder %s125, %s128
    %p134 = scmp.eq.s32.totalorder %s14, 0
    %p135 = por %p133, %p134
    %p136 = scmp.ne.s32.totalorder %s125, %s128
    %p137 = scmp.eq.s32.totalorder %s19, 7
    %p138 = por %p136, %p137
    %p139 = scmp.ne.s32.totalorder %s128, %s129
    %p140 = scmp.eq.s32.totalorder %s19, 0
    %p141 = por %p139, %p140
    %p142 = scmp.ne.s32.totalorder %s128, %s129
    %p143 = scmp.eq.s32.totalorder %s20, 7
    %p144 = por %p142, %p143
    %p146 = scmp.ne.s32.totalorder %s129, %s145
    %p147 = scmp.eq.s32.totalorder %s20, 0
    %p148 = por %p146, %p147
    %s149 = ssub.s32 %s21, %s40
    %s150 = ssub.s32 %s22, %s36
    %s151 = sor.u32 %s149, %s150
    %p152 = scmp.eq.s32.totalorder %s151, 0
    %s154 = sadd.s32 %s153, 1
    %s155 = scalar_select %p152, %s153, %s154
    %p158 = pneg %p152
    %p159 = scmp.eq.s32.totalorder %s14, 7
    %p160 = por %p158, %p159
    %p161 = scmp.ne.s32.totalorder %s153, %s156
    %p162 = scmp.eq.s32.totalorder %s14, 0
    %p163 = por %p161, %p162
    %p164 = scmp.ne.s32.totalorder %s153, %s156
    %p165 = scmp.eq.s32.totalorder %s19, 7
    %p166 = por %p164, %p165
    %p167 = scmp.ne.s32.totalorder %s156, %s157
    %p168 = scmp.eq.s32.totalorder %s19, 0
    %p169 = por %p167, %p168
    %p170 = scmp.ne.s32.totalorder %s156, %s157
    %p171 = scmp.eq.s32.totalorder %s20, 7
    %p172 = por %p170, %p171
    %p174 = scmp.ne.s32.totalorder %s157, %s173
    %p175 = scmp.eq.s32.totalorder %s20, 0
    %p176 = por %p174, %p175
    %s178 = sadd.s32 %s177, 1
    %p181 = scmp.eq.s32.totalorder %s14, 7
    %p182 = scmp.ne.s32.totalorder %s177, %s179
    %p183 = scmp.eq.s32.totalorder %s14, 0
    %p184 = por %p182, %p183
    %p185 = scmp.ne.s32.totalorder %s177, %s179
    %p186 = scmp.eq.s32.totalorder %s19, 7
    %p187 = por %p185, %p186
    %p188 = scmp.ne.s32.totalorder %s179, %s180
    %p189 = scmp.eq.s32.totalorder %s19, 0
    %p190 = por %p188, %p189
    %p191 = scmp.ne.s32.totalorder %s179, %s180
    %p192 = scmp.eq.s32.totalorder %s20, 7
    %p193 = por %p191, %p192
    %p195 = scmp.ne.s32.totalorder %s180, %s194
    %p196 = scmp.eq.s32.totalorder %s20, 0
    %p197 = por %p195, %p196
    %s199 = sadd.s32 %s198, 1
    %p202 = scmp.eq.s32.totalorder %s14, 7
    %p203 = scmp.ne.s32.totalorder %s198, %s200
    %p204 = scmp.eq.s32.totalorder %s14, 0
    %p205 = por %p203, %p204
    %p206 = scmp.ne.s32.totalorder %s198, %s200
    %p207 = scmp.eq.s32.totalorder %s19, 7
    %p208 = por %p206, %p207
    %p209 = scmp.ne.s32.totalorder %s200, %s201
    %p210 = scmp.eq.s32.totalorder %s19, 0
    %p211 = por %p209, %p210
    %p212 = scmp.ne.s32.totalorder %s200, %s201
    %p213 = scmp.eq.s32.totalorder %s20, 7
    %p214 = por %p212, %p213
    %p216 = scmp.ne.s32.totalorder %s201, %s215
    %p217 = scmp.eq.s32.totalorder %s20, 0
    %p218 = por %p216, %p217
    %s220 = sadd.s32 %s219, 1
    %p223 = scmp.eq.s32.totalorder %s14, 7
    %p224 = scmp.ne.s32.totalorder %s219, %s221
    %p225 = scmp.eq.s32.totalorder %s14, 0
    %p226 = por %p224, %p225
    %p227 = scmp.ne.s32.totalorder %s219, %s221
    %p228 = scmp.eq.s32.totalorder %s19, 7
    %p229 = por %p227, %p228
    %p230 = scmp.ne.s32.totalorder %s221, %s222
    %p231 = scmp.eq.s32.totalorder %s19, 0
    %p232 = por %p230, %p231
    %p233 = scmp.ne.s32.totalorder %s221, %s222
    %p234 = scmp.eq.s32.totalorder %s20, 7
    %p235 = por %p233, %p234
    %p237 = scmp.ne.s32.totalorder %s222, %s236
    %p238 = scmp.eq.s32.totalorder %s20, 0
    %p239 = por %p237, %p238
    %s240 = ssub.s32 %s21, %s40
    %s241 = ssub.s32 %s22, %s36
    %s242 = sor.u32 %s240, %s241
    %p243 = scmp.eq.s32.totalorder %s242, 0
    %s245 = sadd.s32 %s244, 1
    %s246 = scalar_select %p243, %s244, %s245
    %p249 = pneg %p243
    %p250 = scmp.eq.s32.totalorder %s14, 7
    %p251 = por %p249, %p250
    %p252 = scmp.ne.s32.totalorder %s244, %s247
    %p253 = scmp.eq.s32.totalorder %s14, 0
    %p254 = por %p252, %p253
    %p255 = scmp.ne.s32.totalorder %s244, %s247
    %p256 = scmp.eq.s32.totalorder %s19, 7
    %p257 = por %p255, %p256
    %p258 = scmp.ne.s32.totalorder %s247, %s248
    %p259 = scmp.eq.s32.totalorder %s19, 0
    %p260 = por %p258, %p259
    %p261 = scmp.ne.s32.totalorder %s247, %s248
    %p262 = scmp.eq.s32.totalorder %s20, 7
    %p263 = por %p261, %p262
    %p265 = scmp.ne.s32.totalorder %s248, %s264
    %p266 = scmp.eq.s32.totalorder %s20, 0
    %p267 = por %p265, %p266
    %p268 = scmp.le.s32.totalorder 1, %s14
    %p269 = scmp.lt.s32.totalorder %s14, 9
    %p270 = pnand %p268, %p269
    %p271 = pneg %p270
    // Predicated region
    $region9: #{encoder_forward.15} parent=5 // pred_check
      _
    $region10: #{encoder_forward.15} parent=5 // pred_check_branch
      %273 = sbr.rel (%p270) target = $region12
    $region11: #{encoder_forward.15} parent=5 // pred_region
      %s274 = ssub.s32 %s14, 1
      // Predicated region
      $region13: #{encoder_forward.15} parent=11 // pred_check
        %p275 = pneg %p190
      $region14: #{encoder_forward.15} parent=11 // pred_check_branch
        %277 = sbr.rel (%p275) target = $region16
      $region15: #{encoder_forward.15} parent=11 // pred_region
        _
      $region16: #{encoder_forward.15} parent=11 // pred_fallthru
        _
      // Predicated region
      $region17: #{encoder_forward.15} parent=11 // pred_check
        %p278 = pneg %p211
      $region18: #{encoder_forward.15} parent=11 // pred_check_branch
        %280 = sbr.rel (%p278) target = $region20
      $region19: #{encoder_forward.15} parent=11 // pred_region
        _
      $region20: #{encoder_forward.15} parent=11 // pred_fallthru
        _
      // Predicated region
      $region21: #{encoder_forward.15} parent=11 // pred_check
        %p281 = pneg %p232
      $region22: #{encoder_forward.15} parent=11 // pred_check_branch
        %283 = sbr.rel (%p281) target = $region24
      $region23: #{encoder_forward.15} parent=11 // pred_region
        _
      $region24: #{encoder_forward.15} parent=11 // pred_fallthru
        _
    $region12: #{encoder_forward.15} parent=5 // pred_fallthru
      _
    %p284 = scmp.lt.s32.totalorder %s14, 8
    // Predicated region
    $region25: #{encoder_forward.15} parent=5 // pred_check
      %p285 = pneg %p284
    $region26: #{encoder_forward.15} parent=5 // pred_check_branch
      %287 = sbr.rel (%p285) target = $region28
    $region27: #{encoder_forward.15} parent=5 // pred_region
      // Predicated region
      $region29: #{encoder_forward.15} parent=27 // pred_check
        %p288 = pneg %p55
      $region30: #{encoder_forward.15} parent=27 // pred_check_branch
        %290 = sbr.rel (%p288) target = $region32
      $region31: #{encoder_forward.15} parent=27 // pred_region
        %s291 = smul.u32 2, %s22
        %p292 = scmp.lt.s32.totalorder %s21, 1
        %s293 = scalar_select %p292, %s21, 1
        %p294 = scmp.lt.s32.totalorder %s291, 1
        %s295 = scalar_select %p294, %s291, 1
        %s296 = smul.addr %s293, 8
        %s297 = sadd.s32 %s295, %s296
        %s298 = smul.addr %s297, 4
        %s299 = scalar_lea.vmem %s0, %s298
        %s300 = smul.u32 2, %s22
      $region32: #{encoder_forward.15} parent=27 // pred_fallthru
        _
      // Predicated region
      $region33: #{encoder_forward.15} parent=27 // pred_check
        %p301 = pneg %p83
      $region34: #{encoder_forward.15} parent=27 // pred_check_branch
        %303 = sbr.rel (%p301) target = $region36
      $region35: #{encoder_forward.15} parent=27 // pred_region
        %s304 = smul.u32 2, %s22
        %p305 = scmp.lt.s32.totalorder %s21, 1
        %s306 = scalar_select %p305, %s21, 1
        %p307 = scmp.lt.s32.totalorder %s304, 1
        %s308 = scalar_select %p307, %s304, 1
        %s309 = smul.addr %s306, 8
        %s310 = sadd.s32 %s308, %s309
        %s311 = smul.addr %s310, 4
        %s312 = scalar_lea.vmem %s1, %s311
        %s313 = smul.u32 2, %s22
      $region36: #{encoder_forward.15} parent=27 // pred_fallthru
        _
      // Predicated region
      $region37: #{encoder_forward.15} parent=27 // pred_check
        %p314 = pneg %p109
      $region38: #{encoder_forward.15} parent=27 // pred_check_branch
        %316 = sbr.rel (%p314) target = $region40
      $region39: #{encoder_forward.15} parent=27 // pred_region
        %p317 = scmp.lt.s32.totalorder %s21, 1
        %s318 = scalar_select %p317, %s21, 1
        %s319 = smul.addr %s318, 8
        %s320 = smul.addr %s319, 4
        %s321 = scalar_lea.vmem %s2, %s320
      $region40: #{encoder_forward.15} parent=27 // pred_fallthru
        _
      // Predicated region
      $region41: #{encoder_forward.15} parent=27 // pred_check
        %p322 = pneg %p135
      $region42: #{encoder_forward.15} parent=27 // pred_check_branch
        %324 = sbr.rel (%p322) target = $region44
      $region43: #{encoder_forward.15} parent=27 // pred_region
        %p325 = scmp.lt.s32.totalorder %s21, 1
        %s326 = scalar_select %p325, %s21, 1
        %s327 = smul.addr %s326, 8
        %s328 = smul.addr %s327, 4
        %s329 = scalar_lea.vmem %s3, %s328
      $region44: #{encoder_forward.15} parent=27 // pred_fallthru
        _
      // Predicated region
      $region45: #{encoder_forward.15} parent=27 // pred_check
        %p330 = pneg %p163
      $region46: #{encoder_forward.15} parent=27 // pred_check_branch
        %332 = sbr.rel (%p330) target = $region48
      $region47: #{encoder_forward.15} parent=27 // pred_region
        %s333 = smul.u32 2, %s22
        %p334 = scmp.lt.s32.totalorder %s21, 1
        %s335 = scalar_select %p334, %s21, 1
        %p336 = scmp.lt.s32.totalorder %s333, 1
        %s337 = scalar_select %p336, %s333, 1
        %s338 = smul.addr %s335, 2
        %s339 = sadd.s32 %s337, %s338
        %s340 = smul.addr %s339, 8
        %s341 = scalar_lea.vmem %s4, %s340
        %s342 = smul.u32 2, %s22
      $region48: #{encoder_forward.15} parent=27 // pred_fallthru
        _
    $region28: #{encoder_forward.15} parent=5 // pred_fallthru
      _
    %p343 = scmp.le.s32.totalorder 1, %s14
    %p344 = scmp.lt.s32.totalorder %s14, 9
    %p345 = pnand %p343, %p344
    %p346 = pneg %p345
    // Predicated region
    $region49: #{encoder_forward.15} parent=5 // pred_check
      _
    $region50: #{encoder_forward.15} parent=5 // pred_check_branch
      %348 = sbr.rel (%p345) target = $region52
    $region51: #{encoder_forward.15} parent=5 // pred_region
      %s349 = ssub.s32 %s14, 1
      %s350 = smul.u32 2, %s25
      %p351 = scmp.lt.s32.totalorder %s24, 1
      %s352 = scalar_select %p351, %s24, 1
      %p353 = scmp.lt.s32.totalorder %s350, 1
      %s354 = scalar_select %p353, %s350, 1
      %s355 = smul.addr %s352, 8
      %s356 = sadd.s32 %s354, %s355
      %s357 = smul.addr %s356, 4
      %s358 = scalar_lea.vmem %s0, %s357
      %p359 = pneg %p61
      %p360 = pneg %p58
      %s361 = smul.u32 2, %s25
      %p362 = scmp.lt.s32.totalorder %s24, 1
      %s363 = scalar_select %p362, %s24, 1
      %p364 = scmp.lt.s32.totalorder %s361, 1
      %s365 = scalar_select %p364, %s361, 1
      %s366 = smul.addr %s363, 8
      %s367 = sadd.s32 %s365, %s366
      %s368 = smul.addr %s367, 4
      %s369 = scalar_lea.vmem %s1, %s368
      %p370 = pneg %p89
      %p371 = pneg %p86
      %p372 = scmp.lt.s32.totalorder %s24, 1
      %s373 = scalar_select %p372, %s24, 1
      %s374 = smul.addr %s373, 8
      %s375 = smul.addr %s374, 4
      %s376 = scalar_lea.vmem %s2, %s375
      %p377 = pneg %p115
      %p378 = pneg %p112
      %p379 = scmp.lt.s32.totalorder %s24, 1
      %s380 = scalar_select %p379, %s24, 1
      %s381 = smul.addr %s380, 8
      %s382 = smul.addr %s381, 4
      %s383 = scalar_lea.vmem %s3, %s382
      %p384 = pneg %p141
      %p385 = pneg %p138
      %s386 = smul.u32 2, %s25
      %p387 = scmp.lt.s32.totalorder %s24, 1
      %s388 = scalar_select %p387, %s24, 1
      %p389 = scmp.lt.s32.totalorder %s386, 1
      %s390 = scalar_select %p389, %s386, 1
      %s391 = smul.addr %s388, 2
      %s392 = sadd.s32 %s390, %s391
      %s393 = smul.addr %s392, 8
      %s394 = scalar_lea.vmem %s4, %s393
      %p395 = pneg %p169
      %p396 = pneg %p166
      %p397 = pneg %p190
      %p398 = pneg %p187
      %p399 = pneg %p211
      %p400 = pneg %p208
      %p401 = pneg %p232
      %p402 = pneg %p229
      %p403 = pneg %p260
      %p404 = pneg %p257
      %s405 = smul.u32 2, %s25
      %p406 = scmp.lt.s32.totalorder %s24, 1
      %s407 = scalar_select %p406, %s24, 1
      %p408 = scmp.lt.s32.totalorder %s405, 1
      %s409 = scalar_select %p408, %s405, 1
      %s410 = smul.addr %s407, 2
      %s411 = sadd.s32 %s409, %s410
      %s412 = smul.addr %s411, 8
      %s413 = scalar_lea.vmem %s8, %s412
      %s414 = smul.u32 2, %s25
      %p415 = scmp.lt.s32.totalorder %s24, 1
      %s416 = scalar_select %p415, %s24, 1
      %p417 = scmp.lt.s32.totalorder %s414, 1
      %s418 = scalar_select %p417, %s414, 1
      %s419 = smul.addr %s416, 8
      %s420 = sadd.s32 %s418, %s419
      %s421 = smul.addr %s420, 4
      %s422 = scalar_lea.vmem %s0, %s421
      %s423 = smul.u32 2, %s25
      %s424 = smul.u32 2, %s25
      %p425 = scmp.lt.s32.totalorder %s24, 1
      %s426 = scalar_select %p425, %s24, 1
      %p427 = scmp.lt.s32.totalorder %s424, 1
      %s428 = scalar_select %p427, %s424, 1
      %s429 = smul.addr %s426, 8
      %s430 = sadd.s32 %s428, %s429
      %s431 = smul.addr %s430, 4
      %s432 = scalar_lea.vmem %s1, %s431
      %s433 = smul.u32 2, %s25
      %p434 = scmp.lt.s32.totalorder %s24, 1
      %s435 = scalar_select %p434, %s24, 1
      %s436 = smul.addr %s435, 8
      %s437 = smul.addr %s436, 4
      %s438 = scalar_lea.vmem %s2, %s437
      %p439 = scmp.lt.s32.totalorder %s24, 1
      %s440 = scalar_select %p439, %s24, 1
      %s441 = smul.addr %s440, 8
      %s442 = smul.addr %s441, 4
      %s443 = scalar_lea.vmem %s3, %s442
      %s444 = smul.u32 2, %s25
      %p445 = scmp.lt.s32.totalorder %s24, 1
      %s446 = scalar_select %p445, %s24, 1
      %p447 = scmp.lt.s32.totalorder %s444, 1
      %s448 = scalar_select %p447, %s444, 1
      %s449 = smul.addr %s446, 2
      %s450 = sadd.s32 %s448, %s449
      %s451 = smul.addr %s450, 8
      %s452 = scalar_lea.vmem %s4, %s451
      %s453 = smul.u32 2, %s25
      %s454 = smul.u32 2, %s25
      %p455 = scmp.lt.s32.totalorder %s24, 1
      %s456 = scalar_select %p455, %s24, 1
      %p457 = scmp.lt.s32.totalorder %s454, 1
      %s458 = scalar_select %p457, %s454, 1
      %s459 = smul.addr %s456, 2
      %s460 = sadd.s32 %s458, %s459
      %s461 = smul.addr %s460, 8
      %s462 = scalar_lea.vmem %s8, %s461
      %s463 = smul.u32 2, %s25
      %p465 = scmp.eq.s32.totalorder %s26, 0
      // Predicated region
      $region53: #{encoder_forward.15} parent=51 // pred_check
        %p466 = pneg %p465
      $region54: #{encoder_forward.15} parent=51 // pred_check_branch
        %468 = sbr.rel (%p466) target = $region56
      $region55: #{encoder_forward.15} parent=51 // pred_region
        %vm469 = vcmask 523264
        %470 = vst.msk [vmem:[#allocation2] sm:$0xff] %vm469, 0.0
        %471 = vst.msk [vmem:[#allocation2 + $0x8] sm:$0xff] %vm469, 0.0
      $region56: #{encoder_forward.15} parent=51 // pred_fallthru
        _
      %s472 = smul.u32 %s26, 2
      %s473 = smul.addr %s472, 4
      %s474 = scalar_lea.vmem %s422, %s473
      %v475 = vld [vmem:[%s474] sm:$0xf]
      %v476 = vld [vmem:[%s474 + $0x4] sm:$0xf]
      %s477 = smul.addr %s472, 4
      %s478 = scalar_lea.vmem %s432, %s477
      %v479 = vld [vmem:[%s478] sm:$0xf]
      %v480 = vld [vmem:[%s478 + $0x4] sm:$0xf]
      %s481 = smul.addr %s472, 4
      %s482 = scalar_lea.vmem %s438, %s481
      %v483 = vld [vmem:[%s482] sm:$0xf]
      %v484 = vld [vmem:[%s482 + $0x4] sm:$0xf]
      %s485 = smul.addr %s472, 4
      %s486 = scalar_lea.vmem %s443, %s485
      %v487 = vld [vmem:[%s486] sm:$0xf]
      %v488 = vld [vmem:[%s486 + $0x4] sm:$0xf]
      %s489 = smul.u32 %s26, 16
      %s490 = smul.addr %s489, 4
      %s491 = scalar_lea.vmem %s5, %s490
      %v492 = vld [vmem:[%s491] sm:$0xf]
      %v493 = vld [vmem:[%s491 + $0x4] sm:$0xf]
      %v494 = vld [vmem:[%s491 + $0x8] sm:$0xf]
      %v495 = vld [vmem:[%s491 + $0xc] sm:$0xf]
      %v496 = vld [vmem:[%s491 + $0x10] sm:$0xf]
      %v497 = vld [vmem:[%s491 + $0x14] sm:$0xf]
      %v498 = vld [vmem:[%s491 + $0x18] sm:$0xf]
      %v499 = vld [vmem:[%s491 + $0x1c] sm:$0xf]
      %v500 = vld [vmem:[%s491 + $0x20] sm:$0xf]
      %v501 = vld [vmem:[%s491 + $0x24] sm:$0xf]
      %v502 = vld [vmem:[%s491 + $0x28] sm:$0xf]
      %v503 = vld [vmem:[%s491 + $0x2c] sm:$0xf]
      %v504 = vld [vmem:[%s491 + $0x30] sm:$0xf]
      %v505 = vld [vmem:[%s491 + $0x34] sm:$0xf]
      %v506 = vld [vmem:[%s491 + $0x38] sm:$0xf]
      %v507 = vld [vmem:[%s491 + $0x3c] sm:$0xf]
      %v510 = vunpack.c.l.b16 %v479
      %v511 = vunpack.c.l.b16 %v480
      %v512 = vpack.c.b16 %v511, %v510
      %v529 = vunpack.c.l.b16 %v492
      %v530 = vunpack.c.l.b16 %v493
      %v531 = vunpack.c.l.b16 %v494
      %v532 = vunpack.c.l.b16 %v495
      %v533 = vunpack.c.l.b16 %v496
      %v534 = vunpack.c.l.b16 %v497
      %v535 = vunpack.c.l.b16 %v498
      %v536 = vunpack.c.l.b16 %v499
      %v537 = vunpack.c.l.b16 %v500
      %v538 = vunpack.c.l.b16 %v501
      %v539 = vunpack.c.l.b16 %v502
      %v540 = vunpack.c.l.b16 %v503
      %v541 = vunpack.c.l.b16 %v504
      %v542 = vunpack.c.l.b16 %v505
      %v543 = vunpack.c.l.b16 %v506
      %v544 = vunpack.c.l.b16 %v507
      %v545 = vpack.c.b16 %v530, %v529
      %v546 = vpack.c.b16 %v532, %v531
      %v547 = vpack.c.b16 %v534, %v533
      %v548 = vpack.c.b16 %v536, %v535
      %v549 = vpack.c.b16 %v538, %v537
      %v550 = vpack.c.b16 %v540, %v539
      %v551 = vpack.c.b16 %v542, %v541
      %v552 = vpack.c.b16 %v544, %v543
      %vm553 = vcmask 130048
      %v555 = vsel %vm553, %v512, 0
      %v558 = vsel %vm553, %v545, 0
      %v561 = vsel %vm553, %v546, 0
      %v564 = vsel %vm553, %v547, 0
      %v567 = vsel %vm553, %v548, 0
      %v570 = vsel %vm553, %v549, 0
      %v573 = vsel %vm553, %v550, 0
      %v576 = vsel %vm553, %v551, 0
      %v579 = vsel %vm553, %v552, 0
      %581 = vmatprep.subr.bf16.mxu0 0
      %582 = vmatpush1.bf16.xpose.msra.mxu0 %v558
      %583 = vmatprep.subr.bf16.mxu0 0
      %584 = vmatpush1.bf16.xpose.msra.mxu0 %v561
      %585 = vmatprep.subr.bf16.mxu0 0
      %586 = vmatpush1.bf16.xpose.msra.mxu0 %v564
      %587 = vmatprep.subr.bf16.mxu0 0
      %588 = vmatpush1.bf16.xpose.msra.mxu0 %v567
      %589 = vmatprep.subr.bf16.mxu0 0
      %590 = vmatpush1.bf16.xpose.msra.mxu0 %v570
      %591 = vmatprep.subr.bf16.mxu0 0
      %592 = vmatpush1.bf16.xpose.msra.mxu0 %v573
      %593 = vmatprep.subr.bf16.mxu0 0
      %594 = vmatpush1.bf16.xpose.msra.mxu0 %v576
      %595 = vmatprep.subr.bf16.mxu0 0
      %596 = vmatpush1.bf16.xpose.msra.mxu0 %v579
      %597 = vmatprep.subr.bf16.mxu0 0
      %598 = vmatpush1.bf16.xpose.msra.mxu0 0
      %599 = vmatprep.subr.bf16.mxu0 0
      %600 = vmatpush1.bf16.xpose.msra.mxu0 0
      %601 = vmatprep.subr.bf16.mxu0 0
      %602 = vmatpush1.bf16.xpose.msra.mxu0 0
      %603 = vmatprep.subr.bf16.mxu0 0
      %604 = vmatpush1.bf16.xpose.msra.mxu0 0
      %605 = vmatprep.subr.bf16.mxu0 0
      %606 = vmatpush1.bf16.xpose.msra.mxu0 0
      %607 = vmatprep.subr.bf16.mxu0 0
      %608 = vmatpush1.bf16.xpose.msra.mxu0 0
      %609 = vmatprep.subr.bf16.mxu0 0
      %610 = vmatpush1.bf16.xpose.msra.mxu0 0
      %611 = vmatprep.subr.bf16.mxu0 0
      %612 = vmatpush1.bf16.xpose.msra.mxu0 0
      %613 = vmatprep.mubr.bf16.mxu0 0
      %614 = vmatmul.mubr.bf16.gmra.mrb[0].mxu0 %v555
      %v615 = vpop.f32.mrb[0].mxu0
      %v616 = vadd.f32 0.0, %v615
      %v617 = vpop.f32.mrb[0].mxu0
      %v618 = vpop.f32.mrb[0].mxu0
      %v619 = vadd.f32 0.0, %v618
      %v620 = vpop.f32.mrb[0].mxu0
      %621 = vdwg.mxu0
      %s623 = sor.u32 256, 16
      %624 = vrot.lane.b32.xlu0 %v616, %s623
      %v625 = vpop.permute.xlu0 %624
      %s627 = sor.u32 256, 24
      %628 = vrot.lane.b32.xlu0 %v619, %s627
      %v629 = vpop.permute.xlu0 %628
      %v632 = vunpack.c.l.b16 %v475
      %v633 = vunpack.c.l.b16 %v476
      %v634 = vpack.c.b16 %v633, %v632
      %v637 = vunpack.c.l.b16 %v483
      %v638 = vunpack.c.l.b16 %v484
      %v639 = vpack.c.b16 %v638, %v637
      %v641 = vsel %vm553, %v634, 0
      %v644 = vsel %vm553, %v639, 0
      %646 = vmatprep.subr.bf16.mxu0 0
      %647 = vmatpush1.bf16.xpose.msra.mxu0 %v644
      %648 = vmatprep.subr.bf16.mxu0 0
      %649 = vmatpush1.bf16.xpose.msra.mxu0 0
      %650 = vmatprep.subr.bf16.mxu0 0
      %651 = vmatpush1.bf16.xpose.msra.mxu0 0
      %652 = vmatprep.subr.bf16.mxu0 0
      %653 = vmatpush1.bf16.xpose.msra.mxu0 0
      %654 = vmatprep.subr.bf16.mxu0 0
      %655 = vmatpush1.bf16.xpose.msra.mxu0 0
      %656 = vmatprep.subr.bf16.mxu0 0
      %657 = vmatpush1.bf16.xpose.msra.mxu0 0
      %658 = vmatprep.subr.bf16.mxu0 0
      %659 = vmatpush1.bf16.xpose.msra.mxu0 0
      %660 = vmatprep.subr.bf16.mxu0 0
      %661 = vmatpush1.bf16.xpose.msra.mxu0 0
      %662 = vmatprep.subr.bf16.mxu0 0
      %663 = vmatpush1.bf16.xpose.msra.mxu0 0
      %664 = vmatprep.subr.bf16.mxu0 0
      %665 = vmatpush1.bf16.xpose.msra.mxu0 0
      %666 = vmatprep.subr.bf16.mxu0 0
      %667 = vmatpush1.bf16.xpose.msra.mxu0 0
      %668 = vmatprep.subr.bf16.mxu0 0
      %669 = vmatpush1.bf16.xpose.msra.mxu0 0
      %670 = vmatprep.subr.bf16.mxu0 0
      %671 = vmatpush1.bf16.xpose.msra.mxu0 0
      %672 = vmatprep.subr.bf16.mxu0 0
      %673 = vmatpush1.bf16.xpose.msra.mxu0 0
      %674 = vmatprep.subr.bf16.mxu0 0
      %675 = vmatpush1.bf16.xpose.msra.mxu0 0
      %676 = vmatprep.subr.bf16.mxu0 0
      %677 = vmatpush1.bf16.xpose.msra.mxu0 0
      %678 = vmatprep.mubr.bf16.mxu0 0
      %679 = vmatmul.mubr.bf16.gmra.mrb[0].mxu0 %v641
      %v680 = vpop.f32.mrb[0].mxu0
      %v681 = vadd.f32 %v625, %v680
      %v682 = vpop.f32.mrb[0].mxu0
      %v683 = vpop.f32.mrb[0].mxu0
      %v684 = vadd.f32 %v629, %v683
      %v685 = vpop.f32.mrb[0].mxu0
      %686 = vdwg.mxu0
      %v687 = vmul.f32 %v681, 0.25
      %v688 = vmul.f32 %v684, 0.25
      %v689 = vsel %vm553, %v687, -inf
      %690 = vmax.xlane.f32.xlu0 %v689
      %v691 = vpop.xlane.xlu0 %690
      %v692 = vsel %vm553, %v688, -inf
      %693 = vmax.xlane.f32.xlu0 %v692
      %v694 = vpop.xlane.xlu0 %693
      %v695 = vsub.f32 %v687, %v691
      %v696 = vsub.f32 %v688, %v694
      %v697 = vmul.f32 %v695, 1.442695
      %v698 = vpow.pop %v697
      %v699 = vmul.f32 %v696, 1.442695
      %v700 = vpow.pop %v699
      %v701 = vsel %vm553, %v698, 0.0
      %702 = vadd.xlane.f32.xlu0 %v701
      %v703 = vpop.xlane.xlu0 %702
      %v704 = vsel %vm553, %v700, 0.0
      %705 = vadd.xlane.f32.xlu0 %v704
      %v706 = vpop.xlane.xlu0 %705
      %v707 = vrcp.pop %v703
      %v708 = vrcp.pop %v706
      %v709 = vmul.f32 %v698, %v707
      %v710 = vmul.f32 %v700, %v708
      %v711 = vpack.c.bf16 %v710, %v709
      %v714 = vunpack.c.l.b16 %v487
      %v715 = vunpack.c.l.b16 %v488
      %v716 = vpack.c.b16 %v715, %v714
      %v719 = vsel %vm553, %v711, 0
      %721 = vmatprep.subr.bf16.mxu0 0
      %722 = vmatpush1.bf16.msra.mxu0 %v716
      %723 = vmatprep.subr.bf16.mxu0 0
      %724 = vmatpush1.bf16.msra.mxu0 0
      %725 = vmatprep.subr.bf16.mxu0 0
      %726 = vmatpush1.bf16.msra.mxu0 0
      %727 = vmatprep.subr.bf16.mxu0 0
      %728 = vmatpush1.bf16.msra.mxu0 0
      %729 = vmatprep.subr.bf16.mxu0 0
      %730 = vmatpush1.bf16.msra.mxu0 0
      %731 = vmatprep.subr.bf16.mxu0 0
      %732 = vmatpush1.bf16.msra.mxu0 0
      %733 = vmatprep.subr.bf16.mxu0 0
      %734 = vmatpush1.bf16.msra.mxu0 0
      %735 = vmatprep.subr.bf16.mxu0 0
      %736 = vmatpush1.bf16.msra.mxu0 0
      %737 = vmatprep.subr.bf16.mxu0 0
      %738 = vmatpush1.bf16.msra.mxu0 0
      %739 = vmatprep.subr.bf16.mxu0 0
      %740 = vmatpush1.bf16.msra.mxu0 0
      %741 = vmatprep.subr.bf16.mxu0 0
      %742 = vmatpush1.bf16.msra.mxu0 0
      %743 = vmatprep.subr.bf16.mxu0 0
      %744 = vmatpush1.bf16.msra.mxu0 0
      %745 = vmatprep.subr.bf16.mxu0 0
      %746 = vmatpush1.bf16.msra.mxu0 0
      %747 = vmatprep.subr.bf16.mxu0 0
      %748 = vmatpush1.bf16.msra.mxu0 0
      %749 = vmatprep.subr.bf16.mxu0 0
      %750 = vmatpush1.bf16.msra.mxu0 0
      %751 = vmatprep.subr.bf16.mxu0 0
      %752 = vmatpush1.bf16.msra.mxu0 0
      %753 = vmatprep.mubr.bf16.mxu0 0
      %754 = vmatmul.mubr.bf16.gmra.mrb[0].mxu0 %v719
      %v755 = vpop.f32.mrb[0].mxu0
      %v756 = vadd.f32 0.0, %v755
      %v757 = vpop.f32.mrb[0].mxu0
      %v758 = vpop.f32.mrb[0].mxu0
      %v759 = vadd.f32 0.0, %v758
      %v760 = vpop.f32.mrb[0].mxu0
      %761 = vdwg.mxu0
      %v762 = vld [vmem:[#allocation2] sm:$0xff]
      %v763 = vld [vmem:[#allocation2 + $0x8] sm:$0xff]
      %v764 = vpack.c.bf16 %v759, %v756
      %s765 = smul.addr %s472, 4
      %s766 = scalar_lea.vmem %s6, %s765
      %v767 = vld [vmem:[%s766] sm:$0xf]
      %v768 = vld [vmem:[%s766 + $0x4] sm:$0xf]
      %v771 = vunpack.c.l.b16 %v767
      %v772 = vunpack.c.l.b16 %v768
      %v773 = vpack.c.b16 %v772, %v771
      %v776 = vsel %vm553, %v764, 0
      %778 = vmatprep.subr.bf16.mxu0 0
      %779 = vmatpush1.bf16.msra.mxu0 %v773
      %780 = vmatprep.subr.bf16.mxu0 0
      %781 = vmatpush1.bf16.msra.mxu0 0
      %782 = vmatprep.subr.bf16.mxu0 0
      %783 = vmatpush1.bf16.msra.mxu0 0
      %784 = vmatprep.subr.bf16.mxu0 0
      %785 = vmatpush1.bf16.msra.mxu0 0
      %786 = vmatprep.subr.bf16.mxu0 0
      %787 = vmatpush1.bf16.msra.mxu0 0
      %788 = vmatprep.subr.bf16.mxu0 0
      %789 = vmatpush1.bf16.msra.mxu0 0
      %790 = vmatprep.subr.bf16.mxu0 0
      %791 = vmatpush1.bf16.msra.mxu0 0
      %792 = vmatprep.subr.bf16.mxu0 0
      %793 = vmatpush1.bf16.msra.mxu0 0
      %794 = vmatprep.subr.bf16.mxu0 0
      %795 = vmatpush1.bf16.msra.mxu0 0
      %796 = vmatprep.subr.bf16.mxu0 0
      %797 = vmatpush1.bf16.msra.mxu0 0
      %798 = vmatprep.subr.bf16.mxu0 0
      %799 = vmatpush1.bf16.msra.mxu0 0
      %800 = vmatprep.subr.bf16.mxu0 0
      %801 = vmatpush1.bf16.msra.mxu0 0
      %802 = vmatprep.subr.bf16.mxu0 0
      %803 = vmatpush1.bf16.msra.mxu0 0
      %804 = vmatprep.subr.bf16.mxu0 0
      %805 = vmatpush1.bf16.msra.mxu0 0
      %806 = vmatprep.subr.bf16.mxu0 0
      %807 = vmatpush1.bf16.msra.mxu0 0
      %808 = vmatprep.subr.bf16.mxu0 0
      %809 = vmatpush1.bf16.msra.mxu0 0
      %810 = vmatprep.mubr.bf16.mxu0 0
      %811 = vmatmul.mubr.bf16.gmra.mrb[0].mxu0 %v776
      %v812 = vpop.f32.mrb[0].mxu0
      %v813 = vadd.f32 0.0, %v812
      %v814 = vpop.f32.mrb[0].mxu0
      %v815 = vpop.f32.mrb[0].mxu0
      %v816 = vadd.f32 0.0, %v815
      %v817 = vpop.f32.mrb[0].mxu0
      %818 = vdwg.mxu0
      %v819 = vadd.f32 %v762, %v813
      %v820 = vadd.f32 %v763, %v816
      %vm821 = vcmask 523264
      %822 = vst.msk [vmem:[#allocation2] sm:$0xff] %vm821, %v819
      %823 = vst.msk [vmem:[#allocation2 + $0x8] sm:$0xff] %vm821, %v820
      %p824 = scmp.eq.s32.totalorder %s26, 3
      // Predicated region
      $region57: #{encoder_forward.15} parent=51 // pred_check
        %p825 = pneg %p824
      $region58: #{encoder_forward.15} parent=51 // pred_check_branch
        %827 = sbr.rel (%p825) target = $region60
      $region59: #{encoder_forward.15} parent=51 // pred_region
        %v828 = vld [vmem:[#allocation2] sm:$0xff]
        %v829 = vld [vmem:[#allocation2 + $0x8] sm:$0xff]
        %v830 = vld [vmem:[%s7] sm:$0x1]
        %v832 = vlaneseq
        %v833 = vshrl.u32 %v832, 7
        %v834 = vsub.s32 0, %v833
        %v835 = vrot.slane %v830, %v834
        %v837 = vadd.f32 %v828, %v835
        %v838 = vadd.f32 %v829, %v835
        %v839 = vld [vmem:[%s452] sm:$0xff]
        %v840 = vld [vmem:[%s452 + $0x8] sm:$0xff]
        %v841 = vadd.f32 %v837, %v839
        %v842 = vadd.f32 %v838, %v840
        %843 = vst.msk [vmem:[%s462] sm:$0xff] %vm821, %v841
        %844 = vst.msk [vmem:[%s462 + $0x8] sm:$0xff] %vm821, %v842
      $region60: #{encoder_forward.15} parent=51 // pred_fallthru
        _
      %s845 = smul.u32 2, %s25
      %p846 = scmp.lt.s32.totalorder %s24, 1
      %s847 = scalar_select %p846, %s24, 1
      %p848 = scmp.lt.s32.totalorder %s845, 1
      %s849 = scalar_select %p848, %s845, 1
      %s850 = smul.addr %s847, 2
      %s851 = sadd.s32 %s849, %s850
      %s852 = smul.addr %s851, 8
      %s853 = scalar_lea.vmem %s8, %s852
      // Predicated region
      $region61: #{encoder_forward.15} parent=51 // pred_check
        %p854 = pneg %p257
      $region62: #{encoder_forward.15} parent=51 // pred_check_branch
        %856 = sbr.rel (%p854) target = $region64
      $region63: #{encoder_forward.15} parent=51 // pred_region
        %s857 = smul.u32 2, %s25
      $region64: #{encoder_forward.15} parent=51 // pred_fallthru
        _
    $region52: #{encoder_forward.15} parent=5 // pred_fallthru
      _
    %p858 = scmp.le.s32.totalorder 2, %s14
    // Predicated region
    $region65: #{encoder_forward.15} parent=5 // pred_check
      %p859 = pneg %p858
    $region66: #{encoder_forward.15} parent=5 // pred_check_branch
      %861 = sbr.rel (%p859) target = $region68
    $region67: #{encoder_forward.15} parent=5 // pred_region
      %s862 = ssub.s32 %s14, 2
      // Predicated region
      $region69: #{encoder_forward.15} parent=67 // pred_check
        %p863 = pneg %p263
      $region70: #{encoder_forward.15} parent=67 // pred_check_branch
        %865 = sbr.rel (%p863) target = $region72
      $region71: #{encoder_forward.15} parent=67 // pred_region
        %s866 = smul.u32 2, %s28
        %p867 = scmp.lt.s32.totalorder %s27, 1
        %s868 = scalar_select %p867, %s27, 1
        %p869 = scmp.lt.s32.totalorder %s866, 1
        %s870 = scalar_select %p869, %s866, 1
        %s871 = smul.addr %s868, 2
        %s872 = sadd.s32 %s870, %s871
        %s873 = smul.addr %s872, 8
        %s874 = scalar_lea.vmem %s8, %s873
      $region72: #{encoder_forward.15} parent=67 // pred_fallthru
        _
    $region68: #{encoder_forward.15} parent=5 // pred_fallthru
      _
  $region6: #{encoder_forward.15} parent=0 // loop_footer
    %s18 = sadd.s32 1, %s14
  $region7: #{encoder_forward.15} parent=0 // loop_footer_branch
    %13 = sbr.rel target = $region3
  $region8: #{encoder_forward.15} parent=0 // loop_exit
    _

// kernel: encoder_forward.14
$region0: #{encoder_forward.14}
  #allocation0 [shape = 'u32[]', space=smem, size = 0x4, offset = 0x4, fixed_abs, tag = 'smem constant byte address 0x4 - core index']
  #allocation1 [shape = 'u32[144,128]{1,0:T(1,128)}', space=vmem, size = 0x12000, scoped, tag = 'internal scratch']
  %s0 = inlined_call_operand.vmem [shape: f32[2,16,64], index: 0, kind: input, shape index: {}]
  %s1 = inlined_call_operand.vmem [shape: f32[1,64], index: 1, kind: input, shape index: {}]
  %s2 = inlined_call_operand.vmem [shape: f32[1,64], index: 2, kind: input, shape index: {}]
  %s3 = inlined_call_operand.vmem [shape: bf16[64,192], index: 3, kind: input, shape index: {}]
  %s4 = inlined_call_operand.vmem [shape: f32[1,192], index: 4, kind: input, shape index: {}]
  %s5 = inlined_call_operand.vmem [shape: f32[1,64], index: 5, kind: input, shape index: {}]
  %s6 = inlined_call_operand.vmem [shape: f32[1,64], index: 6, kind: input, shape index: {}]
  %s7 = inlined_call_operand.vmem [shape: bf16[2,4,16,16], index: 7, kind: output, shape index: {0}]
  %s8 = inlined_call_operand.vmem [shape: bf16[2,4,16,16], index: 8, kind: output, shape index: {1}]
  %s9 = inlined_call_operand.vmem [shape: bf16[2,4,16,16], index: 9, kind: output, shape index: {2}]
  %s10 = inlined_call_operand.vmem [shape: bf16[2,4,16,16], index: 10, kind: output, shape index: {3}]
  %11 = xla_tuple %s7, %s8, %s9, %s10
  %s12 = sld [smem:[#allocation0]]
  $region85: #{encoder_forward.14} parent=0
    _
  %s14 = ssub.s32 1, %s12
  %s15 = scalar_select 0, %s14, %s12
  loop: start=0, step=1, limit=4
  $region2: #{encoder_forward.14} parent=0 // loop_pre_header
    _
  $region3: #{encoder_forward.14} parent=0 // loop_header
    %s17 = sphi 0, %s21
    %p18 = scmp.ge.s32.totalorder %s17, 4
    %s24 = sphi 0, %s36
    %s25 = sphi 0, %s32
    %s26 = sphi 0, %s24
    %s27 = sphi 0, %s25
    %s28 = sphi 0, %s26
    %s29 = sphi 0, %s27
    %s41 = sphi 0, %s43
    %s44 = sphi 0, %s41
    %s45 = sphi 0, %s44
    %s61 = sphi 0, %s45
    %s65 = sphi 0, %s65
    %s67 = sphi 0, %s65
    %s68 = sphi 0, %s67
    %s82 = sphi 0, %s68
    %s86 = sphi 0, %s86
    %s88 = sphi 0, %s86
    %s89 = sphi 0, %s88
    %s103 = sphi 0, %s89
    %s107 = sphi 0, %s107
    %s109 = sphi 0, %s107
    %s110 = sphi 0, %s109
    %s124 = sphi 0, %s110
    %s128 = sphi 0, %s128
    %s130 = sphi 0, %s128
    %s131 = sphi 0, %s130
    %s145 = sphi 0, %s131
    %s149 = sphi 0, %s149
    %s151 = sphi 0, %s149
    %s152 = sphi 0, %s151
    %s166 = sphi 0, %s152
    %s170 = sphi 0, %s170
    %s172 = sphi 0, %s170
    %s173 = sphi 0, %s172
    %s187 = sphi 0, %s173
    %s195 = sphi 0, %s197
    %s198 = sphi 0, %s195
    %s199 = sphi 0, %s198
    %s215 = sphi 0, %s199
    %s223 = sphi 0, %s225
    %s226 = sphi 0, %s223
    %s227 = sphi 0, %s226
    %s243 = sphi 0, %s227
    %s251 = sphi 0, %s253
    %s254 = sphi 0, %s251
    %s255 = sphi 0, %s254
    %s271 = sphi 0, %s255
    %s279 = sphi 0, %s281
    %s282 = sphi 0, %s279
    %s283 = sphi 0, %s282
    %s299 = sphi 0, %s283
  $region4: #{encoder_forward.14} parent=0 // loop_header_branch
    %20 = sbr.rel (%p18) target = $region8
  $region5: #{encoder_forward.14} parent=0 // loop_body
    %s22 = ssub.s32 %s17, 1
    %s23 = ssub.s32 %s17, 2
    %s30 = sadd.s32 1, %s25
    %p31 = scmp.ge.s32.totalorder %s30, 1
    %s32 = scalar_select %p31, 0, %s30
    %s33 = sadd.s32 1, %s24
    %s34 = scalar_select %p31, %s33, %s24
    %p35 = scmp.ge.s32.totalorder %s34, 2
    %s36 = scalar_select %p35, 0, %s34
    %s37 = ssub.s32 %s24, %s36
    %s38 = ssub.s32 %s25, %s32
    %s39 = sor.u32 %s37, %s38
    %p40 = scmp.eq.s32.totalorder %s39, 0
    %s42 = sadd.s32 %s41, 1
    %s43 = scalar_select %p40, %s41, %s42
    %p46 = pneg %p40
    %p47 = scmp.eq.s32.totalorder %s17, 1
    %p48 = por %p46, %p47
    %p49 = scmp.ne.s32.totalorder %s41, %s44
    %p50 = scmp.eq.s32.totalorder %s17, 0
    %p51 = por %p49, %p50
    %p52 = scmp.ne.s32.totalorder %s41, %s44
    %p53 = scmp.eq.s32.totalorder %s22, 1
    %p54 = por %p52, %p53
    %p55 = scmp.ne.s32.totalorder %s44, %s45
    %p56 = scmp.eq.s32.totalorder %s22, 0
    %p57 = por %p55, %p56
    %p58 = scmp.ne.s32.totalorder %s44, %s45
    %p59 = scmp.eq.s32.totalorder %s23, 1
    %p60 = por %p58, %p59
    %p62 = scmp.ne.s32.totalorder %s45, %s61
    %p63 = scmp.eq.s32.totalorder %s23, 0
    %p64 = por %p62, %p63
    %s66 = sadd.s32 %s65, 1
    %p69 = scmp.eq.s32.totalorder %s17, 1
    %p70 = scmp.ne.s32.totalorder %s65, %s67
    %p71 = scmp.eq.s32.totalorder %s17, 0
    %p72 = por %p70, %p71
    %p73 = scmp.ne.s32.totalorder %s65, %s67
    %p74 = scmp.eq.s32.totalorder %s22, 1
    %p75 = por %p73, %p74
    %p76 = scmp.ne.s32.totalorder %s67, %s68
    %p77 = scmp.eq.s32.totalorder %s22, 0
    %p78 = por %p76, %p77
    %p79 = scmp.ne.s32.totalorder %s67, %s68
    %p80 = scmp.eq.s32.totalorder %s23, 1
    %p81 = por %p79, %p80
    %p83 = scmp.ne.s32.totalorder %s68, %s82
    %p84 = scmp.eq.s32.totalorder %s23, 0
    %p85 = por %p83, %p84
    %s87 = sadd.s32 %s86, 1
    %p90 = scmp.eq.s32.totalorder %s17, 1
    %p91 = scmp.ne.s32.totalorder %s86, %s88
    %p92 = scmp.eq.s32.totalorder %s17, 0
    %p93 = por %p91, %p92
    %p94 = scmp.ne.s32.totalorder %s86, %s88
    %p95 = scmp.eq.s32.totalorder %s22, 1
    %p96 = por %p94, %p95
    %p97 = scmp.ne.s32.totalorder %s88, %s89
    %p98 = scmp.eq.s32.totalorder %s22, 0
    %p99 = por %p97, %p98
    %p100 = scmp.ne.s32.totalorder %s88, %s89
    %p101 = scmp.eq.s32.totalorder %s23, 1
    %p102 = por %p100, %p101
    %p104 = scmp.ne.s32.totalorder %s89, %s103
    %p105 = scmp.eq.s32.totalorder %s23, 0
    %p106 = por %p104, %p105
    %s108 = sadd.s32 %s107, 1
    %p111 = scmp.eq.s32.totalorder %s17, 1
    %p112 = scmp.ne.s32.totalorder %s107, %s109
    %p113 = scmp.eq.s32.totalorder %s17, 0
    %p114 = por %p112, %p113
    %p115 = scmp.ne.s32.totalorder %s107, %s109
    %p116 = scmp.eq.s32.totalorder %s22, 1
    %p117 = por %p115, %p116
    %p118 = scmp.ne.s32.totalorder %s109, %s110
    %p119 = scmp.eq.s32.totalorder %s22, 0
    %p120 = por %p118, %p119
    %p121 = scmp.ne.s32.totalorder %s109, %s110
    %p122 = scmp.eq.s32.totalorder %s23, 1
    %p123 = por %p121, %p122
    %p125 = scmp.ne.s32.totalorder %s110, %s124
    %p126 = scmp.eq.s32.totalorder %s23, 0
    %p127 = por %p125, %p126
    %s129 = sadd.s32 %s128, 1
    %p132 = scmp.eq.s32.totalorder %s17, 1
    %p133 = scmp.ne.s32.totalorder %s128, %s130
    %p134 = scmp.eq.s32.totalorder %s17, 0
    %p135 = por %p133, %p134
    %p136 = scmp.ne.s32.totalorder %s128, %s130
    %p137 = scmp.eq.s32.totalorder %s22, 1
    %p138 = por %p136, %p137
    %p139 = scmp.ne.s32.totalorder %s130, %s131
    %p140 = scmp.eq.s32.totalorder %s22, 0
    %p141 = por %p139, %p140
    %p142 = scmp.ne.s32.totalorder %s130, %s131
    %p143 = scmp.eq.s32.totalorder %s23, 1
    %p144 = por %p142, %p143
    %p146 = scmp.ne.s32.totalorder %s131, %s145
    %p147 = scmp.eq.s32.totalorder %s23, 0
    %p148 = por %p146, %p147
    %s150 = sadd.s32 %s149, 1
    %p153 = scmp.eq.s32.totalorder %s17, 1
    %p154 = scmp.ne.s32.totalorder %s149, %s151
    %p155 = scmp.eq.s32.totalorder %s17, 0
    %p156 = por %p154, %p155
    %p157 = scmp.ne.s32.totalorder %s149, %s151
    %p158 = scmp.eq.s32.totalorder %s22, 1
    %p159 = por %p157, %p158
    %p160 = scmp.ne.s32.totalorder %s151, %s152
    %p161 = scmp.eq.s32.totalorder %s22, 0
    %p162 = por %p160, %p161
    %p163 = scmp.ne.s32.totalorder %s151, %s152
    %p164 = scmp.eq.s32.totalorder %s23, 1
    %p165 = por %p163, %p164
    %p167 = scmp.ne.s32.totalorder %s152, %s166
    %p168 = scmp.eq.s32.totalorder %s23, 0
    %p169 = por %p167, %p168
    %s171 = sadd.s32 %s170, 1
    %p174 = scmp.eq.s32.totalorder %s17, 1
    %p175 = scmp.ne.s32.totalorder %s170, %s172
    %p176 = scmp.eq.s32.totalorder %s17, 0
    %p177 = por %p175, %p176
    %p178 = scmp.ne.s32.totalorder %s170, %s172
    %p179 = scmp.eq.s32.totalorder %s22, 1
    %p180 = por %p178, %p179
    %p181 = scmp.ne.s32.totalorder %s172, %s173
    %p182 = scmp.eq.s32.totalorder %s22, 0
    %p183 = por %p181, %p182
    %p184 = scmp.ne.s32.totalorder %s172, %s173
    %p185 = scmp.eq.s32.totalorder %s23, 1
    %p186 = por %p184, %p185
    %p188 = scmp.ne.s32.totalorder %s173, %s187
    %p189 = scmp.eq.s32.totalorder %s23, 0
    %p190 = por %p188, %p189
    %s191 = ssub.s32 %s24, %s36
    %s192 = ssub.s32 %s25, %s32
    %s193 = sor.u32 %s191, %s192
    %p194 = scmp.eq.s32.totalorder %s193, 0
    %s196 = sadd.s32 %s195, 1
    %s197 = scalar_select %p194, %s195, %s196
    %p200 = pneg %p194
    %p201 = scmp.eq.s32.totalorder %s17, 1
    %p202 = por %p200, %p201
    %p203 = scmp.ne.s32.totalorder %s195, %s198
    %p204 = scmp.eq.s32.totalorder %s17, 0
    %p205 = por %p203, %p204
    %p206 = scmp.ne.s32.totalorder %s195, %s198
    %p207 = scmp.eq.s32.totalorder %s22, 1
    %p208 = por %p206, %p207
    %p209 = scmp.ne.s32.totalorder %s198, %s199
    %p210 = scmp.eq.s32.totalorder %s22, 0
    %p211 = por %p209, %p210
    %p212 = scmp.ne.s32.totalorder %s198, %s199
    %p213 = scmp.eq.s32.totalorder %s23, 1
    %p214 = por %p212, %p213
    %p216 = scmp.ne.s32.totalorder %s199, %s215
    %p217 = scmp.eq.s32.totalorder %s23, 0
    %p218 = por %p216, %p217
    %s219 = ssub.s32 %s24, %s36
    %s220 = ssub.s32 %s25, %s32
    %s221 = sor.u32 %s219, %s220
    %p222 = scmp.eq.s32.totalorder %s221, 0
    %s224 = sadd.s32 %s223, 1
    %s225 = scalar_select %p222, %s223, %s224
    %p228 = pneg %p222
    %p229 = scmp.eq.s32.totalorder %s17, 1
    %p230 = por %p228, %p229
    %p231 = scmp.ne.s32.totalorder %s223, %s226
    %p232 = scmp.eq.s32.totalorder %s17, 0
    %p233 = por %p231, %p232
    %p234 = scmp.ne.s32.totalorder %s223, %s226
    %p235 = scmp.eq.s32.totalorder %s22, 1
    %p236 = por %p234, %p235
    %p237 = scmp.ne.s32.totalorder %s226, %s227
    %p238 = scmp.eq.s32.totalorder %s22, 0
    %p239 = por %p237, %p238
    %p240 = scmp.ne.s32.totalorder %s226, %s227
    %p241 = scmp.eq.s32.totalorder %s23, 1
    %p242 = por %p240, %p241
    %p244 = scmp.ne.s32.totalorder %s227, %s243
    %p245 = scmp.eq.s32.totalorder %s23, 0
    %p246 = por %p244, %p245
    %s247 = ssub.s32 %s24, %s36
    %s248 = ssub.s32 %s25, %s32
    %s249 = sor.u32 %s247, %s248
    %p250 = scmp.eq.s32.totalorder %s249, 0
    %s252 = sadd.s32 %s251, 1
    %s253 = scalar_select %p250, %s251, %s252
    %p256 = pneg %p250
    %p257 = scmp.eq.s32.totalorder %s17, 1
    %p258 = por %p256, %p257
    %p259 = scmp.ne.s32.totalorder %s251, %s254
    %p260 = scmp.eq.s32.totalorder %s17, 0
    %p261 = por %p259, %p260
    %p262 = scmp.ne.s32.totalorder %s251, %s254
    %p263 = scmp.eq.s32.totalorder %s22, 1
    %p264 = por %p262, %p263
    %p265 = scmp.ne.s32.totalorder %s254, %s255
    %p266 = scmp.eq.s32.totalorder %s22, 0
    %p267 = por %p265, %p266
    %p268 = scmp.ne.s32.totalorder %s254, %s255
    %p269 = scmp.eq.s32.totalorder %s23, 1
    %p270 = por %p268, %p269
    %p272 = scmp.ne.s32.totalorder %s255, %s271
    %p273 = scmp.eq.s32.totalorder %s23, 0
    %p274 = por %p272, %p273
    %s275 = ssub.s32 %s24, %s36
    %s276 = ssub.s32 %s25, %s32
    %s277 = sor.u32 %s275, %s276
    %p278 = scmp.eq.s32.totalorder %s277, 0
    %s280 = sadd.s32 %s279, 1
    %s281 = scalar_select %p278, %s279, %s280
    %p284 = pneg %p278
    %p285 = scmp.eq.s32.totalorder %s17, 1
    %p286 = por %p284, %p285
    %p287 = scmp.ne.s32.totalorder %s279, %s282
    %p288 = scmp.eq.s32.totalorder %s17, 0
    %p289 = por %p287, %p288
    %p290 = scmp.ne.s32.totalorder %s279, %s282
    %p291 = scmp.eq.s32.totalorder %s22, 1
    %p292 = por %p290, %p291
    %p293 = scmp.ne.s32.totalorder %s282, %s283
    %p294 = scmp.eq.s32.totalorder %s22, 0
    %p295 = por %p293, %p294
    %p296 = scmp.ne.s32.totalorder %s282, %s283
    %p297 = scmp.eq.s32.totalorder %s23, 1
    %p298 = por %p296, %p297
    %p300 = scmp.ne.s32.totalorder %s283, %s299
    %p301 = scmp.eq.s32.totalorder %s23, 0
    %p302 = por %p300, %p301
    %p303 = scmp.le.s32.totalorder 1, %s17
    %p304 = scmp.lt.s32.totalorder %s17, 3
    %p305 = pnand %p303, %p304
    %p306 = pneg %p305
    // Predicated region
    $region9: #{encoder_forward.14} parent=5 // pred_check
      _
    $region10: #{encoder_forward.14} parent=5 // pred_check_branch
      %308 = sbr.rel (%p305) target = $region12
    $region11: #{encoder_forward.14} parent=5 // pred_region
      %s309 = ssub.s32 %s17, 1
      // Predicated region
      $region13: #{encoder_forward.14} parent=11 // pred_check
        %p310 = pneg %p78
      $region14: #{encoder_forward.14} parent=11 // pred_check_branch
        %312 = sbr.rel (%p310) target = $region16
      $region15: #{encoder_forward.14} parent=11 // pred_region
        _
      $region16: #{encoder_forward.14} parent=11 // pred_fallthru
        _
      // Predicated region
      $region17: #{encoder_forward.14} parent=11 // pred_check
        %p313 = pneg %p99
      $region18: #{encoder_forward.14} parent=11 // pred_check_branch
        %315 = sbr.rel (%p313) target = $region20
      $region19: #{encoder_forward.14} parent=11 // pred_region
        _
      $region20: #{encoder_forward.14} parent=11 // pred_fallthru
        _
      // Predicated region
      $region21: #{encoder_forward.14} parent=11 // pred_check
        %p316 = pneg %p120
      $region22: #{encoder_forward.14} parent=11 // pred_check_branch
        %318 = sbr.rel (%p316) target = $region24
      $region23: #{encoder_forward.14} parent=11 // pred_region
        _
      $region24: #{encoder_forward.14} parent=11 // pred_fallthru
        _
      // Predicated region
      $region25: #{encoder_forward.14} parent=11 // pred_check
        %p319 = pneg %p141
      $region26: #{encoder_forward.14} parent=11 // pred_check_branch
        %321 = sbr.rel (%p319) target = $region28
      $region27: #{encoder_forward.14} parent=11 // pred_region
        _
      $region28: #{encoder_forward.14} parent=11 // pred_fallthru
        _
      // Predicated region
      $region29: #{encoder_forward.14} parent=11 // pred_check
        %p322 = pneg %p162
      $region30: #{encoder_forward.14} parent=11 // pred_check_branch
        %324 = sbr.rel (%p322) target = $region32
      $region31: #{encoder_forward.14} parent=11 // pred_region
        _
      $region32: #{encoder_forward.14} parent=11 // pred_fallthru
        _
      // Predicated region
      $region33: #{encoder_forward.14} parent=11 // pred_check
        %p325 = pneg %p183
      $region34: #{encoder_forward.14} parent=11 // pred_check_branch
        %327 = sbr.rel (%p325) target = $region36
      $region35: #{encoder_forward.14} parent=11 // pred_region
        _
      $region36: #{encoder_forward.14} parent=11 // pred_fallthru
        _
    $region12: #{encoder_forward.14} parent=5 // pred_fallthru
      _
    %p328 = scmp.lt.s32.totalorder %s17, 2
    // Predicated region
    $region37: #{encoder_forward.14} parent=5 // pred_check
      %p329 = pneg %p328
    $region38: #{encoder_forward.14} parent=5 // pred_check_branch
      %331 = sbr.rel (%p329) target = $region40
    $region39: #{encoder_forward.14} parent=5 // pred_region
      // Predicated region
      $region41: #{encoder_forward.14} parent=39 // pred_check
        %p332 = pneg %p51
      $region42: #{encoder_forward.14} parent=39 // pred_check_branch
        %334 = sbr.rel (%p332) target = $region44
      $region43: #{encoder_forward.14} parent=39 // pred_region
        %s335 = smul.u32 2, %s25
        %p336 = scmp.lt.s32.totalorder %s24, 1
        %s337 = scalar_select %p336, %s24, 1
        %p338 = scmp.lt.s32.totalorder %s335, 1
        %s339 = scalar_select %p338, %s335, 1
        %s340 = smul.addr %s337, 2
        %s341 = sadd.s32 %s339, %s340
        %s342 = smul.addr %s341, 8
        %s343 = scalar_lea.vmem %s0, %s342
        %s344 = smul.u32 2, %s25
      $region44: #{encoder_forward.14} parent=39 // pred_fallthru
        _
    $region40: #{encoder_forward.14} parent=5 // pred_fallthru
      _
    %p345 = scmp.le.s32.totalorder 1, %s17
    %p346 = scmp.lt.s32.totalorder %s17, 3
    %p347 = pnand %p345, %p346
    %p348 = pneg %p347
    // Predicated region
    $region45: #{encoder_forward.14} parent=5 // pred_check
      _
    $region46: #{encoder_forward.14} parent=5 // pred_check_branch
      %350 = sbr.rel (%p347) target = $region48
    $region47: #{encoder_forward.14} parent=5 // pred_region
      %s351 = ssub.s32 %s17, 1
      %s352 = smul.u32 2, %s27
      %p353 = scmp.lt.s32.totalorder %s26, 1
      %s354 = scalar_select %p353, %s26, 1
      %p355 = scmp.lt.s32.totalorder %s352, 1
      %s356 = scalar_select %p355, %s352, 1
      %s357 = smul.addr %s354, 2
      %s358 = sadd.s32 %s356, %s357
      %s359 = smul.addr %s358, 8
      %s360 = scalar_lea.vmem %s0, %s359
      %p361 = pneg %p57
      %p362 = pneg %p54
      %p363 = pneg %p78
      %p364 = pneg %p75
      %p365 = pneg %p99
      %p366 = pneg %p96
      %p367 = pneg %p120
      %p368 = pneg %p117
      %p369 = pneg %p141
      %p370 = pneg %p138
      %p371 = pneg %p162
      %p372 = pneg %p159
      %p373 = pneg %p183
      %p374 = pneg %p180
      %p375 = pneg %p211
      %p376 = pneg %p208
      %s377 = smul.u32 2, %s27
      %p378 = scmp.lt.s32.totalorder %s26, 1
      %s379 = scalar_select %p378, %s26, 1
      %p380 = scmp.lt.s32.totalorder %s377, 1
      %s381 = scalar_select %p380, %s377, 1
      %s382 = smul.addr %s379, 8
      %s383 = sadd.s32 %s381, %s382
      %s384 = smul.addr %s383, 4
      %s385 = scalar_lea.vmem %s7, %s384
      %p386 = pneg %p239
      %p387 = pneg %p236
      %s388 = smul.u32 2, %s27
      %p389 = scmp.lt.s32.totalorder %s26, 1
      %s390 = scalar_select %p389, %s26, 1
      %p391 = scmp.lt.s32.totalorder %s388, 1
      %s392 = scalar_select %p391, %s388, 1
      %s393 = smul.addr %s390, 8
      %s394 = sadd.s32 %s392, %s393
      %s395 = smul.addr %s394, 4
      %s396 = scalar_lea.vmem %s8, %s395
      %p397 = pneg %p267
      %p398 = pneg %p264
      %s399 = smul.u32 2, %s27
      %p400 = scmp.lt.s32.totalorder %s26, 1
      %s401 = scalar_select %p400, %s26, 1
      %p402 = scmp.lt.s32.totalorder %s399, 1
      %s403 = scalar_select %p402, %s399, 1
      %s404 = smul.addr %s401, 8
      %s405 = sadd.s32 %s403, %s404
      %s406 = smul.addr %s405, 4
      %s407 = scalar_lea.vmem %s9, %s406
      %p408 = pneg %p295
      %p409 = pneg %p292
      %s410 = smul.u32 2, %s27
      %p411 = scmp.lt.s32.totalorder %s26, 1
      %s412 = scalar_select %p411, %s26, 1
      %p413 = scmp.lt.s32.totalorder %s410, 1
      %s414 = scalar_select %p413, %s410, 1
      %s415 = smul.addr %s412, 8
      %s416 = sadd.s32 %s414, %s415
      %s417 = smul.addr %s416, 4
      %s418 = scalar_lea.vmem %s10, %s417
      %s419 = smul.u32 2, %s27
      %p420 = scmp.lt.s32.totalorder %s26, 1
      %s421 = scalar_select %p420, %s26, 1
      %p422 = scmp.lt.s32.totalorder %s419, 1
      %s423 = scalar_select %p422, %s419, 1
      %s424 = smul.addr %s421, 2
      %s425 = sadd.s32 %s423, %s424
      %s426 = smul.addr %s425, 8
      %s427 = scalar_lea.vmem %s0, %s426
      %s428 = smul.u32 2, %s27
      %s429 = smul.u32 2, %s27
      %p430 = scmp.lt.s32.totalorder %s26, 1
      %s431 = scalar_select %p430, %s26, 1
      %p432 = scmp.lt.s32.totalorder %s429, 1
      %s433 = scalar_select %p432, %s429, 1
      %s434 = smul.addr %s431, 8
      %s435 = sadd.s32 %s433, %s434
      %s436 = smul.addr %s435, 4
      %s437 = scalar_lea.vmem %s7, %s436
      %s438 = smul.u32 2, %s27
      %s439 = smul.u32 2, %s27
      %p440 = scmp.lt.s32.totalorder %s26, 1
      %s441 = scalar_select %p440, %s26, 1
      %p442 = scmp.lt.s32.totalorder %s439, 1
      %s443 = scalar_select %p442, %s439, 1
      %s444 = smul.addr %s441, 8
      %s445 = sadd.s32 %s443, %s444
      %s446 = smul.addr %s445, 4
      %s447 = scalar_lea.vmem %s8, %s446
      %s448 = smul.u32 2, %s27
      %s449 = smul.u32 2, %s27
      %p450 = scmp.lt.s32.totalorder %s26, 1
      %s451 = scalar_select %p450, %s26, 1
      %p452 = scmp.lt.s32.totalorder %s449, 1
      %s453 = scalar_select %p452, %s449, 1
      %s454 = smul.addr %s451, 8
      %s455 = sadd.s32 %s453, %s454
      %s456 = smul.addr %s455, 4
      %s457 = scalar_lea.vmem %s9, %s456
      %s458 = smul.u32 2, %s27
      %s459 = smul.u32 2, %s27
      %p460 = scmp.lt.s32.totalorder %s26, 1
      %s461 = scalar_select %p460, %s26, 1
      %p462 = scmp.lt.s32.totalorder %s459, 1
      %s463 = scalar_select %p462, %s459, 1
      %s464 = smul.addr %s461, 8
      %s465 = sadd.s32 %s463, %s464
      %s466 = smul.addr %s465, 4
      %s467 = scalar_lea.vmem %s10, %s466
      %s468 = smul.u32 2, %s27
      %v470 = vld [vmem:[%s427] sm:$0xff]
      %v471 = vld [vmem:[%s427 + $0x8] sm:$0xff]
      %v472 = vld [vmem:[%s1] sm:$0x1]
      %v473 = vld [vmem:[%s2] sm:$0x1]
      %vm474 = vcmask 523264
      %v475 = vsel %vm474, %v470, 0.0
      %476 = vadd.xlane.f32.xlu0 %v475
      %v477 = vpop.xlane.xlu0 %476
      %v478 = vsel %vm474, %v471, 0.0
      %479 = vadd.xlane.f32.xlu0 %v478
      %v480 = vpop.xlane.xlu0 %479
      %v481 = vrcp.pop 64.0
      %v482 = vmul.f32 %v477, %v481
      %v483 = vmul.f32 %v480, %v481
      %v484 = vsub.f32 %v470, %v482
      %v485 = vsub.f32 %v471, %v483
      %v486 = vmul.f32 %v484, %v484
      %v487 = vmul.f32 %v485, %v485
      %v488 = vsel %vm474, %v486, 0.0
      %489 = vadd.xlane.f32.xlu0 %v488
      %v490 = vpop.xlane.xlu0 %489
      %v491 = vsel %vm474, %v487, 0.0
      %492 = vadd.xlane.f32.xlu0 %v491
      %v493 = vpop.xlane.xlu0 %492
      %v494 = vmul.f32 %v490, %v481
      %v495 = vmul.f32 %v493, %v481
      %v496 = vadd.f32 %v494, 1e-05
      %v497 = vadd.f32 %v495, 1e-05
      %v498 = vrsqrt.pop %v496
      %v499 = vrsqrt.pop %v497
      %v500 = vmul.f32 %v484, %v498
      %v501 = vmul.f32 %v485, %v499
      %v503 = vlaneseq
      %v504 = vshrl.u32 %v503, 7
      %v505 = vsub.s32 0, %v504
      %v506 = vrot.slane %v472, %v505
      %v508 = vmul.f32 %v500, %v506
      %v509 = vmul.f32 %v501, %v506
      %v511 = vlaneseq
      %v512 = vshrl.u32 %v511, 7
      %v513 = vsub.s32 0, %v512
      %v514 = vrot.slane %v473, %v513
      %v516 = vadd.f32 %v508, %v514
      %v517 = vadd.f32 %v509, %v514
      %v518 = vpack.c.bf16 %v517, %v516
      %v519 = vld [vmem:[%s3] sm:$0xff]
      %v520 = vld [vmem:[%s3 + $0x8] sm:$0xff]
      %v521 = vld [vmem:[%s3 + $0x10] sm:$0xff]
      %v522 = vld [vmem:[%s3 + $0x18] sm:$0xff]
      %v523 = vld [vmem:[%s3 + $0x20] sm:$0xff]
      %v524 = vld [vmem:[%s3 + $0x28] sm:$0xff]
      %v525 = vld [vmem:[%s3 + $0x30] sm:$0xff]
      %v526 = vld [vmem:[%s3 + $0x38] sm:$0xff]
      %v527 = vld [vmem:[%s4] sm:$0x3]
      %v529 = vlaneseq
      %v530 = vshrl.u32 %v529, 7
      %v531 = vsub.s32 0, %v530
      %v532 = vrot.slane %v527, %v531
      %v533 = vlaneseq
      %v534 = vshrl.u32 %v533, 7
      %v535 = vsub.s32 1, %v534
      %v536 = vrot.slane %v527, %v535
      %v547 = vunpack.c.l.b16 %v519
      %v548 = vunpack.c.h.b16 %v519
      %v549 = vunpack.c.l.b16 %v520
      %v550 = vunpack.c.h.b16 %v520
      %v551 = vunpack.c.l.b16 %v521
      %v552 = vunpack.c.h.b16 %v521
      %v553 = vunpack.c.l.b16 %v522
      %v554 = vunpack.c.h.b16 %v522
      %v555 = vunpack.c.l.b16 %v523
      %v556 = vunpack.c.h.b16 %v523
      %v557 = vunpack.c.l.b16 %v524
      %v558 = vunpack.c.h.b16 %v524
      %v559 = vunpack.c.l.b16 %v525
      %v560 = vunpack.c.h.b16 %v525
      %v561 = vunpack.c.l.b16 %v526
      %v562 = vunpack.c.h.b16 %v526
      %v563 = vpack.c.b16 %v549, %v547
      %v564 = vpack.c.b16 %v550, %v548
      %v565 = vpack.c.b16 %v553, %v551
      %v566 = vpack.c.b16 %v554, %v552
      %v567 = vpack.c.b16 %v557, %v555
      %v568 = vpack.c.b16 %v558, %v556
      %v569 = vpack.c.b16 %v561, %v559
      %v570 = vpack.c.b16 %v562, %v560
      %v580 = vsel %vm474, %v518, 0
      %582 = vmatprep.subr.bf16.mxu0 %v564
      %583 = vmatpush1.bf16.msra.mxu0 %v563
      %584 = vmatprep.subr.bf16.mxu0 %v566
      %585 = vmatpush1.bf16.msra.mxu0 %v565
      %586 = vmatprep.subr.bf16.mxu0 %v568
      %587 = vmatpush1.bf16.msra.mxu0 %v567
      %588 = vmatprep.subr.bf16.mxu0 %v570
      %589 = vmatpush1.bf16.msra.mxu0 %v569
      %590 = vmatprep.subr.bf16.mxu0 0
      %591 = vmatpush1.bf16.msra.mxu0 0
      %592 = vmatprep.subr.bf16.mxu0 0
      %593 = vmatpush1.bf16.msra.mxu0 0
      %594 = vmatprep.subr.bf16.mxu0 0
      %595 = vmatpush1.bf16.msra.mxu0 0
      %596 = vmatprep.subr.bf16.mxu0 0
      %597 = vmatpush1.bf16.msra.mxu0 0
      %598 = vmatprep.subr.bf16.mxu0 0
      %599 = vmatpush1.bf16.msra.mxu0 0
      %600 = vmatprep.subr.bf16.mxu0 0
      %601 = vmatpush1.bf16.msra.mxu0 0
      %602 = vmatprep.subr.bf16.mxu0 0
      %603 = vmatpush1.bf16.msra.mxu0 0
      %604 = vmatprep.subr.bf16.mxu0 0
      %605 = vmatpush1.bf16.msra.mxu0 0
      %606 = vmatprep.subr.bf16.mxu0 0
      %607 = vmatpush1.bf16.msra.mxu0 0
      %608 = vmatprep.subr.bf16.mxu0 0
      %609 = vmatpush1.bf16.msra.mxu0 0
      %610 = vmatprep.subr.bf16.mxu0 0
      %611 = vmatpush1.bf16.msra.mxu0 0
      %612 = vmatprep.subr.bf16.mxu0 0
      %613 = vmatpush1.bf16.msra.mxu0 0
      %614 = vmatprep.mubr.bf16.mxu0 0
      %615 = vmatmul.mubr.bf16.gmra.mrb[0].mxu0 %v580
      %v616 = vpop.f32.mrb[0].mxu0
      %v617 = vadd.f32 %v532, %v616
      %v618 = vpop.f32.mrb[0].mxu0
      %v619 = vadd.f32 %v536, %v618
      %v620 = vpop.f32.mrb[0].mxu0
      %v621 = vadd.f32 %v532, %v620
      %v622 = vpop.f32.mrb[0].mxu0
      %v623 = vadd.f32 %v536, %v622
      %624 = vdwg.mxu0
      %v625 = vld [vmem:[%s5] sm:$0x1]
      %v627 = vlaneseq
      %v628 = vshrl.u32 %v627, 7
      %v629 = vsub.s32 0, %v628
      %v630 = vrot.slane %v625, %v629
      %v632 = vadd.f32 %v617, %v630
      %v633 = vadd.f32 %v621, %v630
      %v634 = vpack.c.bf16 %v633, %v632
      %v635 = vld [vmem:[%s6] sm:$0x1]
      %v637 = vlaneseq
      %v638 = vshrl.u32 %v637, 7
      %v639 = vsub.s32 0, %v638
      %v640 = vrot.slane %v635, %v639
      %v642 = vadd.f32 %v617, %v640
      %v643 = vadd.f32 %v621, %v640
      %v644 = vpack.c.bf16 %v643, %v642
      %v645 = vpack.c.bf16 %v621, %v617
      %v646 = vpack.c.bf16 %v623, %v619
      %v648 = vunpack.c.l.b16 %v634
      %v649 = vunpack.c.h.b16 %v634
      %v650 = vpack.c.b16 %v648, %v648
      %v651 = vpack.c.b16 %v649, %v649
      %vm654 = vcmask 125952
      %655 = vst.msk [vmem:[%s437] sm:$0xf] %vm654, %v650
      %656 = vst.msk [vmem:[%s437 + $0x4] sm:$0xf] %vm654, %v651
      %v658 = vunpack.c.l.b16 %v644
      %v659 = vunpack.c.h.b16 %v644
      %v660 = vpack.c.b16 %v658, %v658
      %v661 = vpack.c.b16 %v659, %v659
      %664 = vst.msk [vmem:[%s447] sm:$0xf] %vm654, %v660
      %665 = vst.msk [vmem:[%s447 + $0x4] sm:$0xf] %vm654, %v661
      %v667 = vunpack.c.l.b16 %v645
      %v668 = vunpack.c.h.b16 %v645
      %v669 = vpack.c.b16 %v667, %v667
      %v670 = vpack.c.b16 %v668, %v668
      %671 = vrot.lane.b32.xlu0 %v669, 64
      %v672 = vpop.permute.xlu0 %671
      %673 = vrot.lane.b32.xlu0 %v670, 64
      %v674 = vpop.permute.xlu0 %673
      %677 = vst.msk [vmem:[%s457] sm:$0xf] %vm654, %v672
      %678 = vst.msk [vmem:[%s457 + $0x4] sm:$0xf] %vm654, %v674
      %v680 = vunpack.c.l.b16 %v646
      %v681 = vunpack.c.h.b16 %v646
      %v682 = vpack.c.b16 %v680, %v680
      %v683 = vpack.c.b16 %v681, %v681
      %686 = vst.msk [vmem:[%s467] sm:$0xf] %vm654, %v682
      %687 = vst.msk [vmem:[%s467 + $0x4] sm:$0xf] %vm654, %v683
      %688 = vrot.lane.b32.xlu0 %v650, 112
      %v689 = vpop.permute.xlu0 %688
      %690 = vrot.lane.b32.xlu0 %v651, 112
      %v691 = vpop.permute.xlu0 %690
      %s694 = scalar_lea.vmem %s437, 8
      %695 = vst.msk [vmem:[%s694] sm:$0xf] %vm654, %v689
      %696 = vst.msk [vmem:[%s694 + $0x4] sm:$0xf] %vm654, %v691
      %697 = vrot.lane.b32.xlu0 %v660, 112
      %v698 = vpop.permute.xlu0 %697
      %699 = vrot.lane.b32.xlu0 %v661, 112
      %v700 = vpop.permute.xlu0 %699
      %s703 = scalar_lea.vmem %s447, 8
      %704 = vst.msk [vmem:[%s703] sm:$0xf] %vm654, %v698
      %705 = vst.msk [vmem:[%s703 + $0x4] sm:$0xf] %vm654, %v700
      %706 = vrot.lane.b32.xlu0 %v669, 48
      %v707 = vpop.permute.xlu0 %706
      %708 = vrot.lane.b32.xlu0 %v670, 48
      %v709 = vpop.permute.xlu0 %708
      %s712 = scalar_lea.vmem %s457, 8
      %713 = vst.msk [vmem:[%s712] sm:$0xf] %vm654, %v707
      %714 = vst.msk [vmem:[%s712 + $0x4] sm:$0xf] %vm654, %v709
      %715 = vrot.lane.b32.xlu0 %v682, 112
      %v716 = vpop.permute.xlu0 %715
      %717 = vrot.lane.b32.xlu0 %v683, 112
      %v718 = vpop.permute.xlu0 %717
      %s721 = scalar_lea.vmem %s467, 8
      %722 = vst.msk [vmem:[%s721] sm:$0xf] %vm654, %v716
      %723 = vst.msk [vmem:[%s721 + $0x4] sm:$0xf] %vm654, %v718
      %724 = vrot.lane.b32.xlu0 %v650, 96
      %v725 = vpop.permute.xlu0 %724
      %726 = vrot.lane.b32.xlu0 %v651, 96
      %v727 = vpop.permute.xlu0 %726
      %s730 = scalar_lea.vmem %s437, 16
      %731 = vst.msk [vmem:[%s730] sm:$0xf] %vm654, %v725
      %732 = vst.msk [vmem:[%s730 + $0x4] sm:$0xf] %vm654, %v727
      %733 = vrot.lane.b32.xlu0 %v660, 96
      %v734 = vpop.permute.xlu0 %733
      %735 = vrot.lane.b32.xlu0 %v661, 96
      %v736 = vpop.permute.xlu0 %735
      %s739 = scalar_lea.vmem %s447, 16
      %740 = vst.msk [vmem:[%s739] sm:$0xf] %vm654, %v734
      %741 = vst.msk [vmem:[%s739 + $0x4] sm:$0xf] %vm654, %v736
      %742 = vrot.lane.b32.xlu0 %v669, 32
      %v743 = vpop.permute.xlu0 %742
      %744 = vrot.lane.b32.xlu0 %v670, 32
      %v745 = vpop.permute.xlu0 %744
      %s748 = scalar_lea.vmem %s457, 16
      %749 = vst.msk [vmem:[%s748] sm:$0xf] %vm654, %v743
      %750 = vst.msk [vmem:[%s748 + $0x4] sm:$0xf] %vm654, %v745
      %751 = vrot.lane.b32.xlu0 %v682, 96
      %v752 = vpop.permute.xlu0 %751
      %753 = vrot.lane.b32.xlu0 %v683, 96
      %v754 = vpop.permute.xlu0 %753
      %s757 = scalar_lea.vmem %s467, 16
      %758 = vst.msk [vmem:[%s757] sm:$0xf] %vm654, %v752
      %759 = vst.msk [vmem:[%s757 + $0x4] sm:$0xf] %vm654, %v754
      %760 = vrot.lane.b32.xlu0 %v650, 80
      %v761 = vpop.permute.xlu0 %760
      %762 = vrot.lane.b32.xlu0 %v651, 80
      %v763 = vpop.permute.xlu0 %762
      %s766 = scalar_lea.vmem %s437, 24
      %767 = vst.msk [vmem:[%s766] sm:$0xf] %vm654, %v761
      %768 = vst.msk [vmem:[%s766 + $0x4] sm:$0xf] %vm654, %v763
      %769 = vrot.lane.b32.xlu0 %v660, 80
      %v770 = vpop.permute.xlu0 %769
      %771 = vrot.lane.b32.xlu0 %v661, 80
      %v772 = vpop.permute.xlu0 %771
      %s775 = scalar_lea.vmem %s447, 24
      %776 = vst.msk [vmem:[%s775] sm:$0xf] %vm654, %v770
      %777 = vst.msk [vmem:[%s775 + $0x4] sm:$0xf] %vm654, %v772
      %778 = vrot.lane.b32.xlu0 %v669, 16
      %v779 = vpop.permute.xlu0 %778
      %780 = vrot.lane.b32.xlu0 %v670, 16
      %v781 = vpop.permute.xlu0 %780
      %s784 = scalar_lea.vmem %s457, 24
      %785 = vst.msk [vmem:[%s784] sm:$0xf] %vm654, %v779
      %786 = vst.msk [vmem:[%s784 + $0x4] sm:$0xf] %vm654, %v781
      %787 = vrot.lane.b32.xlu0 %v682, 80
      %v788 = vpop.permute.xlu0 %787
      %789 = vrot.lane.b32.xlu0 %v683, 80
      %v790 = vpop.permute.xlu0 %789
      %s793 = scalar_lea.vmem %s467, 24
      %794 = vst.msk [vmem:[%s793] sm:$0xf] %vm654, %v788
      %795 = vst.msk [vmem:[%s793 + $0x4] sm:$0xf] %vm654, %v790
      %s796 = smul.u32 2, %s27
      %p797 = scmp.lt.s32.totalorder %s26, 1
      %s798 = scalar_select %p797, %s26, 1
      %p799 = scmp.lt.s32.totalorder %s796, 1
      %s800 = scalar_select %p799, %s796, 1
      %s801 = smul.addr %s798, 8
      %s802 = sadd.s32 %s800, %s801
      %s803 = smul.addr %s802, 4
      %s804 = scalar_lea.vmem %s7, %s803
      %s805 = smul.u32 2, %s27
      %p806 = scmp.lt.s32.totalorder %s26, 1
      %s807 = scalar_select %p806, %s26, 1
      %p808 = scmp.lt.s32.totalorder %s805, 1
      %s809 = scalar_select %p808, %s805, 1
      %s810 = smul.addr %s807, 8
      %s811 = sadd.s32 %s809, %s810
      %s812 = smul.addr %s811, 4
      %s813 = scalar_lea.vmem %s8, %s812
      %s814 = smul.u32 2, %s27
      %p815 = scmp.lt.s32.totalorder %s26, 1
      %s816 = scalar_select %p815, %s26, 1
      %p817 = scmp.lt.s32.totalorder %s814, 1
      %s818 = scalar_select %p817, %s814, 1
      %s819 = smul.addr %s816, 8
      %s820 = sadd.s32 %s818, %s819
      %s821 = smul.addr %s820, 4
      %s822 = scalar_lea.vmem %s9, %s821
      %s823 = smul.u32 2, %s27
      %p824 = scmp.lt.s32.totalorder %s26, 1
      %s825 = scalar_select %p824, %s26, 1
      %p826 = scmp.lt.s32.totalorder %s823, 1
      %s827 = scalar_select %p826, %s823, 1
      %s828 = smul.addr %s825, 8
      %s829 = sadd.s32 %s827, %s828
      %s830 = smul.addr %s829, 4
      %s831 = scalar_lea.vmem %s10, %s830
      // Predicated region
      $region49: #{encoder_forward.14} parent=47 // pred_check
        %p832 = pneg %p208
      $region50: #{encoder_forward.14} parent=47 // pred_check_branch
        %834 = sbr.rel (%p832) target = $region52
      $region51: #{encoder_forward.14} parent=47 // pred_region
        %s835 = smul.u32 2, %s27
      $region52: #{encoder_forward.14} parent=47 // pred_fallthru
        _
      // Predicated region
      $region53: #{encoder_forward.14} parent=47 // pred_check
        %p836 = pneg %p236
      $region54: #{encoder_forward.14} parent=47 // pred_check_branch
        %838 = sbr.rel (%p836) target = $region56
      $region55: #{encoder_forward.14} parent=47 // pred_region
        %s839 = smul.u32 2, %s27
      $region56: #{encoder_forward.14} parent=47 // pred_fallthru
        _
      // Predicated region
      $region57: #{encoder_forward.14} parent=47 // pred_check
        %p840 = pneg %p264
      $region58: #{encoder_forward.14} parent=47 // pred_check_branch
        %842 = sbr.rel (%p840) target = $region60
      $region59: #{encoder_forward.14} parent=47 // pred_region
        %s843 = smul.u32 2, %s27
      $region60: #{encoder_forward.14} parent=47 // pred_fallthru
        _
      // Predicated region
      $region61: #{encoder_forward.14} parent=47 // pred_check
        %p844 = pneg %p292
      $region62: #{encoder_forward.14} parent=47 // pred_check_branch
        %846 = sbr.rel (%p844) target = $region64
      $region63: #{encoder_forward.14} parent=47 // pred_region
        %s847 = smul.u32 2, %s27
      $region64: #{encoder_forward.14} parent=47 // pred_fallthru
        _
    $region48: #{encoder_forward.14} parent=5 // pred_fallthru
      _
    %p848 = scmp.le.s32.totalorder 2, %s17
    // Predicated region
    $region65: #{encoder_forward.14} parent=5 // pred_check
      %p849 = pneg %p848
    $region66: #{encoder_forward.14} parent=5 // pred_check_branch
      %851 = sbr.rel (%p849) target = $region68
    $region67: #{encoder_forward.14} parent=5 // pred_region
      %s852 = ssub.s32 %s17, 2
      // Predicated region
      $region69: #{encoder_forward.14} parent=67 // pred_check
        %p853 = pneg %p214
      $region70: #{encoder_forward.14} parent=67 // pred_check_branch
        %855 = sbr.rel (%p853) target = $region72
      $region71: #{encoder_forward.14} parent=67 // pred_region
        %s856 = smul.u32 2, %s29
        %p857 = scmp.lt.s32.totalorder %s28, 1
        %s858 = scalar_select %p857, %s28, 1
        %p859 = scmp.lt.s32.totalorder %s856, 1
        %s860 = scalar_select %p859, %s856, 1
        %s861 = smul.addr %s858, 8
        %s862 = sadd.s32 %s860, %s861
        %s863 = smul.addr %s862, 4
        %s864 = scalar_lea.vmem %s7, %s863
      $region72: #{encoder_forward.14} parent=67 // pred_fallthru
        _
      // Predicated region
      $region73: #{encoder_forward.14} parent=67 // pred_check
        %p865 = pneg %p242
      $region74: #{encoder_forward.14} parent=67 // pred_check_branch
        %867 = sbr.rel (%p865) target = $region76
      $region75: #{encoder_forward.14} parent=67 // pred_region
        %s868 = smul.u32 2, %s29
        %p869 = scmp.lt.s32.totalorder %s28, 1
        %s870 = scalar_select %p869, %s28, 1
        %p871 = scmp.lt.s32.totalorder %s868, 1
        %s872 = scalar_select %p871, %s868, 1
        %s873 = smul.addr %s870, 8
        %s874 = sadd.s32 %s872, %s873
        %s875 = smul.addr %s874, 4
        %s876 = scalar_lea.vmem %s8, %s875
      $region76: #{encoder_forward.14} parent=67 // pred_fallthru
        _
      // Predicated region
      $region77: #{encoder_forward.14} parent=67 // pred_check
        %p877 = pneg %p270
      $region78: #{encoder_forward.14} parent=67 // pred_check_branch
        %879 = sbr.rel (%p877) target = $region80
      $region79: #{encoder_forward.14} parent=67 // pred_region
        %s880 = smul.u32 2, %s29
        %p881 = scmp.lt.s32.totalorder %s28, 1
        %s882 = scalar_select %p881, %s28, 1
        %p883 = scmp.lt.s32.totalorder %s880, 1
        %s884 = scalar_select %p883, %s880, 1
        %s885 = smul.addr %s882, 8
        %s886 = sadd.s32 %s884, %s885
        %s887 = smul.addr %s886, 4
        %s888 = scalar_lea.vmem %s9, %s887
      $region80: #{encoder_forward.14} parent=67 // pred_fallthru
        _
      // Predicated region
      $region81: #{encoder_forward.14} parent=67 // pred_check
        %p889 = pneg %p298
      $region82: #{encoder_forward.14} parent=67 // pred_check_branch
        %891 = sbr.rel (%p889) target = $region84
      $region83: #{encoder_forward.14} parent=67 // pred_region
        %s892 = smul.u32 2, %s29
        %p893 = scmp.lt.s32.totalorder %s28, 1
        %s894 = scalar_select %p893, %s28, 1
        %p895 = scmp.lt.s32.totalorder %s892, 1
        %s896 = scalar_select %p895, %s892, 1
        %s897 = smul.addr %s894, 8
        %s898 = sadd.s32 %s896, %s897
        %s899 = smul.addr %s898, 4
        %s900 = scalar_lea.vmem %s10, %s899
      $region84: #{encoder_forward.14} parent=67 // pred_fallthru
        _
    $region68: #{encoder_forward.14} parent=5 // pred_fallthru
      _
  $region6: #{encoder_forward.14} parent=0 // loop_footer
    %s21 = sadd.s32 1, %s17
  $region7: #{encoder_forward.14} parent=0 // loop_footer_branch
    %16 = sbr.rel target = $region3
  $region8: #{encoder_forward.14} parent=0 // loop_exit
    _

// kernel: encoder_forward.23
$region0: #{encoder_forward.23}
  #allocation0 [shape = 'u32[]', space=smem, size = 0x4, offset = 0x4, fixed_abs, tag = 'smem constant byte address 0x4 - core index']
  #allocation1 [shape = 'u32[144,128]{1,0:T(1,128)}', space=vmem, size = 0x12000, scoped, tag = 'internal scratch']
  %s0 = inlined_call_operand.vmem [shape: f32[32,64], index: 0, kind: input, shape index: {}]
  %s1 = inlined_call_operand.vmem [shape: f32[1,64], index: 1, kind: input, shape index: {}]
  %s2 = inlined_call_operand.vmem [shape: f32[1,64], index: 2, kind: input, shape index: {}]
  %s3 = inlined_call_operand.hbm [shape: f32[32,64], index: 3, kind: output, shape index: {}]
  %s4 = sld [smem:[#allocation0]]
  $region22: #{encoder_forward.23} parent=0
    _
  %s6 = ssub.s32 1, %s4
  %s7 = scalar_select 0, %s6, %s4
  $region1: #{encoder_forward.23} parent=0
    #allocation2 [shape = 'u8[16384]{0}', space=vmem, size = 0x4000, scoped, tag = 'output window, operand 0, single buffered']
    #allocation3 [shape = 's32[1]{0}', space=sflag, size = 0x4, scoped, tag = 'scoped memory for encoder_forward.23']
    %8 = vsyncpa [#allocation3], 0
    // Predicated region
    $region2: #{encoder_forward.23} parent=1 // pred_check
      _
    $region3: #{encoder_forward.23} parent=1 // pred_check_branch
      %10 = sbr.rel (0) target = $region5
    $region4: #{encoder_forward.23} parent=1 // pred_region
      _
    $region5: #{encoder_forward.23} parent=1 // pred_fallthru
      _
    // Predicated region
    $region6: #{encoder_forward.23} parent=1 // pred_check
      _
    $region7: #{encoder_forward.23} parent=1 // pred_check_branch
      %12 = sbr.rel (0) target = $region9
    $region8: #{encoder_forward.23} parent=1 // pred_region
      _
    $region9: #{encoder_forward.23} parent=1 // pred_fallthru
      _
    // Predicated region
    $region10: #{encoder_forward.23} parent=1 // pred_check
      _
    $region11: #{encoder_forward.23} parent=1 // pred_check_branch
      %14 = sbr.rel (0) target = $region13
    $region12: #{encoder_forward.23} parent=1 // pred_region
      _
    $region13: #{encoder_forward.23} parent=1 // pred_fallthru
      _
    %v15 = vld [vmem:[%s0] sm:$0xff]
    %v16 = vld [vmem:[%s0 + $0x8] sm:$0xff]
    %v17 = vld [vmem:[%s0 + $0x10] sm:$0xff]
    %v18 = vld [vmem:[%s0 + $0x18] sm:$0xff]
    %v19 = vld [vmem:[%s1] sm:$0x1]
    %v20 = vld [vmem:[%s2] sm:$0x1]
    %vm21 = vcmask 523264
    %v22 = vsel %vm21, %v15, 0.0
    %23 = vadd.xlane.f32.xlu0 %v22
    %v24 = vpop.xlane.xlu0 %23
    %v25 = vsel %vm21, %v16, 0.0
    %26 = vadd.xlane.f32.xlu0 %v25
    %v27 = vpop.xlane.xlu0 %26
    %v28 = vsel %vm21, %v17, 0.0
    %29 = vadd.xlane.f32.xlu0 %v28
    %v30 = vpop.xlane.xlu0 %29
    %v31 = vsel %vm21, %v18, 0.0
    %32 = vadd.xlane.f32.xlu0 %v31
    %v33 = vpop.xlane.xlu0 %32
    %v34 = vrcp.pop 64.0
    %v35 = vmul.f32 %v24, %v34
    %v36 = vmul.f32 %v27, %v34
    %v37 = vmul.f32 %v30, %v34
    %v38 = vmul.f32 %v33, %v34
    %v39 = vsub.f32 %v15, %v35
    %v40 = vsub.f32 %v16, %v36
    %v41 = vsub.f32 %v17, %v37
    %v42 = vsub.f32 %v18, %v38
    %v43 = vmul.f32 %v39, %v39
    %v44 = vmul.f32 %v40, %v40
    %v45 = vmul.f32 %v41, %v41
    %v46 = vmul.f32 %v42, %v42
    %v47 = vsel %vm21, %v43, 0.0
    %48 = vadd.xlane.f32.xlu0 %v47
    %v49 = vpop.xlane.xlu0 %48
    %v50 = vsel %vm21, %v44, 0.0
    %51 = vadd.xlane.f32.xlu0 %v50
    %v52 = vpop.xlane.xlu0 %51
    %v53 = vsel %vm21, %v45, 0.0
    %54 = vadd.xlane.f32.xlu0 %v53
    %v55 = vpop.xlane.xlu0 %54
    %v56 = vsel %vm21, %v46, 0.0
    %57 = vadd.xlane.f32.xlu0 %v56
    %v58 = vpop.xlane.xlu0 %57
    %v59 = vmul.f32 %v49, %v34
    %v60 = vmul.f32 %v52, %v34
    %v61 = vmul.f32 %v55, %v34
    %v62 = vmul.f32 %v58, %v34
    %v63 = vadd.f32 %v59, 1e-05
    %v64 = vadd.f32 %v60, 1e-05
    %v65 = vadd.f32 %v61, 1e-05
    %v66 = vadd.f32 %v62, 1e-05
    %v67 = vrsqrt.pop %v63
    %v68 = vrsqrt.pop %v64
    %v69 = vrsqrt.pop %v65
    %v70 = vrsqrt.pop %v66
    %v71 = vmul.f32 %v39, %v67
    %v72 = vmul.f32 %v40, %v68
    %v73 = vmul.f32 %v41, %v69
    %v74 = vmul.f32 %v42, %v70
    %v76 = vlaneseq
    %v77 = vshrl.u32 %v76, 7
    %v78 = vsub.s32 0, %v77
    %v79 = vrot.slane %v19, %v78
    %v81 = vmul.f32 %v71, %v79
    %v82 = vmul.f32 %v72, %v79
    %v83 = vmul.f32 %v73, %v79
    %v84 = vmul.f32 %v74, %v79
    %v86 = vlaneseq
    %v87 = vshrl.u32 %v86, 7
    %v88 = vsub.s32 0, %v87
    %v89 = vrot.slane %v20, %v88
    %v91 = vadd.f32 %v81, %v89
    %v92 = vadd.f32 %v82, %v89
    %v93 = vadd.f32 %v83, %v89
    %v94 = vadd.f32 %v84, %v89
    %95 = vst.msk [vmem:[#allocation2] sm:$0xff] %vm21, %v91
    %96 = vst.msk [vmem:[#allocation2 + $0x8] sm:$0xff] %vm21, %v92
    %97 = vst.msk [vmem:[#allocation2 + $0x10] sm:$0xff] %vm21, %v93
    %98 = vst.msk [vmem:[#allocation2 + $0x18] sm:$0xff] %vm21, %v94
    // Predicated region
    $region14: #{encoder_forward.23} parent=1 // pred_check
      _
    $region15: #{encoder_forward.23} parent=1 // pred_check_branch
      %100 = sbr.rel (0) target = $region17
    $region16: #{encoder_forward.23} parent=1 // pred_region
      %s102 = ssub.s32 512, 512
      %103 = vsyncadd [#allocation3], %s102
      %s104 = sshll.u32 [#allocation2], 4
      %s105 = int_to_ptr.vmem [resolvable:$true] %s104
      %110 = dma.vmem_to_hbm [thread:$0]  %s105, 512, %s3, [#allocation3], 128, 128, 8
    $region17: #{encoder_forward.23} parent=1 // pred_fallthru
      _
    // Predicated region
    $region18: #{encoder_forward.23} parent=1 // pred_check
      _
    $region19: #{encoder_forward.23} parent=1 // pred_check_branch
      %112 = sbr.rel (0) target = $region21
    $region20: #{encoder_forward.23} parent=1 // pred_region
      %113 = dma.done [#allocation3], 512
    $region21: #{encoder_forward.23} parent=1 // pred_fallthru
      _
    %114 = vsyncpa [#allocation3], 1

// kernel: encoder_forward.16
$region0: #{encoder_forward.16}
  #allocation0 [shape = 'u32[]', space=smem, size = 0x4, offset = 0x4, fixed_abs, tag = 'smem constant byte address 0x4 - core index']
  #allocation1 [shape = 'u32[144,128]{1,0:T(1,128)}', space=vmem, size = 0x12000, scoped, tag = 'internal scratch']
  #allocation2 [shape = 'f32[20,64]{1,0:T(8,128)}', space=vmem, size = 0x3000, scoped, tag = 'scratch operand']
  %s0 = inlined_call_operand.vmem [shape: f32[2,16,64], index: 0, kind: input, shape index: {}]
  %s1 = inlined_call_operand.vmem [shape: f32[1,64], index: 1, kind: input, shape index: {}]
  %s2 = inlined_call_operand.vmem [shape: f32[1,64], index: 2, kind: input, shape index: {}]
  %s3 = inlined_call_operand.vmem [shape: bf16[64,128], index: 3, kind: input, shape index: {}]
  %s4 = inlined_call_operand.vmem [shape: f32[5,64], index: 4, kind: input, shape index: {}]
  %s5 = inlined_call_operand.vmem [shape: f32[1,64], index: 5, kind: input, shape index: {}]
  %s6 = inlined_call_operand.vmem [shape: f32[1,64], index: 6, kind: input, shape index: {}]
  %s7 = inlined_call_operand.vmem [shape: bf16[64,64], index: 7, kind: input, shape index: {}]
  %s8 = inlined_call_operand.vmem [shape: f32[2,16,64], index: 8, kind: output, shape index: {}]
  %s9 = sld [smem:[#allocation0]]
  $region65: #{encoder_forward.16} parent=0
    _
  %s11 = ssub.s32 1, %s9
  %s12 = scalar_select 0, %s11, %s9
  loop: start=0, step=1, limit=4
  $region2: #{encoder_forward.16} parent=0 // loop_pre_header
    _
  $region3: #{encoder_forward.16} parent=0 // loop_header
    %s14 = sphi 0, %s18
    %p15 = scmp.ge.s32.totalorder %s14, 4
    %s24 = sphi 0, %s26
    %s27 = sphi 0, %s24
    %s28 = sphi 0, %s27
    %s44 = sphi 0, %s28
    %s48 = sphi 0, %s48
    %s50 = sphi 0, %s48
    %s51 = sphi 0, %s50
    %s65 = sphi 0, %s51
    %s69 = sphi 0, %s69
    %s71 = sphi 0, %s69
    %s72 = sphi 0, %s71
    %s86 = sphi 0, %s72
    %s90 = sphi 0, %s90
    %s92 = sphi 0, %s90
    %s93 = sphi 0, %s92
    %s107 = sphi 0, %s93
    %s111 = sphi 0, %s111
    %s113 = sphi 0, %s111
    %s114 = sphi 0, %s113
    %s128 = sphi 0, %s114
    %s132 = sphi 0, %s132
    %s134 = sphi 0, %s132
    %s135 = sphi 0, %s134
    %s149 = sphi 0, %s135
    %s153 = sphi 0, %s153
    %s155 = sphi 0, %s153
    %s156 = sphi 0, %s155
    %s170 = sphi 0, %s156
    %s174 = sphi 0, %s174
    %s176 = sphi 0, %s174
    %s177 = sphi 0, %s176
    %s191 = sphi 0, %s177
    %s197 = sphi 0, %s199
    %s200 = sphi 0, %s197
    %s201 = sphi 0, %s200
    %s217 = sphi 0, %s201
  $region4: #{encoder_forward.16} parent=0 // loop_header_branch
    %17 = sbr.rel (%p15) target = $region8
  $region5: #{encoder_forward.16} parent=0 // loop_body
    %s19 = ssub.s32 %s14, 1
    %s20 = ssub.s32 %s14, 2
    %s21 = sadd.s32 %s14, 1
    %s22 = ssub.s32 %s14, %s21
    %p23 = scmp.eq.s32.totalorder %s22, 0
    %s25 = sadd.s32 %s24, 1
    %s26 = scalar_select %p23, %s24, %s25
    %p29 = pneg %p23
    %p30 = scmp.eq.s32.totalorder %s14, 1
    %p31 = por %p29, %p30
    %p32 = scmp.ne.s32.totalorder %s24, %s27
    %p33 = scmp.eq.s32.totalorder %s14, 0
    %p34 = por %p32, %p33
    %p35 = scmp.ne.s32.totalorder %s24, %s27
    %p36 = scmp.eq.s32.totalorder %s19, 1
    %p37 = por %p35, %p36
    %p38 = scmp.ne.s32.totalorder %s27, %s28
    %p39 = scmp.eq.s32.totalorder %s19, 0
    %p40 = por %p38, %p39
    %p41 = scmp.ne.s32.totalorder %s27, %s28
    %p42 = scmp.eq.s32.totalorder %s20, 1
    %p43 = por %p41, %p42
    %p45 = scmp.ne.s32.totalorder %s28, %s44
    %p46 = scmp.eq.s32.totalorder %s20, 0
    %p47 = por %p45, %p46
    %s49 = sadd.s32 %s48, 1
    %p52 = scmp.eq.s32.totalorder %s14, 1
    %p53 = scmp.ne.s32.totalorder %s48, %s50
    %p54 = scmp.eq.s32.totalorder %s14, 0
    %p55 = por %p53, %p54
    %p56 = scmp.ne.s32.totalorder %s48, %s50
    %p57 = scmp.eq.s32.totalorder %s19, 1
    %p58 = por %p56, %p57
    %p59 = scmp.ne.s32.totalorder %s50, %s51
    %p60 = scmp.eq.s32.totalorder %s19, 0
    %p61 = por %p59, %p60
    %p62 = scmp.ne.s32.totalorder %s50, %s51
    %p63 = scmp.eq.s32.totalorder %s20, 1
    %p64 = por %p62, %p63
    %p66 = scmp.ne.s32.totalorder %s51, %s65
    %p67 = scmp.eq.s32.totalorder %s20, 0
    %p68 = por %p66, %p67
    %s70 = sadd.s32 %s69, 1
    %p73 = scmp.eq.s32.totalorder %s14, 1
    %p74 = scmp.ne.s32.totalorder %s69, %s71
    %p75 = scmp.eq.s32.totalorder %s14, 0
    %p76 = por %p74, %p75
    %p77 = scmp.ne.s32.totalorder %s69, %s71
    %p78 = scmp.eq.s32.totalorder %s19, 1
    %p79 = por %p77, %p78
    %p80 = scmp.ne.s32.totalorder %s71, %s72
    %p81 = scmp.eq.s32.totalorder %s19, 0
    %p82 = por %p80, %p81
    %p83 = scmp.ne.s32.totalorder %s71, %s72
    %p84 = scmp.eq.s32.totalorder %s20, 1
    %p85 = por %p83, %p84
    %p87 = scmp.ne.s32.totalorder %s72, %s86
    %p88 = scmp.eq.s32.totalorder %s20, 0
    %p89 = por %p87, %p88
    %s91 = sadd.s32 %s90, 1
    %p94 = scmp.eq.s32.totalorder %s14, 1
    %p95 = scmp.ne.s32.totalorder %s90, %s92
    %p96 = scmp.eq.s32.totalorder %s14, 0
    %p97 = por %p95, %p96
    %p98 = scmp.ne.s32.totalorder %s90, %s92
    %p99 = scmp.eq.s32.totalorder %s19, 1
    %p100 = por %p98, %p99
    %p101 = scmp.ne.s32.totalorder %s92, %s93
    %p102 = scmp.eq.s32.totalorder %s19, 0
    %p103 = por %p101, %p102
    %p104 = scmp.ne.s32.totalorder %s92, %s93
    %p105 = scmp.eq.s32.totalorder %s20, 1
    %p106 = por %p104, %p105
    %p108 = scmp.ne.s32.totalorder %s93, %s107
    %p109 = scmp.eq.s32.totalorder %s20, 0
    %p110 = por %p108, %p109
    %s112 = sadd.s32 %s111, 1
    %p115 = scmp.eq.s32.totalorder %s14, 1
    %p116 = scmp.ne.s32.totalorder %s111, %s113
    %p117 = scmp.eq.s32.totalorder %s14, 0
    %p118 = por %p116, %p117
    %p119 = scmp.ne.s32.totalorder %s111, %s113
    %p120 = scmp.eq.s32.totalorder %s19, 1
    %p121 = por %p119, %p120
    %p122 = scmp.ne.s32.totalorder %s113, %s114
    %p123 = scmp.eq.s32.totalorder %s19, 0
    %p124 = por %p122, %p123
    %p125 = scmp.ne.s32.totalorder %s113, %s114
    %p126 = scmp.eq.s32.totalorder %s20, 1
    %p127 = por %p125, %p126
    %p129 = scmp.ne.s32.totalorder %s114, %s128
    %p130 = scmp.eq.s32.totalorder %s20, 0
    %p131 = por %p129, %p130
    %s133 = sadd.s32 %s132, 1
    %p136 = scmp.eq.s32.totalorder %s14, 1
    %p137 = scmp.ne.s32.totalorder %s132, %s134
    %p138 = scmp.eq.s32.totalorder %s14, 0
    %p139 = por %p137, %p138
    %p140 = scmp.ne.s32.totalorder %s132, %s134
    %p141 = scmp.eq.s32.totalorder %s19, 1
    %p142 = por %p140, %p141
    %p143 = scmp.ne.s32.totalorder %s134, %s135
    %p144 = scmp.eq.s32.totalorder %s19, 0
    %p145 = por %p143, %p144
    %p146 = scmp.ne.s32.totalorder %s134, %s135
    %p147 = scmp.eq.s32.totalorder %s20, 1
    %p148 = por %p146, %p147
    %p150 = scmp.ne.s32.totalorder %s135, %s149
    %p151 = scmp.eq.s32.totalorder %s20, 0
    %p152 = por %p150, %p151
    %s154 = sadd.s32 %s153, 1
    %p157 = scmp.eq.s32.totalorder %s14, 1
    %p158 = scmp.ne.s32.totalorder %s153, %s155
    %p159 = scmp.eq.s32.totalorder %s14, 0
    %p160 = por %p158, %p159
    %p161 = scmp.ne.s32.totalorder %s153, %s155
    %p162 = scmp.eq.s32.totalorder %s19, 1
    %p163 = por %p161, %p162
    %p164 = scmp.ne.s32.totalorder %s155, %s156
    %p165 = scmp.eq.s32.totalorder %s19, 0
    %p166 = por %p164, %p165
    %p167 = scmp.ne.s32.totalorder %s155, %s156
    %p168 = scmp.eq.s32.totalorder %s20, 1
    %p169 = por %p167, %p168
    %p171 = scmp.ne.s32.totalorder %s156, %s170
    %p172 = scmp.eq.s32.totalorder %s20, 0
    %p173 = por %p171, %p172
    %s175 = sadd.s32 %s174, 1
    %p178 = scmp.eq.s32.totalorder %s14, 1
    %p179 = scmp.ne.s32.totalorder %s174, %s176
    %p180 = scmp.eq.s32.totalorder %s14, 0
    %p181 = por %p179, %p180
    %p182 = scmp.ne.s32.totalorder %s174, %s176
    %p183 = scmp.eq.s32.totalorder %s19, 1
    %p184 = por %p182, %p183
    %p185 = scmp.ne.s32.totalorder %s176, %s177
    %p186 = scmp.eq.s32.totalorder %s19, 0
    %p187 = por %p185, %p186
    %p188 = scmp.ne.s32.totalorder %s176, %s177
    %p189 = scmp.eq.s32.totalorder %s20, 1
    %p190 = por %p188, %p189
    %p192 = scmp.ne.s32.totalorder %s177, %s191
    %p193 = scmp.eq.s32.totalorder %s20, 0
    %p194 = por %p192, %p193
    %s195 = ssub.s32 %s14, %s21
    %p196 = scmp.eq.s32.totalorder %s195, 0
    %s198 = sadd.s32 %s197, 1
    %s199 = scalar_select %p196, %s197, %s198
    %p202 = pneg %p196
    %p203 = scmp.eq.s32.totalorder %s14, 1
    %p204 = por %p202, %p203
    %p205 = scmp.ne.s32.totalorder %s197, %s200
    %p206 = scmp.eq.s32.totalorder %s14, 0
    %p207 = por %p205, %p206
    %p208 = scmp.ne.s32.totalorder %s197, %s200
    %p209 = scmp.eq.s32.totalorder %s19, 1
    %p210 = por %p208, %p209
    %p211 = scmp.ne.s32.totalorder %s200, %s201
    %p212 = scmp.eq.s32.totalorder %s19, 0
    %p213 = por %p211, %p212
    %p214 = scmp.ne.s32.totalorder %s200, %s201
    %p215 = scmp.eq.s32.totalorder %s20, 1
    %p216 = por %p214, %p215
    %p218 = scmp.ne.s32.totalorder %s201, %s217
    %p219 = scmp.eq.s32.totalorder %s20, 0
    %p220 = por %p218, %p219
    %p221 = scmp.le.s32.totalorder 1, %s14
    %p222 = scmp.lt.s32.totalorder %s14, 3
    %p223 = pnand %p221, %p222
    %p224 = pneg %p223
    // Predicated region
    $region9: #{encoder_forward.16} parent=5 // pred_check
      _
    $region10: #{encoder_forward.16} parent=5 // pred_check_branch
      %226 = sbr.rel (%p223) target = $region12
    $region11: #{encoder_forward.16} parent=5 // pred_region
      %s227 = ssub.s32 %s14, 1
      // Predicated region
      $region13: #{encoder_forward.16} parent=11 // pred_check
        %p228 = pneg %p61
      $region14: #{encoder_forward.16} parent=11 // pred_check_branch
        %230 = sbr.rel (%p228) target = $region16
      $region15: #{encoder_forward.16} parent=11 // pred_region
        _
      $region16: #{encoder_forward.16} parent=11 // pred_fallthru
        _
      // Predicated region
      $region17: #{encoder_forward.16} parent=11 // pred_check
        %p231 = pneg %p82
      $region18: #{encoder_forward.16} parent=11 // pred_check_branch
        %233 = sbr.rel (%p231) target = $region20
      $region19: #{encoder_forward.16} parent=11 // pred_region
        _
      $region20: #{encoder_forward.16} parent=11 // pred_fallthru
        _
      // Predicated region
      $region21: #{encoder_forward.16} parent=11 // pred_check
        %p234 = pneg %p103
      $region22: #{encoder_forward.16} parent=11 // pred_check_branch
        %236 = sbr.rel (%p234) target = $region24
      $region23: #{encoder_forward.16} parent=11 // pred_region
        _
      $region24: #{encoder_forward.16} parent=11 // pred_fallthru
        _
      // Predicated region
      $region25: #{encoder_forward.16} parent=11 // pred_check
        %p237 = pneg %p124
      $region26: #{encoder_forward.16} parent=11 // pred_check_branch
        %239 = sbr.rel (%p237) target = $region28
      $region27: #{encoder_forward.16} parent=11 // pred_region
        _
      $region28: #{encoder_forward.16} parent=11 // pred_fallthru
        _
      // Predicated region
      $region29: #{encoder_forward.16} parent=11 // pred_check
        %p240 = pneg %p145
      $region30: #{encoder_forward.16} parent=11 // pred_check_branch
        %242 = sbr.rel (%p240) target = $region32
      $region31: #{encoder_forward.16} parent=11 // pred_region
        _
      $region32: #{encoder_forward.16} parent=11 // pred_fallthru
        _
      // Predicated region
      $region33: #{encoder_forward.16} parent=11 // pred_check
        %p243 = pneg %p166
      $region34: #{encoder_forward.16} parent=11 // pred_check_branch
        %245 = sbr.rel (%p243) target = $region36
      $region35: #{encoder_forward.16} parent=11 // pred_region
        _
      $region36: #{encoder_forward.16} parent=11 // pred_fallthru
        _
      // Predicated region
      $region37: #{encoder_forward.16} parent=11 // pred_check
        %p246 = pneg %p187
      $region38: #{encoder_forward.16} parent=11 // pred_check_branch
        %248 = sbr.rel (%p246) target = $region40
      $region39: #{encoder_forward.16} parent=11 // pred_region
        _
      $region40: #{encoder_forward.16} parent=11 // pred_fallthru
        _
    $region12: #{encoder_forward.16} parent=5 // pred_fallthru
      _
    %p249 = scmp.lt.s32.totalorder %s14, 2
    // Predicated region
    $region41: #{encoder_forward.16} parent=5 // pred_check
      %p250 = pneg %p249
    $region42: #{encoder_forward.16} parent=5 // pred_check_branch
      %252 = sbr.rel (%p250) target = $region44
    $region43: #{encoder_forward.16} parent=5 // pred_region
      // Predicated region
      $region45: #{encoder_forward.16} parent=43 // pred_check
        %p253 = pneg %p34
      $region46: #{encoder_forward.16} parent=43 // pred_check_branch
        %255 = sbr.rel (%p253) target = $region48
      $region47: #{encoder_forward.16} parent=43 // pred_region
        %p256 = scmp.lt.s32.totalorder %s14, 1
        %s257 = scalar_select %p256, %s14, 1
        %s258 = smul.addr %s257, 2
        %s259 = smul.addr %s258, 8
        %s260 = scalar_lea.vmem %s0, %s259
      $region48: #{encoder_forward.16} parent=43 // pred_fallthru
        _
    $region44: #{encoder_forward.16} parent=5 // pred_fallthru
      _
    %p261 = scmp.le.s32.totalorder 1, %s14
    %p262 = scmp.lt.s32.totalorder %s14, 3
    %p263 = pnand %p261, %p262
    %p264 = pneg %p263
    // Predicated region
    $region49: #{encoder_forward.16} parent=5 // pred_check
      _
    $region50: #{encoder_forward.16} parent=5 // pred_check_branch
      %266 = sbr.rel (%p263) target = $region52
    $region51: #{encoder_forward.16} parent=5 // pred_region
      %s267 = ssub.s32 %s14, 1
      %p268 = scmp.lt.s32.totalorder %s19, 1
      %s269 = scalar_select %p268, %s19, 1
      %s270 = smul.addr %s269, 2
      %s271 = smul.addr %s270, 8
      %s272 = scalar_lea.vmem %s0, %s271
      %p273 = pneg %p40
      %p274 = pneg %p37
      %p275 = pneg %p61
      %p276 = pneg %p58
      %p277 = pneg %p82
      %p278 = pneg %p79
      %p279 = pneg %p103
      %p280 = pneg %p100
      %p281 = pneg %p124
      %p282 = pneg %p121
      %p283 = pneg %p145
      %p284 = pneg %p142
      %p285 = pneg %p166
      %p286 = pneg %p163
      %p287 = pneg %p187
      %p288 = pneg %p184
      %p289 = pneg %p213
      %p290 = pneg %p210
      %p291 = scmp.lt.s32.totalorder %s19, 1
      %s292 = scalar_select %p291, %s19, 1
      %s293 = smul.addr %s292, 2
      %s294 = smul.addr %s293, 8
      %s295 = scalar_lea.vmem %s8, %s294
      %p296 = scmp.lt.s32.totalorder %s19, 1
      %s297 = scalar_select %p296, %s19, 1
      %s298 = smul.addr %s297, 2
      %s299 = smul.addr %s298, 8
      %s300 = scalar_lea.vmem %s0, %s299
      %p301 = scmp.lt.s32.totalorder %s19, 1
      %s302 = scalar_select %p301, %s19, 1
      %s303 = smul.addr %s302, 2
      %s304 = smul.addr %s303, 8
      %s305 = scalar_lea.vmem %s8, %s304
      %v307 = vld [vmem:[%s300] sm:$0xff]
      %v308 = vld [vmem:[%s300 + $0x8] sm:$0xff]
      %v309 = vld [vmem:[%s1] sm:$0x1]
      %v310 = vld [vmem:[%s2] sm:$0x1]
      %vm311 = vcmask 523264
      %v312 = vsel %vm311, %v307, 0.0
      %313 = vadd.xlane.f32.xlu0 %v312
      %v314 = vpop.xlane.xlu0 %313
      %v315 = vsel %vm311, %v308, 0.0
      %316 = vadd.xlane.f32.xlu0 %v315
      %v317 = vpop.xlane.xlu0 %316
      %v318 = vrcp.pop 64.0
      %v319 = vmul.f32 %v314, %v318
      %v320 = vmul.f32 %v317, %v318
      %v321 = vsub.f32 %v307, %v319
      %v322 = vsub.f32 %v308, %v320
      %v323 = vmul.f32 %v321, %v321
      %v324 = vmul.f32 %v322, %v322
      %v325 = vsel %vm311, %v323, 0.0
      %326 = vadd.xlane.f32.xlu0 %v325
      %v327 = vpop.xlane.xlu0 %326
      %v328 = vsel %vm311, %v324, 0.0
      %329 = vadd.xlane.f32.xlu0 %v328
      %v330 = vpop.xlane.xlu0 %329
      %v331 = vmul.f32 %v327, %v318
      %v332 = vmul.f32 %v330, %v318
      %v333 = vadd.f32 %v331, 1e-05
      %v334 = vadd.f32 %v332, 1e-05
      %v335 = vrsqrt.pop %v333
      %v336 = vrsqrt.pop %v334
      %v337 = vmul.f32 %v321, %v335
      %v338 = vmul.f32 %v322, %v336
      %v340 = vlaneseq
      %v341 = vshrl.u32 %v340, 7
      %v342 = vsub.s32 0, %v341
      %v343 = vrot.slane %v309, %v342
      %v345 = vmul.f32 %v337, %v343
      %v346 = vmul.f32 %v338, %v343
      %v348 = vlaneseq
      %v349 = vshrl.u32 %v348, 7
      %v350 = vsub.s32 0, %v349
      %v351 = vrot.slane %v310, %v350
      %v353 = vadd.f32 %v345, %v351
      %v354 = vadd.f32 %v346, %v351
      %v355 = vpack.c.bf16 %v354, %v353
      %v356 = vld [vmem:[%s3] sm:$0xf]
      %v357 = vld [vmem:[%s3 + $0x4] sm:$0xf]
      %v358 = vld [vmem:[%s3 + $0x8] sm:$0xf]
      %v359 = vld [vmem:[%s3 + $0xc] sm:$0xf]
      %v360 = vld [vmem:[%s3 + $0x10] sm:$0xf]
      %v361 = vld [vmem:[%s3 + $0x14] sm:$0xf]
      %v362 = vld [vmem:[%s3 + $0x18] sm:$0xf]
      %v363 = vld [vmem:[%s3 + $0x1c] sm:$0xf]
      %v372 = vunpack.c.l.b16 %v356
      %v373 = vunpack.c.l.b16 %v357
      %v374 = vunpack.c.l.b16 %v358
      %v375 = vunpack.c.l.b16 %v359
      %v376 = vunpack.c.l.b16 %v360
      %v377 = vunpack.c.l.b16 %v361
      %v378 = vunpack.c.l.b16 %v362
      %v379 = vunpack.c.l.b16 %v363
      %v380 = vpack.c.b16 %v373, %v372
      %v381 = vpack.c.b16 %v375, %v374
      %v382 = vpack.c.b16 %v377, %v376
      %v383 = vpack.c.b16 %v379, %v378
      %v389 = vsel %vm311, %v355, 0
      %391 = vmatprep.subr.bf16.mxu0 0
      %392 = vmatpush1.bf16.msra.mxu0 %v380
      %393 = vmatprep.subr.bf16.mxu0 0
      %394 = vmatpush1.bf16.msra.mxu0 %v381
      %395 = vmatprep.subr.bf16.mxu0 0
      %396 = vmatpush1.bf16.msra.mxu0 %v382
      %397 = vmatprep.subr.bf16.mxu0 0
      %398 = vmatpush1.bf16.msra.mxu0 %v383
      %399 = vmatprep.subr.bf16.mxu0 0
      %400 = vmatpush1.bf16.msra.mxu0 0
      %401 = vmatprep.subr.bf16.mxu0 0
      %402 = vmatpush1.bf16.msra.mxu0 0
      %403 = vmatprep.subr.bf16.mxu0 0
      %404 = vmatpush1.bf16.msra.mxu0 0
      %405 = vmatprep.subr.bf16.mxu0 0
      %406 = vmatpush1.bf16.msra.mxu0 0
      %407 = vmatprep.subr.bf16.mxu0 0
      %408 = vmatpush1.bf16.msra.mxu0 0
      %409 = vmatprep.subr.bf16.mxu0 0
      %410 = vmatpush1.bf16.msra.mxu0 0
      %411 = vmatprep.subr.bf16.mxu0 0
      %412 = vmatpush1.bf16.msra.mxu0 0
      %413 = vmatprep.subr.bf16.mxu0 0
      %414 = vmatpush1.bf16.msra.mxu0 0
      %415 = vmatprep.subr.bf16.mxu0 0
      %416 = vmatpush1.bf16.msra.mxu0 0
      %417 = vmatprep.subr.bf16.mxu0 0
      %418 = vmatpush1.bf16.msra.mxu0 0
      %419 = vmatprep.subr.bf16.mxu0 0
      %420 = vmatpush1.bf16.msra.mxu0 0
      %421 = vmatprep.subr.bf16.mxu0 0
      %422 = vmatpush1.bf16.msra.mxu0 0
      %423 = vmatprep.mubr.bf16.mxu0 0
      %424 = vmatmul.mubr.bf16.gmra.mrb[0].mxu0 %v389
      %v425 = vpop.f32.mrb[0].mxu0
      %v426 = vadd.f32 0.0, %v425
      %v427 = vpop.f32.mrb[0].mxu0
      %v428 = vpop.f32.mrb[0].mxu0
      %v429 = vadd.f32 0.0, %v428
      %v430 = vpop.f32.mrb[0].mxu0
      %431 = vdwg.mxu0
      %v432 = vxor.u32 %v426, 2147483648
      %v433 = vxor.u32 %v429, 2147483648
      %v434 = vmul.f32 %v432, 1.442695
      %v435 = vpow.pop %v434
      %v436 = vmul.f32 %v433, 1.442695
      %v437 = vpow.pop %v436
      %v438 = vadd.f32 %v435, 1.0
      %v439 = vadd.f32 %v437, 1.0
      %v440 = vrcp.pop %v438
      %v441 = vmul.f32 1.0, %v440
      %v442 = vrcp.pop %v439
      %v443 = vmul.f32 1.0, %v442
      %446 = vrot.lane.b32.xlu0 %v441, 64
      %v447 = vpop.permute.xlu0 %446
      %448 = vrot.lane.b32.xlu0 %v443, 64
      %v449 = vpop.permute.xlu0 %448
      %v452 = vmul.f32 %v426, %v447
      %v453 = vmul.f32 %v429, %v449
      %vm454 = vcmask 517120
      %455 = vst.msk [vmem:[#allocation2] sm:$0x3] %vm454, 0.0
      %456 = vst.msk [vmem:[#allocation2 + $0x12] sm:$0x3] %vm454, 0.0
      %457 = vst.msk [vmem:[#allocation2 + $0x2] sm:$0xff] %vm311, %v452
      %458 = vst.msk [vmem:[#allocation2 + $0xa] sm:$0xff] %vm311, %v453
      %v459 = vld [vmem:[%s4] sm:$0x1f]
      %v460 = vld [vmem:[#allocation2] sm:$0xff]
      %v461 = vld [vmem:[#allocation2 + $0x8] sm:$0xff]
      %v462 = vlaneseq
      %v463 = vshrl.u32 %v462, 7
      %v464 = vsub.s32 0, %v463
      %v465 = vrot.slane %v459, %v464
      %v466 = vmul.f32 %v460, %v465
      %v467 = vmul.f32 %v461, %v465
      %v468 = vadd.f32 %v466, 0.0
      %v469 = vadd.f32 %v467, 0.0
      %v470 = vld [vmem:[#allocation2 + $0x1] sm:$0xff]
      %v471 = vld [vmem:[#allocation2 + $0x9] sm:$0xff]
      %v472 = vlaneseq
      %v473 = vshrl.u32 %v472, 7
      %v474 = vsub.s32 1, %v473
      %v475 = vrot.slane %v459, %v474
      %v476 = vmul.f32 %v470, %v475
      %v477 = vmul.f32 %v471, %v475
      %v478 = vadd.f32 %v468, %v476
      %v479 = vadd.f32 %v469, %v477
      %v480 = vld [vmem:[#allocation2 + $0x2] sm:$0xff]
      %v481 = vld [vmem:[#allocation2 + $0xa] sm:$0xff]
      %v482 = vlaneseq
      %v483 = vshrl.u32 %v482, 7
      %v484 = vsub.s32 2, %v483
      %v485 = vrot.slane %v459, %v484
      %v486 = vmul.f32 %v480, %v485
      %v487 = vmul.f32 %v481, %v485
      %v488 = vadd.f32 %v478, %v486
      %v489 = vadd.f32 %v479, %v487
      %v490 = vld [vmem:[#allocation2 + $0x3] sm:$0xff]
      %v491 = vld [vmem:[#allocation2 + $0xb] sm:$0xff]
      %v492 = vlaneseq
      %v493 = vshrl.u32 %v492, 7
      %v494 = vsub.s32 3, %v493
      %v495 = vrot.slane %v459, %v494
      %v496 = vmul.f32 %v490, %v495
      %v497 = vmul.f32 %v491, %v495
      %v498 = vadd.f32 %v488, %v496
      %v499 = vadd.f32 %v489, %v497
      %v500 = vld [vmem:[#allocation2 + $0x4] sm:$0xff]
      %v501 = vld [vmem:[#allocation2 + $0xc] sm:$0xff]
      %v502 = vlaneseq
      %v503 = vshrl.u32 %v502, 7
      %v504 = vsub.s32 4, %v503
      %v505 = vrot.slane %v459, %v504
      %v506 = vmul.f32 %v500, %v505
      %v507 = vmul.f32 %v501, %v505
      %v508 = vadd.f32 %v498, %v506
      %v509 = vadd.f32 %v499, %v507
      %v510 = vld [vmem:[%s5] sm:$0x1]
      %v512 = vlaneseq
      %v513 = vshrl.u32 %v512, 7
      %v514 = vsub.s32 0, %v513
      %v515 = vrot.slane %v510, %v514
      %v517 = vmul.f32 %v508, %v515
      %v518 = vmul.f32 %v509, %v515
      %v519 = vld [vmem:[%s6] sm:$0x1]
      %v521 = vlaneseq
      %v522 = vshrl.u32 %v521, 7
      %v523 = vsub.s32 0, %v522
      %v524 = vrot.slane %v519, %v523
      %v526 = vadd.f32 %v517, %v524
      %v527 = vadd.f32 %v518, %v524
      %v528 = vxor.u32 %v526, 2147483648
      %v529 = vxor.u32 %v527, 2147483648
      %v530 = vmul.f32 %v528, 1.442695
      %v531 = vpow.pop %v530
      %v532 = vmul.f32 %v529, 1.442695
      %v533 = vpow.pop %v532
      %v534 = vadd.f32 %v531, 1.0
      %v535 = vadd.f32 %v533, 1.0
      %v536 = vrcp.pop %v534
      %v537 = vmul.f32 1.0, %v536
      %v538 = vrcp.pop %v535
      %v539 = vmul.f32 1.0, %v538
      %v540 = vmul.f32 %v526, %v537
      %v541 = vmul.f32 %v527, %v539
      %v542 = vpack.c.bf16 %v541, %v540
      %v543 = vld [vmem:[%s7] sm:$0xf]
      %v544 = vld [vmem:[%s7 + $0x4] sm:$0xf]
      %v545 = vld [vmem:[%s7 + $0x8] sm:$0xf]
      %v546 = vld [vmem:[%s7 + $0xc] sm:$0xf]
      %v547 = vld [vmem:[%s7 + $0x10] sm:$0xf]
      %v548 = vld [vmem:[%s7 + $0x14] sm:$0xf]
      %v549 = vld [vmem:[%s7 + $0x18] sm:$0xf]
      %v550 = vld [vmem:[%s7 + $0x1c] sm:$0xf]
      %v559 = vunpack.c.l.b16 %v543
      %v560 = vunpack.c.l.b16 %v544
      %v561 = vunpack.c.l.b16 %v545
      %v562 = vunpack.c.l.b16 %v546
      %v563 = vunpack.c.l.b16 %v547
      %v564 = vunpack.c.l.b16 %v548
      %v565 = vunpack.c.l.b16 %v549
      %v566 = vunpack.c.l.b16 %v550
      %v567 = vpack.c.b16 %v560, %v559
      %v568 = vpack.c.b16 %v562, %v561
      %v569 = vpack.c.b16 %v564, %v563
      %v570 = vpack.c.b16 %v566, %v565
      %v576 = vsel %vm311, %v542, 0
      %578 = vmatprep.subr.bf16.mxu0 0
      %579 = vmatpush1.bf16.msra.mxu0 %v567
      %580 = vmatprep.subr.bf16.mxu0 0
      %581 = vmatpush1.bf16.msra.mxu0 %v568
      %582 = vmatprep.subr.bf16.mxu0 0
      %583 = vmatpush1.bf16.msra.mxu0 %v569
      %584 = vmatprep.subr.bf16.mxu0 0
      %585 = vmatpush1.bf16.msra.mxu0 %v570
      %586 = vmatprep.subr.bf16.mxu0 0
      %587 = vmatpush1.bf16.msra.mxu0 0
      %588 = vmatprep.subr.bf16.mxu0 0
      %589 = vmatpush1.bf16.msra.mxu0 0
      %590 = vmatprep.subr.bf16.mxu0 0
      %591 = vmatpush1.bf16.msra.mxu0 0
      %592 = vmatprep.subr.bf16.mxu0 0
      %593 = vmatpush1.bf16.msra.mxu0 0
      %594 = vmatprep.subr.bf16.mxu0 0
      %595 = vmatpush1.bf16.msra.mxu0 0
      %596 = vmatprep.subr.bf16.mxu0 0
      %597 = vmatpush1.bf16.msra.mxu0 0
      %598 = vmatprep.subr.bf16.mxu0 0
      %599 = vmatpush1.bf16.msra.mxu0 0
      %600 = vmatprep.subr.bf16.mxu0 0
      %601 = vmatpush1.bf16.msra.mxu0 0
      %602 = vmatprep.subr.bf16.mxu0 0
      %603 = vmatpush1.bf16.msra.mxu0 0
      %604 = vmatprep.subr.bf16.mxu0 0
      %605 = vmatpush1.bf16.msra.mxu0 0
      %606 = vmatprep.subr.bf16.mxu0 0
      %607 = vmatpush1.bf16.msra.mxu0 0
      %608 = vmatprep.subr.bf16.mxu0 0
      %609 = vmatpush1.bf16.msra.mxu0 0
      %610 = vmatprep.mubr.bf16.mxu0 0
      %611 = vmatmul.mubr.bf16.gmra.mrb[0].mxu0 %v576
      %v612 = vpop.f32.mrb[0].mxu0
      %v613 = vadd.f32 0.0, %v612
      %v614 = vpop.f32.mrb[0].mxu0
      %v615 = vpop.f32.mrb[0].mxu0
      %v616 = vadd.f32 0.0, %v615
      %v617 = vpop.f32.mrb[0].mxu0
      %618 = vdwg.mxu0
      %v619 = vadd.f32 %v307, %v613
      %v620 = vadd.f32 %v308, %v616
      %621 = vst.msk [vmem:[%s305] sm:$0xff] %vm311, %v619
      %622 = vst.msk [vmem:[%s305 + $0x8] sm:$0xff] %vm311, %v620
      %p623 = scmp.lt.s32.totalorder %s19, 1
      %s624 = scalar_select %p623, %s19, 1
      %s625 = smul.addr %s624, 2
      %s626 = smul.addr %s625, 8
      %s627 = scalar_lea.vmem %s8, %s626
      // Predicated region
      $region53: #{encoder_forward.16} parent=51 // pred_check
        %p628 = pneg %p210
      $region54: #{encoder_forward.16} parent=51 // pred_check_branch
        %630 = sbr.rel (%p628) target = $region56
      $region55: #{encoder_forward.16} parent=51 // pred_region
        _
      $region56: #{encoder_forward.16} parent=51 // pred_fallthru
        _
    $region52: #{encoder_forward.16} parent=5 // pred_fallthru
      _
    %p631 = scmp.le.s32.totalorder 2, %s14
    // Predicated region
    $region57: #{encoder_forward.16} parent=5 // pred_check
      %p632 = pneg %p631
    $region58: #{encoder_forward.16} parent=5 // pred_check_branch
      %634 = sbr.rel (%p632) target = $region60
    $region59: #{encoder_forward.16} parent=5 // pred_region
      %s635 = ssub.s32 %s14, 2
      // Predicated region
      $region61: #{encoder_forward.16} parent=59 // pred_check
        %p636 = pneg %p216
      $region62: #{encoder_forward.16} parent=59 // pred_check_branch
        %638 = sbr.rel (%p636) target = $region64
      $region63: #{encoder_forward.16} parent=59 // pred_region
        %p639 = scmp.lt.s32.totalorder %s20, 1
        %s640 = scalar_select %p639, %s20, 1
        %s641 = smul.addr %s640, 2
        %s642 = smul.addr %s641, 8
        %s643 = scalar_lea.vmem %s8, %s642
      $region64: #{encoder_forward.16} parent=59 // pred_fallthru
        _
    $region60: #{encoder_forward.16} parent=5 // pred_fallthru
      _
  $region6: #{encoder_forward.16} parent=0 // loop_footer
    %s18 = sadd.s32 1, %s14
  $region7: #{encoder_forward.16} parent=0 // loop_footer_branch
    %13 = sbr.rel target = $region3
  $region8: #{encoder_forward.16} parent=0 // loop_exit
    _

// kernel: encoder_forward.17
$region0: #{encoder_forward.17}
  #allocation0 [shape = 'u32[]', space=smem, size = 0x4, offset = 0x4, fixed_abs, tag = 'smem constant byte address 0x4 - core index']
  #allocation1 [shape = 'u32[144,128]{1,0:T(1,128)}', space=vmem, size = 0x12000, scoped, tag = 'internal scratch']
  %s0 = inlined_call_operand.vmem [shape: f32[32,64], index: 0, kind: input, shape index: {}]
  %s1 = inlined_call_operand.vmem [shape: f32[1,64], index: 1, kind: input, shape index: {}]
  %s2 = inlined_call_operand.vmem [shape: f32[1,64], index: 2, kind: input, shape index: {}]
  %s3 = inlined_call_operand.vmem [shape: bf16[64,128], index: 3, kind: input, shape index: {}]
  %s4 = inlined_call_operand.vmem [shape: f32[1,128], index: 4, kind: input, shape index: {}]
  %s5 = inlined_call_operand.vmem [shape: bf16[128,64], index: 5, kind: input, shape index: {}]
  %s6 = inlined_call_operand.vmem [shape: f32[1,64], index: 6, kind: input, shape index: {}]
  %s7 = inlined_call_operand.vmem [shape: f32[1,64], index: 7, kind: input, shape index: {}]
  %s8 = inlined_call_operand.vmem [shape: f32[1,64], index: 8, kind: input, shape index: {}]
  %s9 = inlined_call_operand.vmem [shape: f32[32,64], index: 9, kind: output, shape index: {}]
  %s10 = sld [smem:[#allocation0]]
  $region46: #{encoder_forward.17} parent=0
    _
  %s12 = ssub.s32 1, %s10
  %s13 = scalar_select 0, %s12, %s10
  // Predicated region
  $region2: #{encoder_forward.17} parent=0 // pred_check
    _
  $region3: #{encoder_forward.17} parent=0 // pred_check_branch
    %15 = sbr.rel (0) target = $region5
  $region4: #{encoder_forward.17} parent=0 // pred_region
    _
  $region5: #{encoder_forward.17} parent=0 // pred_fallthru
    _
  // Predicated region
  $region6: #{encoder_forward.17} parent=0 // pred_check
    _
  $region7: #{encoder_forward.17} parent=0 // pred_check_branch
    %17 = sbr.rel (0) target = $region9
  $region8: #{encoder_forward.17} parent=0 // pred_region
    _
  $region9: #{encoder_forward.17} parent=0 // pred_fallthru
    _
  // Predicated region
  $region10: #{encoder_forward.17} parent=0 // pred_check
    _
  $region11: #{encoder_forward.17} parent=0 // pred_check_branch
    %19 = sbr.rel (0) target = $region13
  $region12: #{encoder_forward.17} parent=0 // pred_region
    _
  $region13: #{encoder_forward.17} parent=0 // pred_fallthru
    _
  // Predicated region
  $region14: #{encoder_forward.17} parent=0 // pred_check
    _
  $region15: #{encoder_forward.17} parent=0 // pred_check_branch
    %21 = sbr.rel (0) target = $region17
  $region16: #{encoder_forward.17} parent=0 // pred_region
    _
  $region17: #{encoder_forward.17} parent=0 // pred_fallthru
    _
  // Predicated region
  $region18: #{encoder_forward.17} parent=0 // pred_check
    _
  $region19: #{encoder_forward.17} parent=0 // pred_check_branch
    %23 = sbr.rel (0) target = $region21
  $region20: #{encoder_forward.17} parent=0 // pred_region
    _
  $region21: #{encoder_forward.17} parent=0 // pred_fallthru
    _
  // Predicated region
  $region22: #{encoder_forward.17} parent=0 // pred_check
    _
  $region23: #{encoder_forward.17} parent=0 // pred_check_branch
    %25 = sbr.rel (0) target = $region25
  $region24: #{encoder_forward.17} parent=0 // pred_region
    _
  $region25: #{encoder_forward.17} parent=0 // pred_fallthru
    _
  // Predicated region
  $region26: #{encoder_forward.17} parent=0 // pred_check
    _
  $region27: #{encoder_forward.17} parent=0 // pred_check_branch
    %27 = sbr.rel (0) target = $region29
  $region28: #{encoder_forward.17} parent=0 // pred_region
    _
  $region29: #{encoder_forward.17} parent=0 // pred_fallthru
    _
  // Predicated region
  $region30: #{encoder_forward.17} parent=0 // pred_check
    _
  $region31: #{encoder_forward.17} parent=0 // pred_check_branch
    %29 = sbr.rel (0) target = $region33
  $region32: #{encoder_forward.17} parent=0 // pred_region
    _
  $region33: #{encoder_forward.17} parent=0 // pred_fallthru
    _
  // Predicated region
  $region34: #{encoder_forward.17} parent=0 // pred_check
    _
  $region35: #{encoder_forward.17} parent=0 // pred_check_branch
    %31 = sbr.rel (0) target = $region37
  $region36: #{encoder_forward.17} parent=0 // pred_region
    _
  $region37: #{encoder_forward.17} parent=0 // pred_fallthru
    _
  %v33 = vld [vmem:[%s0] sm:$0xff]
  %v34 = vld [vmem:[%s0 + $0x8] sm:$0xff]
  %v35 = vld [vmem:[%s0 + $0x10] sm:$0xff]
  %v36 = vld [vmem:[%s0 + $0x18] sm:$0xff]
  %v37 = vld [vmem:[%s1] sm:$0x1]
  %v38 = vld [vmem:[%s2] sm:$0x1]
  %vm39 = vcmask 523264
  %v40 = vsel %vm39, %v33, 0.0
  %41 = vadd.xlane.f32.xlu0 %v40
  %v42 = vpop.xlane.xlu0 %41
  %v43 = vsel %vm39, %v34, 0.0
  %44 = vadd.xlane.f32.xlu0 %v43
  %v45 = vpop.xlane.xlu0 %44
  %v46 = vsel %vm39, %v35, 0.0
  %47 = vadd.xlane.f32.xlu0 %v46
  %v48 = vpop.xlane.xlu0 %47
  %v49 = vsel %vm39, %v36, 0.0
  %50 = vadd.xlane.f32.xlu0 %v49
  %v51 = vpop.xlane.xlu0 %50
  %v52 = vrcp.pop 64.0
  %v53 = vmul.f32 %v42, %v52
  %v54 = vmul.f32 %v45, %v52
  %v55 = vmul.f32 %v48, %v52
  %v56 = vmul.f32 %v51, %v52
  %v57 = vsub.f32 %v33, %v53
  %v58 = vsub.f32 %v34, %v54
  %v59 = vsub.f32 %v35, %v55
  %v60 = vsub.f32 %v36, %v56
  %v61 = vmul.f32 %v57, %v57
  %v62 = vmul.f32 %v58, %v58
  %v63 = vmul.f32 %v59, %v59
  %v64 = vmul.f32 %v60, %v60
  %v65 = vsel %vm39, %v61, 0.0
  %66 = vadd.xlane.f32.xlu0 %v65
  %v67 = vpop.xlane.xlu0 %66
  %v68 = vsel %vm39, %v62, 0.0
  %69 = vadd.xlane.f32.xlu0 %v68
  %v70 = vpop.xlane.xlu0 %69
  %v71 = vsel %vm39, %v63, 0.0
  %72 = vadd.xlane.f32.xlu0 %v71
  %v73 = vpop.xlane.xlu0 %72
  %v74 = vsel %vm39, %v64, 0.0
  %75 = vadd.xlane.f32.xlu0 %v74
  %v76 = vpop.xlane.xlu0 %75
  %v77 = vmul.f32 %v67, %v52
  %v78 = vmul.f32 %v70, %v52
  %v79 = vmul.f32 %v73, %v52
  %v80 = vmul.f32 %v76, %v52
  %v81 = vadd.f32 %v77, 1e-05
  %v82 = vadd.f32 %v78, 1e-05
  %v83 = vadd.f32 %v79, 1e-05
  %v84 = vadd.f32 %v80, 1e-05
  %v85 = vrsqrt.pop %v81
  %v86 = vrsqrt.pop %v82
  %v87 = vrsqrt.pop %v83
  %v88 = vrsqrt.pop %v84
  %v89 = vmul.f32 %v57, %v85
  %v90 = vmul.f32 %v58, %v86
  %v91 = vmul.f32 %v59, %v87
  %v92 = vmul.f32 %v60, %v88
  %v94 = vlaneseq
  %v95 = vshrl.u32 %v94, 7
  %v96 = vsub.s32 0, %v95
  %v97 = vrot.slane %v37, %v96
  %v99 = vmul.f32 %v89, %v97
  %v100 = vmul.f32 %v90, %v97
  %v101 = vmul.f32 %v91, %v97
  %v102 = vmul.f32 %v92, %v97
  %v104 = vlaneseq
  %v105 = vshrl.u32 %v104, 7
  %v106 = vsub.s32 0, %v105
  %v107 = vrot.slane %v38, %v106
  %v109 = vadd.f32 %v99, %v107
  %v110 = vadd.f32 %v100, %v107
  %v111 = vadd.f32 %v101, %v107
  %v112 = vadd.f32 %v102, %v107
  %v113 = vpack.c.bf16 %v110, %v109
  %v114 = vpack.c.bf16 %v112, %v111
  %v115 = vld [vmem:[%s3] sm:$0xf]
  %v116 = vld [vmem:[%s3 + $0x4] sm:$0xf]
  %v117 = vld [vmem:[%s3 + $0x8] sm:$0xf]
  %v118 = vld [vmem:[%s3 + $0xc] sm:$0xf]
  %v119 = vld [vmem:[%s3 + $0x10] sm:$0xf]
  %v120 = vld [vmem:[%s3 + $0x14] sm:$0xf]
  %v121 = vld [vmem:[%s3 + $0x18] sm:$0xf]
  %v122 = vld [vmem:[%s3 + $0x1c] sm:$0xf]
  %v123 = vld [vmem:[%s4] sm:$0x1]
  %v125 = vlaneseq
  %v126 = vshrl.u32 %v125, 7
  %v127 = vsub.s32 0, %v126
  %v128 = vrot.slane %v123, %v127
  %v138 = vunpack.c.l.b16 %v115
  %v139 = vunpack.c.l.b16 %v116
  %v140 = vunpack.c.l.b16 %v117
  %v141 = vunpack.c.l.b16 %v118
  %v142 = vunpack.c.l.b16 %v119
  %v143 = vunpack.c.l.b16 %v120
  %v144 = vunpack.c.l.b16 %v121
  %v145 = vunpack.c.l.b16 %v122
  %v146 = vpack.c.b16 %v139, %v138
  %v147 = vpack.c.b16 %v141, %v140
  %v148 = vpack.c.b16 %v143, %v142
  %v149 = vpack.c.b16 %v145, %v144
  %v155 = vsel %vm39, %v113, 0
  %v158 = vsel %vm39, %v114, 0
  %160 = vmatprep.subr.bf16.mxu0 0
  %161 = vmatpush1.bf16.msra.mxu0 %v146
  %162 = vmatprep.subr.bf16.mxu0 0
  %163 = vmatpush1.bf16.msra.mxu0 %v147
  %164 = vmatprep.subr.bf16.mxu0 0
  %165 = vmatpush1.bf16.msra.mxu0 %v148
  %166 = vmatprep.subr.bf16.mxu0 0
  %167 = vmatpush1.bf16.msra.mxu0 %v149
  %168 = vmatprep.subr.bf16.mxu0 0
  %169 = vmatpush1.bf16.msra.mxu0 0
  %170 = vmatprep.subr.bf16.mxu0 0
  %171 = vmatpush1.bf16.msra.mxu0 0
  %172 = vmatprep.subr.bf16.mxu0 0
  %173 = vmatpush1.bf16.msra.mxu0 0
  %174 = vmatprep.subr.bf16.mxu0 0
  %175 = vmatpush1.bf16.msra.mxu0 0
  %176 = vmatprep.subr.bf16.mxu0 0
  %177 = vmatpush1.bf16.msra.mxu0 0
  %178 = vmatprep.subr.bf16.mxu0 0
  %179 = vmatpush1.bf16.msra.mxu0 0
  %180 = vmatprep.subr.bf16.mxu0 0
  %181 = vmatpush1.bf16.msra.mxu0 0
  %182 = vmatprep.subr.bf16.mxu0 0
  %183 = vmatpush1.bf16.msra.mxu0 0
  %184 = vmatprep.subr.bf16.mxu0 0
  %185 = vmatpush1.bf16.msra.mxu0 0
  %186 = vmatprep.subr.bf16.mxu0 0
  %187 = vmatpush1.bf16.msra.mxu0 0
  %188 = vmatprep.subr.bf16.mxu0 0
  %189 = vmatpush1.bf16.msra.mxu0 0
  %190 = vmatprep.subr.bf16.mxu0 0
  %191 = vmatpush1.bf16.msra.mxu0 0
  %192 = vmatprep.mubr.bf16.mxu0 0
  %193 = vmatmul.mubr.bf16.gmra.mrb[0].mxu0 %v155
  %v194 = vpop.f32.mrb[0].mxu0
  %v195 = vadd.f32 %v128, %v194
  %v196 = vpop.f32.mrb[0].mxu0
  %v197 = vpop.f32.mrb[0].mxu0
  %v198 = vadd.f32 %v128, %v197
  %v199 = vpop.f32.mrb[0].mxu0
  %200 = vmatprep.mubr.bf16.mxu0 0
  %201 = vmatmul.mubr.bf16.gmra.mrb[0].mxu0 %v158
  %v202 = vpop.f32.mrb[0].mxu0
  %v203 = vadd.f32 %v128, %v202
  %v204 = vpop.f32.mrb[0].mxu0
  %v205 = vpop.f32.mrb[0].mxu0
  %v206 = vadd.f32 %v128, %v205
  %v207 = vpop.f32.mrb[0].mxu0
  %208 = vdwg.mxu0
  %v209 = vxor.u32 %v195, 2147483648
  %v210 = vxor.u32 %v198, 2147483648
  %v211 = vxor.u32 %v203, 2147483648
  %v212 = vxor.u32 %v206, 2147483648
  %v213 = vmul.f32 %v209, 1.442695
  %v214 = vpow.pop %v213
  %v215 = vmul.f32 %v210, 1.442695
  %v216 = vpow.pop %v215
  %v217 = vmul.f32 %v211, 1.442695
  %v218 = vpow.pop %v217
  %v219 = vmul.f32 %v212, 1.442695
  %v220 = vpow.pop %v219
  %v221 = vadd.f32 %v214, 1.0
  %v222 = vadd.f32 %v216, 1.0
  %v223 = vadd.f32 %v218, 1.0
  %v224 = vadd.f32 %v220, 1.0
  %v225 = vrcp.pop %v221
  %v226 = vmul.f32 1.0, %v225
  %v227 = vrcp.pop %v222
  %v228 = vmul.f32 1.0, %v227
  %v229 = vrcp.pop %v223
  %v230 = vmul.f32 1.0, %v229
  %v231 = vrcp.pop %v224
  %v232 = vmul.f32 1.0, %v231
  %v233 = vmul.f32 %v195, %v226
  %v234 = vmul.f32 %v198, %v228
  %v235 = vmul.f32 %v203, %v230
  %v236 = vmul.f32 %v206, %v232
  %v237 = vpack.c.bf16 %v234, %v233
  %v238 = vpack.c.bf16 %v236, %v235
  %v239 = vld [vmem:[%s5] sm:$0xf]
  %v240 = vld [vmem:[%s5 + $0x4] sm:$0xf]
  %v241 = vld [vmem:[%s5 + $0x8] sm:$0xf]
  %v242 = vld [vmem:[%s5 + $0xc] sm:$0xf]
  %v243 = vld [vmem:[%s5 + $0x10] sm:$0xf]
  %v244 = vld [vmem:[%s5 + $0x14] sm:$0xf]
  %v245 = vld [vmem:[%s5 + $0x18] sm:$0xf]
  %v246 = vld [vmem:[%s5 + $0x1c] sm:$0xf]
  %v247 = vld [vmem:[%s5 + $0x20] sm:$0xf]
  %v248 = vld [vmem:[%s5 + $0x24] sm:$0xf]
  %v249 = vld [vmem:[%s5 + $0x28] sm:$0xf]
  %v250 = vld [vmem:[%s5 + $0x2c] sm:$0xf]
  %v251 = vld [vmem:[%s5 + $0x30] sm:$0xf]
  %v252 = vld [vmem:[%s5 + $0x34] sm:$0xf]
  %v253 = vld [vmem:[%s5 + $0x38] sm:$0xf]
  %v254 = vld [vmem:[%s5 + $0x3c] sm:$0xf]
  %v255 = vld [vmem:[%s6] sm:$0x1]
  %v257 = vlaneseq
  %v258 = vshrl.u32 %v257, 7
  %v259 = vsub.s32 0, %v258
  %v260 = vrot.slane %v255, %v259
  %v278 = vunpack.c.l.b16 %v239
  %v279 = vunpack.c.l.b16 %v240
  %v280 = vunpack.c.l.b16 %v241
  %v281 = vunpack.c.l.b16 %v242
  %v282 = vunpack.c.l.b16 %v243
  %v283 = vunpack.c.l.b16 %v244
  %v284 = vunpack.c.l.b16 %v245
  %v285 = vunpack.c.l.b16 %v246
  %v286 = vunpack.c.l.b16 %v247
  %v287 = vunpack.c.l.b16 %v248
  %v288 = vunpack.c.l.b16 %v249
  %v289 = vunpack.c.l.b16 %v250
  %v290 = vunpack.c.l.b16 %v251
  %v291 = vunpack.c.l.b16 %v252
  %v292 = vunpack.c.l.b16 %v253
  %v293 = vunpack.c.l.b16 %v254
  %v294 = vpack.c.b16 %v279, %v278
  %v295 = vpack.c.b16 %v281, %v280
  %v296 = vpack.c.b16 %v283, %v282
  %v297 = vpack.c.b16 %v285, %v284
  %v298 = vpack.c.b16 %v287, %v286
  %v299 = vpack.c.b16 %v289, %v288
  %v300 = vpack.c.b16 %v291, %v290
  %v301 = vpack.c.b16 %v293, %v292
  %310 = vmatprep.subr.bf16.mxu0 0
  %311 = vmatpush1.bf16.msra.mxu0 %v294
  %312 = vmatprep.subr.bf16.mxu0 0
  %313 = vmatpush1.bf16.msra.mxu0 %v295
  %314 = vmatprep.subr.bf16.mxu0 0
  %315 = vmatpush1.bf16.msra.mxu0 %v296
  %316 = vmatprep.subr.bf16.mxu0 0
  %317 = vmatpush1.bf16.msra.mxu0 %v297
  %318 = vmatprep.subr.bf16.mxu0 0
  %319 = vmatpush1.bf16.msra.mxu0 %v298
  %320 = vmatprep.subr.bf16.mxu0 0
  %321 = vmatpush1.bf16.msra.mxu0 %v299
  %322 = vmatprep.subr.bf16.mxu0 0
  %323 = vmatpush1.bf16.msra.mxu0 %v300
  %324 = vmatprep.subr.bf16.mxu0 0
  %325 = vmatpush1.bf16.msra.mxu0 %v301
  %326 = vmatprep.subr.bf16.mxu0 0
  %327 = vmatpush1.bf16.msra.mxu0 0
  %328 = vmatprep.subr.bf16.mxu0 0
  %329 = vmatpush1.bf16.msra.mxu0 0
  %330 = vmatprep.subr.bf16.mxu0 0
  %331 = vmatpush1.bf16.msra.mxu0 0
  %332 = vmatprep.subr.bf16.mxu0 0
  %333 = vmatpush1.bf16.msra.mxu0 0
  %334 = vmatprep.subr.bf16.mxu0 0
  %335 = vmatpush1.bf16.msra.mxu0 0
  %336 = vmatprep.subr.bf16.mxu0 0
  %337 = vmatpush1.bf16.msra.mxu0 0
  %338 = vmatprep.subr.bf16.mxu0 0
  %339 = vmatpush1.bf16.msra.mxu0 0
  %340 = vmatprep.subr.bf16.mxu0 0
  %341 = vmatpush1.bf16.msra.mxu0 0
  %342 = vmatprep.mubr.bf16.mxu0 0
  %343 = vmatmul.mubr.bf16.gmra.mrb[0].mxu0 %v237
  %v344 = vpop.f32.mrb[0].mxu0
  %v345 = vadd.f32 %v260, %v344
  %v346 = vpop.f32.mrb[0].mxu0
  %v347 = vpop.f32.mrb[0].mxu0
  %v348 = vadd.f32 %v260, %v347
  %v349 = vpop.f32.mrb[0].mxu0
  %350 = vmatprep.mubr.bf16.mxu0 0
  %351 = vmatmul.mubr.bf16.gmra.mrb[0].mxu0 %v238
  %v352 = vpop.f32.mrb[0].mxu0
  %v353 = vadd.f32 %v260, %v352
  %v354 = vpop.f32.mrb[0].mxu0
  %v355 = vpop.f32.mrb[0].mxu0
  %v356 = vadd.f32 %v260, %v355
  %v357 = vpop.f32.mrb[0].mxu0
  %358 = vdwg.mxu0
  %v359 = vmul.f32 %v345, 0.5
  %v360 = vmul.f32 %v348, 0.5
  %v361 = vmul.f32 %v353, 0.5
  %v362 = vmul.f32 %v356, 0.5
  %v363 = vadd.f32 %v359, %v33
  %v364 = vadd.f32 %v360, %v34
  %v365 = vadd.f32 %v361, %v35
  %v366 = vadd.f32 %v362, %v36
  %v367 = vld [vmem:[%s7] sm:$0x1]
  %v368 = vld [vmem:[%s8] sm:$0x1]
  %v369 = vsel %vm39, %v363, 0.0
  %370 = vadd.xlane.f32.xlu0 %v369
  %v371 = vpop.xlane.xlu0 %370
  %v372 = vsel %vm39, %v364, 0.0
  %373 = vadd.xlane.f32.xlu0 %v372
  %v374 = vpop.xlane.xlu0 %373
  %v375 = vsel %vm39, %v365, 0.0
  %376 = vadd.xlane.f32.xlu0 %v375
  %v377 = vpop.xlane.xlu0 %376
  %v378 = vsel %vm39, %v366, 0.0
  %379 = vadd.xlane.f32.xlu0 %v378
  %v380 = vpop.xlane.xlu0 %379
  %v381 = vmul.f32 %v371, %v52
  %v382 = vmul.f32 %v374, %v52
  %v383 = vmul.f32 %v377, %v52
  %v384 = vmul.f32 %v380, %v52
  %v385 = vsub.f32 %v363, %v381
  %v386 = vsub.f32 %v364, %v382
  %v387 = vsub.f32 %v365, %v383
  %v388 = vsub.f32 %v366, %v384
  %v389 = vmul.f32 %v385, %v385
  %v390 = vmul.f32 %v386, %v386
  %v391 = vmul.f32 %v387, %v387
  %v392 = vmul.f32 %v388, %v388
  %v393 = vsel %vm39, %v389, 0.0
  %394 = vadd.xlane.f32.xlu0 %v393
  %v395 = vpop.xlane.xlu0 %394
  %v396 = vsel %vm39, %v390, 0.0
  %397 = vadd.xlane.f32.xlu0 %v396
  %v398 = vpop.xlane.xlu0 %397
  %v399 = vsel %vm39, %v391, 0.0
  %400 = vadd.xlane.f32.xlu0 %v399
  %v401 = vpop.xlane.xlu0 %400
  %v402 = vsel %vm39, %v392, 0.0
  %403 = vadd.xlane.f32.xlu0 %v402
  %v404 = vpop.xlane.xlu0 %403
  %v405 = vmul.f32 %v395, %v52
  %v406 = vmul.f32 %v398, %v52
  %v407 = vmul.f32 %v401, %v52
  %v408 = vmul.f32 %v404, %v52
  %v409 = vadd.f32 %v405, 1e-05
  %v410 = vadd.f32 %v406, 1e-05
  %v411 = vadd.f32 %v407, 1e-05
  %v412 = vadd.f32 %v408, 1e-05
  %v413 = vrsqrt.pop %v409
  %v414 = vrsqrt.pop %v410
  %v415 = vrsqrt.pop %v411
  %v416 = vrsqrt.pop %v412
  %v417 = vmul.f32 %v385, %v413
  %v418 = vmul.f32 %v386, %v414
  %v419 = vmul.f32 %v387, %v415
  %v420 = vmul.f32 %v388, %v416
  %v422 = vlaneseq
  %v423 = vshrl.u32 %v422, 7
  %v424 = vsub.s32 0, %v423
  %v425 = vrot.slane %v367, %v424
  %v427 = vmul.f32 %v417, %v425
  %v428 = vmul.f32 %v418, %v425
  %v429 = vmul.f32 %v419, %v425
  %v430 = vmul.f32 %v420, %v425
  %v432 = vlaneseq
  %v433 = vshrl.u32 %v432, 7
  %v434 = vsub.s32 0, %v433
  %v435 = vrot.slane %v368, %v434
  %v437 = vadd.f32 %v427, %v435
  %v438 = vadd.f32 %v428, %v435
  %v439 = vadd.f32 %v429, %v435
  %v440 = vadd.f32 %v430, %v435
  %441 = vst.msk [vmem:[%s9] sm:$0xff] %vm39, %v437
  %442 = vst.msk [vmem:[%s9 + $0x8] sm:$0xff] %vm39, %v438
  %443 = vst.msk [vmem:[%s9 + $0x10] sm:$0xff] %vm39, %v439
  %444 = vst.msk [vmem:[%s9 + $0x18] sm:$0xff] %vm39, %v440
  // Predicated region
  $region38: #{encoder_forward.17} parent=0 // pred_check
    _
  $region39: #{encoder_forward.17} parent=0 // pred_check_branch
    %446 = sbr.rel (0) target = $region41
  $region40: #{encoder_forward.17} parent=0 // pred_region
    _
  $region41: #{encoder_forward.17} parent=0 // pred_fallthru
    _
  // Predicated region
  $region42: #{encoder_forward.17} parent=0 // pred_check
    _
  $region43: #{encoder_forward.17} parent=0 // pred_check_branch
    %448 = sbr.rel (0) target = $region45
  $region44: #{encoder_forward.17} parent=0 // pred_region
    _
  $region45: #{encoder_forward.17} parent=0 // pred_fallthru
    _

</llo_original>
